<compile_context>
chip_gen: v6e
topology: v6e:2x2x1
jax: 0.10.0
libtpu: 0.0.40
codegen_flags: <defaults>
</compile_context>

<pallas_src>
from functools import partial

import jax
import jax.numpy as jnp
from jax import lax
from jax.experimental import pallas as pl
from jax.experimental.pallas import tpu as pltpu

EPS = 1e-5  # nn.BatchNorm2d default eps


def _round_up(x, m):
    return (x + m - 1) // m * m


def _padded_bytes(shape, itemsize=4, sublane=8):
    """Bytes of an array once padded to the (sublane, 128) VMEM tile."""
    rows = 1
    for s in shape[:-1]:
        rows *= s
    cols = shape[-1]
    return _round_up(max(rows, 1), sublane) * _round_up(cols, 128) * itemsize


def _make_kernel(N, H, W, Cin, Cout, d, guard, total):
    """Fused DoubleConv kernel for static shapes / dilation."""
    HW = H * W
    M = N * HW                      # output pixels (lane axis)
    taps = [(kh, kw) for kh in range(3) for kw in range(3)]
    CENTER = 4                      # (kh, kw) == (1, 1): no mask needed
    inv_M = 1.0 / M

    def conv_acc(src_ref, w_ref, masks):
        # 9 per-tap matmuls accumulated in f32 (review item 1a): each tap is a
        # single contiguous slice over all N*H*W pixels; invalid (out-of-image)
        # lanes are zeroed by the precomputed per-tap masks, which commute with
        # the channel contraction.  No im2col scratch, no per-image loop.
        # (On v7x the MXU result buffer accumulates these in place; on v5e/v6e
        #  the adds ride the otherwise-idle VALU slots.)
        acc = None
        for t, (kh, kw) in enumerate(taps):
            shift = (kh - 1) * d * W + (kw - 1) * d
            patch = src_ref[:, guard + shift: guard + shift + M]   # (C, M)
            if t != CENTER:
                patch = patch * masks[t:t + 1, :]                  # f32 VALU
            part = jnp.dot(w_ref[t], patch,
                           preferred_element_type=jnp.float32)     # (Cout, M)
            acc = part if acc is None else acc + part
        return acc

    def bn_relu(acc, g, b):
        # Training-mode BatchNorm (biased batch stats over N*H*W).
        # Two-pass centered variance: no E[x^2]-E[x]^2 cancellation and var>=0
        # by construction, so rsqrt(var+eps) cannot NaN.
        mean = jnp.sum(acc, axis=1, keepdims=True) * inv_M
        centered = acc - mean
        var = jnp.sum(centered * centered, axis=1, keepdims=True) * inv_M
        scale = g * lax.rsqrt(var + EPS)            # (Cout, 1)
        return jnp.maximum(centered * scale + b, 0.0)

    def kernel(x_ref, w1_ref, w2_ref, g1_ref, b1_ref, g2_ref, b2_ref,
               masks_ref, o_ref, y_ref):
        masks = masks_ref[...]                      # (9, M), hoisted

        # ---------------- conv1 + BN1 + ReLU ---------------------------------
        acc1 = conv_acc(x_ref, w1_ref, masks)
        y1 = bn_relu(acc1, g1_ref[...], b1_ref[...])

        # Intermediate buffer: zero ONLY the two guard stripes (they are read —
        # and multiplied by 0 — by masked boundary taps; stale NaNs would leak),
        # then one aligned, lane-dense interior store.
        y_ref[:, 0:guard] = jnp.zeros((Cout, guard), jnp.float32)
        y_ref[:, guard + M: total] = jnp.zeros((Cout, total - guard - M),
                                               jnp.float32)
        y_ref[:, guard: guard + M] = y1

        # ---------------- conv2 + BN2 + ReLU ---------------------------------
        acc2 = conv_acc(y_ref, w2_ref, masks)
        o_ref[...] = bn_relu(acc2, g2_ref[...], b2_ref[...])   # aligned store

    return kernel


@partial(jax.jit, static_argnames=("dilation",))
def double_conv(x_nchw, params, dilation=1):
    """DoubleConv forward.  x_nchw: (N, Cin, H, W) f32 -> (N, Cout, H, W) f32."""
    w1, g1, b1, w2, g2, b2 = params   # w1: (3,3,Cin,Cout) HWIO, w2: (3,3,Cout,Cout)
    N, Cin, H, W = x_nchw.shape
    Cout = w1.shape[-1]
    d = int(dilation)
    HW, M = H * W, N * H * W

    # 128-aligned guard large enough for the most negative / positive tap shift
    # (d*W + d), so every tap slice stays in bounds and the interior starts on a
    # lane-tile boundary.  (H*W is a multiple of 128 at these shapes, keeping
    # every interior store aligned; for general H*W only alignment is lost, not
    # correctness.)
    guard = _round_up(d * W + d, 128)
    total = guard + M + guard

    # Channel-first flattened layout with zeroed guards; stays f32.
    x = jnp.transpose(x_nchw, (1, 0, 2, 3)).reshape(Cin, M).astype(jnp.float32)
    x = jnp.pad(x, ((0, 0), (guard, guard)))

    # Per-tap weights: HWIO -> (9, Cout, Cin); tap t = kh*3 + kw.
    w1t = jnp.transpose(w1, (0, 1, 3, 2)).reshape(9, Cout, Cin).astype(jnp.float32)
    w2t = jnp.transpose(w2, (0, 1, 3, 2)).reshape(9, Cout, Cout).astype(jnp.float32)

    # Per-tap 0/1 validity masks (row AND column), tiled over the N images.
    hpos = jnp.arange(HW, dtype=jnp.int32) // W
    wpos = jnp.arange(HW, dtype=jnp.int32) % W
    ones = jnp.ones((HW,), jnp.float32)
    row_ok = [(hpos >= d).astype(jnp.float32), ones, (hpos < H - d).astype(jnp.float32)]
    col_ok = [(wpos >= d).astype(jnp.float32), ones, (wpos < W - d).astype(jnp.float32)]
    masks = jnp.stack([row_ok[kh] * col_ok[kw] for kh in range(3) for kw in range(3)])
    masks = jnp.tile(masks, (1, N))                               # (9, M)

    kernel = _make_kernel(N, H, W, Cin, Cout, d, guard, total)

    # Exact VMEM budget: tile-padded resident bytes (single-buffered, grid-less)
    # + 25% headroom, clamped to [4 MiB, 56 MiB] so v7x's 64 MiB is never
    # over-reserved and surrounding XLA fusions are not starved.
    resident = (_padded_bytes((Cin, total)) + _padded_bytes((Cout, total))
                + _padded_bytes((9, Cout, Cin)) + _padded_bytes((9, Cout, Cout))
                + 4 * _padded_bytes((Cout, 1)) + _padded_bytes((9, M))
                + _padded_bytes((Cout, M)))
    vmem_limit = min(56 * 1024 * 1024, max(4 * 1024 * 1024, int(resident * 1.25)))

    cost = pl.CostEstimate(
        flops=int(2 * M * Cout * 9 * (Cin + Cout) + 12 * M * Cout),
        transcendentals=int(2 * Cout),
        bytes_accessed=int(Cin * total * 4 + Cout * M * 4 + 9 * M * 4
                           + 9 * Cout * (Cin + Cout) * 4),
    )

    out = pl.pallas_call(
        kernel,
        out_shape=jax.ShapeDtypeStruct((Cout, M), jnp.float32),
        in_specs=[pl.BlockSpec(memory_space=pltpu.MemorySpace.VMEM)] * 8,
        out_specs=pl.BlockSpec(memory_space=pltpu.MemorySpace.VMEM),
        scratch_shapes=[
            pltpu.VMEM((Cout, total), jnp.float32),   # BN1+ReLU intermediate
        ],
        compiler_params=pltpu.CompilerParams(vmem_limit_bytes=vmem_limit),
        cost_estimate=cost,
    )(x, w1t, w2t,
      g1.reshape(Cout, 1).astype(jnp.float32),
      b1.reshape(Cout, 1).astype(jnp.float32),
      g2.reshape(Cout, 1).astype(jnp.float32),
      b2.reshape(Cout, 1).astype(jnp.float32),
      masks)

    # (Cout, M) -> (N, Cout, H, W)
    return jnp.transpose(out.reshape(Cout, N, H, W), (1, 0, 2, 3))


def ref_double_conv(x_nchw, params, dilation=1):
    """Pure-JAX reference matching the PyTorch forward (train-mode BatchNorm)."""
    w1, g1, b1, w2, g2, b2 = params
    d = int(dilation)
    x = jnp.transpose(x_nchw, (0, 2, 3, 1))

    def block(x, w, g, b):
        y = lax.conv_general_dilated(
            x, w, window_strides=(1, 1), padding=((d, d), (d, d)),
            rhs_dilation=(d, d),
            dimension_numbers=("NHWC", "HWIO", "NHWC"),
            preferred_element_type=jnp.float32)
        mean = jnp.mean(y, axis=(0, 1, 2))
        var = jnp.mean((y - mean) ** 2, axis=(0, 1, 2))
        y = (y - mean) * lax.rsqrt(var + EPS) * g + b
        return jnp.maximum(y, 0.0)

    y = block(x, w1, g1, b1)
    y = block(y, w2, g2, b2)
    return jnp.transpose(y, (0, 3, 1, 2))


if __name__ == "__main__":
    N, Cin, Cout, H, W = 2, 4, 8, 16, 16
    key = jax.random.PRNGKey(0)
    kx, k1, k2, k3, k4, k5, k6 = jax.random.split(key, 7)

    x = jax.random.normal(kx, (N, Cin, H, W), jnp.float32)
    # Deterministic synthetic parameters (shapes match nn.Conv2d / nn.BatchNorm2d).
    w1 = jax.random.normal(k1, (3, 3, Cin, Cout), jnp.float32) * 0.2
    g1 = 1.0 + 0.1 * jax.random.normal(k2, (Cout,), jnp.float32)
    b1 = 0.1 * jax.random.normal(k3, (Cout,), jnp.float32)
    w2 = jax.random.normal(k4, (3, 3, Cout, Cout), jnp.float32) * 0.2
    g2 = 1.0 + 0.1 * jax.random.normal(k5, (Cout,), jnp.float32)
    b2 = 0.1 * jax.random.normal(k6, (Cout,), jnp.float32)
    params = (w1, g1, b1, w2, g2, b2)

    for dilation in (1, 2):
        out = jax.block_until_ready(double_conv(x, params, dilation=dilation))
        assert out.shape == (N, Cout, H, W), out.shape

        ref = ref_double_conv(x, params, dilation)
        err = float(jnp.max(jnp.abs(out - ref)))
        assert jnp.allclose(out, ref, atol=2e-2, rtol=2e-2), (
            f"dilation={dilation}: mismatch vs f32 reference, max err {err}")

    print("KERNEL_OK")
</pallas_src>

<mosaic_0001>
module attributes {stable_mosaic.version = 11 : i64} {
  func.func @kernel(%arg0: memref<4x768xf32, #tpu.memory_space<vmem>>, %arg1: memref<9x8x4xf32, #tpu.memory_space<vmem>>, %arg2: memref<9x8x8xf32, #tpu.memory_space<vmem>>, %arg3: memref<8x1xf32, #tpu.memory_space<vmem>>, %arg4: memref<8x1xf32, #tpu.memory_space<vmem>>, %arg5: memref<8x1xf32, #tpu.memory_space<vmem>>, %arg6: memref<8x1xf32, #tpu.memory_space<vmem>>, %arg7: memref<9x512xf32, #tpu.memory_space<vmem>>, %arg8: memref<8x512xf32, #tpu.memory_space<vmem>>, %arg9: memref<8x768xf32, #tpu.memory_space<vmem>>) attributes {dimension_semantics = [], scalar_prefetch = 0 : i64, scratch_operands = 1 : i64, tpu.core_type = #tpu.core_type<tc>} {
    %c0 = arith.constant 0 : index
    %c0_0 = arith.constant 0 : index
    %0 = vector.load %arg7[%c0, %c0_0] : memref<9x512xf32, #tpu.memory_space<vmem>>, vector<9x512xf32>
    %c0_1 = arith.constant 0 : index
    %c111 = arith.constant 111 : index
    %1 = vector.load %arg0[%c0_1, %c111] : memref<4x768xf32, #tpu.memory_space<vmem>>, vector<4x512xf32>
    %2 = vector.extract_strided_slice %0 {offsets = [0, 0], sizes = [1, 512], strides = [1, 1]} : vector<9x512xf32> to vector<1x512xf32>
    %3 = vector.broadcast %2 : vector<1x512xf32> to vector<4x512xf32>
    %4 = arith.mulf %1, %3 : vector<4x512xf32>
    %c0_2 = arith.constant 0 : index
    %c0_3 = arith.constant 0 : index
    %c0_4 = arith.constant 0 : index
    %5 = vector.load %arg1[%c0_2, %c0_3, %c0_4] : memref<9x8x4xf32, #tpu.memory_space<vmem>>, vector<1x8x4xf32>
    %6 = vector.shape_cast %5 : vector<1x8x4xf32> to vector<8x4xf32>
    %cst = arith.constant dense<0.000000e+00> : vector<8x512xf32>
    %7 = tpu.matmul %6, %4, %cst {dimension_numbers = #tpu.dot_dimension_numbers<[1], [0], [0], [1], [0, 0, 1, 1], [], []>} : vector<8x4xf32>, vector<4x512xf32>, vector<8x512xf32> -> vector<8x512xf32>
    %c0_5 = arith.constant 0 : index
    %c112 = arith.constant 112 : index
    %8 = vector.load %arg0[%c0_5, %c112] : memref<4x768xf32, #tpu.memory_space<vmem>>, vector<4x512xf32>
    %9 = vector.extract_strided_slice %0 {offsets = [1, 0], sizes = [1, 512], strides = [1, 1]} : vector<9x512xf32> to vector<1x512xf32>
    %10 = vector.broadcast %9 : vector<1x512xf32> to vector<4x512xf32>
    %11 = arith.mulf %8, %10 : vector<4x512xf32>
    %c1 = arith.constant 1 : index
    %c0_6 = arith.constant 0 : index
    %c0_7 = arith.constant 0 : index
    %12 = vector.load %arg1[%c1, %c0_6, %c0_7] : memref<9x8x4xf32, #tpu.memory_space<vmem>>, vector<1x8x4xf32>
    %13 = vector.shape_cast %12 : vector<1x8x4xf32> to vector<8x4xf32>
    %cst_8 = arith.constant dense<0.000000e+00> : vector<8x512xf32>
    %14 = tpu.matmul %13, %11, %cst_8 {dimension_numbers = #tpu.dot_dimension_numbers<[1], [0], [0], [1], [0, 0, 1, 1], [], []>} : vector<8x4xf32>, vector<4x512xf32>, vector<8x512xf32> -> vector<8x512xf32>
    %15 = arith.addf %7, %14 : vector<8x512xf32>
    %c0_9 = arith.constant 0 : index
    %c113 = arith.constant 113 : index
    %16 = vector.load %arg0[%c0_9, %c113] : memref<4x768xf32, #tpu.memory_space<vmem>>, vector<4x512xf32>
    %17 = vector.extract_strided_slice %0 {offsets = [2, 0], sizes = [1, 512], strides = [1, 1]} : vector<9x512xf32> to vector<1x512xf32>
    %18 = vector.broadcast %17 : vector<1x512xf32> to vector<4x512xf32>
    %19 = arith.mulf %16, %18 : vector<4x512xf32>
    %c2 = arith.constant 2 : index
    %c0_10 = arith.constant 0 : index
    %c0_11 = arith.constant 0 : index
    %20 = vector.load %arg1[%c2, %c0_10, %c0_11] : memref<9x8x4xf32, #tpu.memory_space<vmem>>, vector<1x8x4xf32>
    %21 = vector.shape_cast %20 : vector<1x8x4xf32> to vector<8x4xf32>
    %cst_12 = arith.constant dense<0.000000e+00> : vector<8x512xf32>
    %22 = tpu.matmul %21, %19, %cst_12 {dimension_numbers = #tpu.dot_dimension_numbers<[1], [0], [0], [1], [0, 0, 1, 1], [], []>} : vector<8x4xf32>, vector<4x512xf32>, vector<8x512xf32> -> vector<8x512xf32>
    %23 = arith.addf %15, %22 : vector<8x512xf32>
    %c0_13 = arith.constant 0 : index
    %c127 = arith.constant 127 : index
    %24 = vector.load %arg0[%c0_13, %c127] : memref<4x768xf32, #tpu.memory_space<vmem>>, vector<4x512xf32>
    %25 = vector.extract_strided_slice %0 {offsets = [3, 0], sizes = [1, 512], strides = [1, 1]} : vector<9x512xf32> to vector<1x512xf32>
    %26 = vector.broadcast %25 : vector<1x512xf32> to vector<4x512xf32>
    %27 = arith.mulf %24, %26 : vector<4x512xf32>
    %c3 = arith.constant 3 : index
    %c0_14 = arith.constant 0 : index
    %c0_15 = arith.constant 0 : index
    %28 = vector.load %arg1[%c3, %c0_14, %c0_15] : memref<9x8x4xf32, #tpu.memory_space<vmem>>, vector<1x8x4xf32>
    %29 = vector.shape_cast %28 : vector<1x8x4xf32> to vector<8x4xf32>
    %cst_16 = arith.constant dense<0.000000e+00> : vector<8x512xf32>
    %30 = tpu.matmul %29, %27, %cst_16 {dimension_numbers = #tpu.dot_dimension_numbers<[1], [0], [0], [1], [0, 0, 1, 1], [], []>} : vector<8x4xf32>, vector<4x512xf32>, vector<8x512xf32> -> vector<8x512xf32>
    %31 = arith.addf %23, %30 : vector<8x512xf32>
    %c0_17 = arith.constant 0 : index
    %c128 = arith.constant 128 : index
    %32 = vector.load %arg0[%c0_17, %c128] : memref<4x768xf32, #tpu.memory_space<vmem>>, vector<4x512xf32>
    %c4 = arith.constant 4 : index
    %c0_18 = arith.constant 0 : index
    %c0_19 = arith.constant 0 : index
    %33 = vector.load %arg1[%c4, %c0_18, %c0_19] : memref<9x8x4xf32, #tpu.memory_space<vmem>>, vector<1x8x4xf32>
    %34 = vector.shape_cast %33 : vector<1x8x4xf32> to vector<8x4xf32>
    %cst_20 = arith.constant dense<0.000000e+00> : vector<8x512xf32>
    %35 = tpu.matmul %34, %32, %cst_20 {dimension_numbers = #tpu.dot_dimension_numbers<[1], [0], [0], [1], [0, 0, 1, 1], [], []>} : vector<8x4xf32>, vector<4x512xf32>, vector<8x512xf32> -> vector<8x512xf32>
    %36 = arith.addf %31, %35 : vector<8x512xf32>
    %c0_21 = arith.constant 0 : index
    %c129 = arith.constant 129 : index
    %37 = vector.load %arg0[%c0_21, %c129] : memref<4x768xf32, #tpu.memory_space<vmem>>, vector<4x512xf32>
    %38 = vector.extract_strided_slice %0 {offsets = [5, 0], sizes = [1, 512], strides = [1, 1]} : vector<9x512xf32> to vector<1x512xf32>
    %39 = vector.broadcast %38 : vector<1x512xf32> to vector<4x512xf32>
    %40 = arith.mulf %37, %39 : vector<4x512xf32>
    %c5 = arith.constant 5 : index
    %c0_22 = arith.constant 0 : index
    %c0_23 = arith.constant 0 : index
    %41 = vector.load %arg1[%c5, %c0_22, %c0_23] : memref<9x8x4xf32, #tpu.memory_space<vmem>>, vector<1x8x4xf32>
    %42 = vector.shape_cast %41 : vector<1x8x4xf32> to vector<8x4xf32>
    %cst_24 = arith.constant dense<0.000000e+00> : vector<8x512xf32>
    %43 = tpu.matmul %42, %40, %cst_24 {dimension_numbers = #tpu.dot_dimension_numbers<[1], [0], [0], [1], [0, 0, 1, 1], [], []>} : vector<8x4xf32>, vector<4x512xf32>, vector<8x512xf32> -> vector<8x512xf32>
    %44 = arith.addf %36, %43 : vector<8x512xf32>
    %c0_25 = arith.constant 0 : index
    %c143 = arith.constant 143 : index
    %45 = vector.load %arg0[%c0_25, %c143] : memref<4x768xf32, #tpu.memory_space<vmem>>, vector<4x512xf32>
    %46 = vector.extract_strided_slice %0 {offsets = [6, 0], sizes = [1, 512], strides = [1, 1]} : vector<9x512xf32> to vector<1x512xf32>
    %47 = vector.broadcast %46 : vector<1x512xf32> to vector<4x512xf32>
    %48 = arith.mulf %45, %47 : vector<4x512xf32>
    %c6 = arith.constant 6 : index
    %c0_26 = arith.constant 0 : index
    %c0_27 = arith.constant 0 : index
    %49 = vector.load %arg1[%c6, %c0_26, %c0_27] : memref<9x8x4xf32, #tpu.memory_space<vmem>>, vector<1x8x4xf32>
    %50 = vector.shape_cast %49 : vector<1x8x4xf32> to vector<8x4xf32>
    %cst_28 = arith.constant dense<0.000000e+00> : vector<8x512xf32>
    %51 = tpu.matmul %50, %48, %cst_28 {dimension_numbers = #tpu.dot_dimension_numbers<[1], [0], [0], [1], [0, 0, 1, 1], [], []>} : vector<8x4xf32>, vector<4x512xf32>, vector<8x512xf32> -> vector<8x512xf32>
    %52 = arith.addf %44, %51 : vector<8x512xf32>
    %c0_29 = arith.constant 0 : index
    %c144 = arith.constant 144 : index
    %53 = vector.load %arg0[%c0_29, %c144] : memref<4x768xf32, #tpu.memory_space<vmem>>, vector<4x512xf32>
    %54 = vector.extract_strided_slice %0 {offsets = [7, 0], sizes = [1, 512], strides = [1, 1]} : vector<9x512xf32> to vector<1x512xf32>
    %55 = vector.broadcast %54 : vector<1x512xf32> to vector<4x512xf32>
    %56 = arith.mulf %53, %55 : vector<4x512xf32>
    %c7 = arith.constant 7 : index
    %c0_30 = arith.constant 0 : index
    %c0_31 = arith.constant 0 : index
    %57 = vector.load %arg1[%c7, %c0_30, %c0_31] : memref<9x8x4xf32, #tpu.memory_space<vmem>>, vector<1x8x4xf32>
    %58 = vector.shape_cast %57 : vector<1x8x4xf32> to vector<8x4xf32>
    %cst_32 = arith.constant dense<0.000000e+00> : vector<8x512xf32>
    %59 = tpu.matmul %58, %56, %cst_32 {dimension_numbers = #tpu.dot_dimension_numbers<[1], [0], [0], [1], [0, 0, 1, 1], [], []>} : vector<8x4xf32>, vector<4x512xf32>, vector<8x512xf32> -> vector<8x512xf32>
    %60 = arith.addf %52, %59 : vector<8x512xf32>
    %c0_33 = arith.constant 0 : index
    %c145 = arith.constant 145 : index
    %61 = vector.load %arg0[%c0_33, %c145] : memref<4x768xf32, #tpu.memory_space<vmem>>, vector<4x512xf32>
    %62 = vector.extract_strided_slice %0 {offsets = [8, 0], sizes = [1, 512], strides = [1, 1]} : vector<9x512xf32> to vector<1x512xf32>
    %63 = vector.broadcast %62 : vector<1x512xf32> to vector<4x512xf32>
    %64 = arith.mulf %61, %63 : vector<4x512xf32>
    %c8 = arith.constant 8 : index
    %c0_34 = arith.constant 0 : index
    %c0_35 = arith.constant 0 : index
    %65 = vector.load %arg1[%c8, %c0_34, %c0_35] : memref<9x8x4xf32, #tpu.memory_space<vmem>>, vector<1x8x4xf32>
    %66 = vector.shape_cast %65 : vector<1x8x4xf32> to vector<8x4xf32>
    %cst_36 = arith.constant dense<0.000000e+00> : vector<8x512xf32>
    %67 = tpu.matmul %66, %64, %cst_36 {dimension_numbers = #tpu.dot_dimension_numbers<[1], [0], [0], [1], [0, 0, 1, 1], [], []>} : vector<8x4xf32>, vector<4x512xf32>, vector<8x512xf32> -> vector<8x512xf32>
    %68 = arith.addf %60, %67 : vector<8x512xf32>
    %c0_37 = arith.constant 0 : index
    %c0_38 = arith.constant 0 : index
    %69 = vector.load %arg3[%c0_37, %c0_38] : memref<8x1xf32, #tpu.memory_space<vmem>>, vector<8x1xf32>
    %c0_39 = arith.constant 0 : index
    %c0_40 = arith.constant 0 : index
    %70 = vector.load %arg4[%c0_39, %c0_40] : memref<8x1xf32, #tpu.memory_space<vmem>>, vector<8x1xf32>
    %cst_41 = arith.constant dense<0.000000e+00> : vector<8xf32>
    %71 = vector.multi_reduction <add>, %68, %cst_41 [1] : vector<8x512xf32> to vector<8xf32>
    %72 = vector.shape_cast %71 : vector<8xf32> to vector<8x1xf32>
    %cst_42 = arith.constant 0.001953125 : f32
    %73 = vector.broadcast %cst_42 : f32 to vector<8x1xf32>
    %74 = arith.mulf %72, %73 : vector<8x1xf32>
    %75 = vector.broadcast %74 : vector<8x1xf32> to vector<8x512xf32>
    %76 = arith.subf %68, %75 : vector<8x512xf32>
    %77 = arith.mulf %76, %76 : vector<8x512xf32>
    %cst_43 = arith.constant dense<0.000000e+00> : vector<8xf32>
    %78 = vector.multi_reduction <add>, %77, %cst_43 [1] : vector<8x512xf32> to vector<8xf32>
    %79 = vector.shape_cast %78 : vector<8xf32> to vector<8x1xf32>
    %cst_44 = arith.constant 0.001953125 : f32
    %80 = vector.broadcast %cst_44 : f32 to vector<8x1xf32>
    %81 = arith.mulf %79, %80 : vector<8x1xf32>
    %cst_45 = arith.constant 9.99999974E-6 : f32
    %82 = vector.broadcast %cst_45 : f32 to vector<8x1xf32>
    %83 = arith.addf %81, %82 : vector<8x1xf32>
    %84 = math.rsqrt %83 : vector<8x1xf32>
    %85 = arith.mulf %69, %84 : vector<8x1xf32>
    %86 = vector.broadcast %85 : vector<8x1xf32> to vector<8x512xf32>
    %87 = arith.mulf %76, %86 : vector<8x512xf32>
    %88 = vector.broadcast %70 : vector<8x1xf32> to vector<8x512xf32>
    %89 = arith.addf %87, %88 : vector<8x512xf32>
    %cst_46 = arith.constant 0.000000e+00 : f32
    %90 = vector.broadcast %cst_46 : f32 to vector<8x512xf32>
    %91 = arith.maximumf %89, %90 : vector<8x512xf32>
    %cst_47 = arith.constant 0.000000e+00 : f32
    %92 = vector.broadcast %cst_47 : f32 to vector<8x128xf32>
    %c0_48 = arith.constant 0 : index
    %c0_49 = arith.constant 0 : index
    %93 = vector.load %arg9[%c0_48, %c0_49] : memref<8x768xf32, #tpu.memory_space<vmem>>, vector<8x128xf32>
    tpu.vector_store %arg9[%c0_48, %c0_49], %92 {strides = array<i32>} : memref<8x768xf32, #tpu.memory_space<vmem>>, vector<8x128xf32>,
    %cst_50 = arith.constant 0.000000e+00 : f32
    %94 = vector.broadcast %cst_50 : f32 to vector<8x128xf32>
    %c0_51 = arith.constant 0 : index
    %c640 = arith.constant 640 : index
    %95 = vector.load %arg9[%c0_51, %c640] : memref<8x768xf32, #tpu.memory_space<vmem>>, vector<8x128xf32>
    tpu.vector_store %arg9[%c0_51, %c640], %94 {strides = array<i32>} : memref<8x768xf32, #tpu.memory_space<vmem>>, vector<8x128xf32>,
    %c0_52 = arith.constant 0 : index
    %c128_53 = arith.constant 128 : index
    %96 = vector.load %arg9[%c0_52, %c128_53] : memref<8x768xf32, #tpu.memory_space<vmem>>, vector<8x512xf32>
    tpu.vector_store %arg9[%c0_52, %c128_53], %91 {strides = array<i32>} : memref<8x768xf32, #tpu.memory_space<vmem>>, vector<8x512xf32>,
    %c0_54 = arith.constant 0 : index
    %c111_55 = arith.constant 111 : index
    %97 = vector.load %arg9[%c0_54, %c111_55] : memref<8x768xf32, #tpu.memory_space<vmem>>, vector<8x512xf32>
    %98 = vector.extract_strided_slice %0 {offsets = [0, 0], sizes = [1, 512], strides = [1, 1]} : vector<9x512xf32> to vector<1x512xf32>
    %99 = vector.broadcast %98 : vector<1x512xf32> to vector<8x512xf32>
    %100 = arith.mulf %97, %99 : vector<8x512xf32>
    %c0_56 = arith.constant 0 : index
    %c0_57 = arith.constant 0 : index
    %c0_58 = arith.constant 0 : index
    %101 = vector.load %arg2[%c0_56, %c0_57, %c0_58] : memref<9x8x8xf32, #tpu.memory_space<vmem>>, vector<1x8x8xf32>
    %102 = vector.shape_cast %101 : vector<1x8x8xf32> to vector<8x8xf32>
    %cst_59 = arith.constant dense<0.000000e+00> : vector<8x512xf32>
    %103 = tpu.matmul %102, %100, %cst_59 {dimension_numbers = #tpu.dot_dimension_numbers<[1], [0], [0], [1], [0, 0, 1, 1], [], []>} : vector<8x8xf32>, vector<8x512xf32>, vector<8x512xf32> -> vector<8x512xf32>
    %c0_60 = arith.constant 0 : index
    %c112_61 = arith.constant 112 : index
    %104 = vector.load %arg9[%c0_60, %c112_61] : memref<8x768xf32, #tpu.memory_space<vmem>>, vector<8x512xf32>
    %105 = vector.extract_strided_slice %0 {offsets = [1, 0], sizes = [1, 512], strides = [1, 1]} : vector<9x512xf32> to vector<1x512xf32>
    %106 = vector.broadcast %105 : vector<1x512xf32> to vector<8x512xf32>
    %107 = arith.mulf %104, %106 : vector<8x512xf32>
    %c1_62 = arith.constant 1 : index
    %c0_63 = arith.constant 0 : index
    %c0_64 = arith.constant 0 : index
    %108 = vector.load %arg2[%c1_62, %c0_63, %c0_64] : memref<9x8x8xf32, #tpu.memory_space<vmem>>, vector<1x8x8xf32>
    %109 = vector.shape_cast %108 : vector<1x8x8xf32> to vector<8x8xf32>
    %cst_65 = arith.constant dense<0.000000e+00> : vector<8x512xf32>
    %110 = tpu.matmul %109, %107, %cst_65 {dimension_numbers = #tpu.dot_dimension_numbers<[1], [0], [0], [1], [0, 0, 1, 1], [], []>} : vector<8x8xf32>, vector<8x512xf32>, vector<8x512xf32> -> vector<8x512xf32>
    %111 = arith.addf %103, %110 : vector<8x512xf32>
    %c0_66 = arith.constant 0 : index
    %c113_67 = arith.constant 113 : index
    %112 = vector.load %arg9[%c0_66, %c113_67] : memref<8x768xf32, #tpu.memory_space<vmem>>, vector<8x512xf32>
    %113 = vector.extract_strided_slice %0 {offsets = [2, 0], sizes = [1, 512], strides = [1, 1]} : vector<9x512xf32> to vector<1x512xf32>
    %114 = vector.broadcast %113 : vector<1x512xf32> to vector<8x512xf32>
    %115 = arith.mulf %112, %114 : vector<8x512xf32>
    %c2_68 = arith.constant 2 : index
    %c0_69 = arith.constant 0 : index
    %c0_70 = arith.constant 0 : index
    %116 = vector.load %arg2[%c2_68, %c0_69, %c0_70] : memref<9x8x8xf32, #tpu.memory_space<vmem>>, vector<1x8x8xf32>
    %117 = vector.shape_cast %116 : vector<1x8x8xf32> to vector<8x8xf32>
    %cst_71 = arith.constant dense<0.000000e+00> : vector<8x512xf32>
    %118 = tpu.matmul %117, %115, %cst_71 {dimension_numbers = #tpu.dot_dimension_numbers<[1], [0], [0], [1], [0, 0, 1, 1], [], []>} : vector<8x8xf32>, vector<8x512xf32>, vector<8x512xf32> -> vector<8x512xf32>
    %119 = arith.addf %111, %118 : vector<8x512xf32>
    %c0_72 = arith.constant 0 : index
    %c127_73 = arith.constant 127 : index
    %120 = vector.load %arg9[%c0_72, %c127_73] : memref<8x768xf32, #tpu.memory_space<vmem>>, vector<8x512xf32>
    %121 = vector.extract_strided_slice %0 {offsets = [3, 0], sizes = [1, 512], strides = [1, 1]} : vector<9x512xf32> to vector<1x512xf32>
    %122 = vector.broadcast %121 : vector<1x512xf32> to vector<8x512xf32>
    %123 = arith.mulf %120, %122 : vector<8x512xf32>
    %c3_74 = arith.constant 3 : index
    %c0_75 = arith.constant 0 : index
    %c0_76 = arith.constant 0 : index
    %124 = vector.load %arg2[%c3_74, %c0_75, %c0_76] : memref<9x8x8xf32, #tpu.memory_space<vmem>>, vector<1x8x8xf32>
    %125 = vector.shape_cast %124 : vector<1x8x8xf32> to vector<8x8xf32>
    %cst_77 = arith.constant dense<0.000000e+00> : vector<8x512xf32>
    %126 = tpu.matmul %125, %123, %cst_77 {dimension_numbers = #tpu.dot_dimension_numbers<[1], [0], [0], [1], [0, 0, 1, 1], [], []>} : vector<8x8xf32>, vector<8x512xf32>, vector<8x512xf32> -> vector<8x512xf32>
    %127 = arith.addf %119, %126 : vector<8x512xf32>
    %c0_78 = arith.constant 0 : index
    %c128_79 = arith.constant 128 : index
    %128 = vector.load %arg9[%c0_78, %c128_79] : memref<8x768xf32, #tpu.memory_space<vmem>>, vector<8x512xf32>
    %c4_80 = arith.constant 4 : index
    %c0_81 = arith.constant 0 : index
    %c0_82 = arith.constant 0 : index
    %129 = vector.load %arg2[%c4_80, %c0_81, %c0_82] : memref<9x8x8xf32, #tpu.memory_space<vmem>>, vector<1x8x8xf32>
    %130 = vector.shape_cast %129 : vector<1x8x8xf32> to vector<8x8xf32>
    %cst_83 = arith.constant dense<0.000000e+00> : vector<8x512xf32>
    %131 = tpu.matmul %130, %128, %cst_83 {dimension_numbers = #tpu.dot_dimension_numbers<[1], [0], [0], [1], [0, 0, 1, 1], [], []>} : vector<8x8xf32>, vector<8x512xf32>, vector<8x512xf32> -> vector<8x512xf32>
    %132 = arith.addf %127, %131 : vector<8x512xf32>
    %c0_84 = arith.constant 0 : index
    %c129_85 = arith.constant 129 : index
    %133 = vector.load %arg9[%c0_84, %c129_85] : memref<8x768xf32, #tpu.memory_space<vmem>>, vector<8x512xf32>
    %134 = vector.extract_strided_slice %0 {offsets = [5, 0], sizes = [1, 512], strides = [1, 1]} : vector<9x512xf32> to vector<1x512xf32>
    %135 = vector.broadcast %134 : vector<1x512xf32> to vector<8x512xf32>
    %136 = arith.mulf %133, %135 : vector<8x512xf32>
    %c5_86 = arith.constant 5 : index
    %c0_87 = arith.constant 0 : index
    %c0_88 = arith.constant 0 : index
    %137 = vector.load %arg2[%c5_86, %c0_87, %c0_88] : memref<9x8x8xf32, #tpu.memory_space<vmem>>, vector<1x8x8xf32>
    %138 = vector.shape_cast %137 : vector<1x8x8xf32> to vector<8x8xf32>
    %cst_89 = arith.constant dense<0.000000e+00> : vector<8x512xf32>
    %139 = tpu.matmul %138, %136, %cst_89 {dimension_numbers = #tpu.dot_dimension_numbers<[1], [0], [0], [1], [0, 0, 1, 1], [], []>} : vector<8x8xf32>, vector<8x512xf32>, vector<8x512xf32> -> vector<8x512xf32>
    %140 = arith.addf %132, %139 : vector<8x512xf32>
    %c0_90 = arith.constant 0 : index
    %c143_91 = arith.constant 143 : index
    %141 = vector.load %arg9[%c0_90, %c143_91] : memref<8x768xf32, #tpu.memory_space<vmem>>, vector<8x512xf32>
    %142 = vector.extract_strided_slice %0 {offsets = [6, 0], sizes = [1, 512], strides = [1, 1]} : vector<9x512xf32> to vector<1x512xf32>
    %143 = vector.broadcast %142 : vector<1x512xf32> to vector<8x512xf32>
    %144 = arith.mulf %141, %143 : vector<8x512xf32>
    %c6_92 = arith.constant 6 : index
    %c0_93 = arith.constant 0 : index
    %c0_94 = arith.constant 0 : index
    %145 = vector.load %arg2[%c6_92, %c0_93, %c0_94] : memref<9x8x8xf32, #tpu.memory_space<vmem>>, vector<1x8x8xf32>
    %146 = vector.shape_cast %145 : vector<1x8x8xf32> to vector<8x8xf32>
    %cst_95 = arith.constant dense<0.000000e+00> : vector<8x512xf32>
    %147 = tpu.matmul %146, %144, %cst_95 {dimension_numbers = #tpu.dot_dimension_numbers<[1], [0], [0], [1], [0, 0, 1, 1], [], []>} : vector<8x8xf32>, vector<8x512xf32>, vector<8x512xf32> -> vector<8x512xf32>
    %148 = arith.addf %140, %147 : vector<8x512xf32>
    %c0_96 = arith.constant 0 : index
    %c144_97 = arith.constant 144 : index
    %149 = vector.load %arg9[%c0_96, %c144_97] : memref<8x768xf32, #tpu.memory_space<vmem>>, vector<8x512xf32>
    %150 = vector.extract_strided_slice %0 {offsets = [7, 0], sizes = [1, 512], strides = [1, 1]} : vector<9x512xf32> to vector<1x512xf32>
    %151 = vector.broadcast %150 : vector<1x512xf32> to vector<8x512xf32>
    %152 = arith.mulf %149, %151 : vector<8x512xf32>
    %c7_98 = arith.constant 7 : index
    %c0_99 = arith.constant 0 : index
    %c0_100 = arith.constant 0 : index
    %153 = vector.load %arg2[%c7_98, %c0_99, %c0_100] : memref<9x8x8xf32, #tpu.memory_space<vmem>>, vector<1x8x8xf32>
    %154 = vector.shape_cast %153 : vector<1x8x8xf32> to vector<8x8xf32>
    %cst_101 = arith.constant dense<0.000000e+00> : vector<8x512xf32>
    %155 = tpu.matmul %154, %152, %cst_101 {dimension_numbers = #tpu.dot_dimension_numbers<[1], [0], [0], [1], [0, 0, 1, 1], [], []>} : vector<8x8xf32>, vector<8x512xf32>, vector<8x512xf32> -> vector<8x512xf32>
    %156 = arith.addf %148, %155 : vector<8x512xf32>
    %c0_102 = arith.constant 0 : index
    %c145_103 = arith.constant 145 : index
    %157 = vector.load %arg9[%c0_102, %c145_103] : memref<8x768xf32, #tpu.memory_space<vmem>>, vector<8x512xf32>
    %158 = vector.extract_strided_slice %0 {offsets = [8, 0], sizes = [1, 512], strides = [1, 1]} : vector<9x512xf32> to vector<1x512xf32>
    %159 = vector.broadcast %158 : vector<1x512xf32> to vector<8x512xf32>
    %160 = arith.mulf %157, %159 : vector<8x512xf32>
    %c8_104 = arith.constant 8 : index
    %c0_105 = arith.constant 0 : index
    %c0_106 = arith.constant 0 : index
    %161 = vector.load %arg2[%c8_104, %c0_105, %c0_106] : memref<9x8x8xf32, #tpu.memory_space<vmem>>, vector<1x8x8xf32>
    %162 = vector.shape_cast %161 : vector<1x8x8xf32> to vector<8x8xf32>
    %cst_107 = arith.constant dense<0.000000e+00> : vector<8x512xf32>
    %163 = tpu.matmul %162, %160, %cst_107 {dimension_numbers = #tpu.dot_dimension_numbers<[1], [0], [0], [1], [0, 0, 1, 1], [], []>} : vector<8x8xf32>, vector<8x512xf32>, vector<8x512xf32> -> vector<8x512xf32>
    %164 = arith.addf %156, %163 : vector<8x512xf32>
    %c0_108 = arith.constant 0 : index
    %c0_109 = arith.constant 0 : index
    %165 = vector.load %arg5[%c0_108, %c0_109] : memref<8x1xf32, #tpu.memory_space<vmem>>, vector<8x1xf32>
    %c0_110 = arith.constant 0 : index
    %c0_111 = arith.constant 0 : index
    %166 = vector.load %arg6[%c0_110, %c0_111] : memref<8x1xf32, #tpu.memory_space<vmem>>, vector<8x1xf32>
    %cst_112 = arith.constant dense<0.000000e+00> : vector<8xf32>
    %167 = vector.multi_reduction <add>, %164, %cst_112 [1] : vector<8x512xf32> to vector<8xf32>
    %168 = vector.shape_cast %167 : vector<8xf32> to vector<8x1xf32>
    %cst_113 = arith.constant 0.001953125 : f32
    %169 = vector.broadcast %cst_113 : f32 to vector<8x1xf32>
    %170 = arith.mulf %168, %169 : vector<8x1xf32>
    %171 = vector.broadcast %170 : vector<8x1xf32> to vector<8x512xf32>
    %172 = arith.subf %164, %171 : vector<8x512xf32>
    %173 = arith.mulf %172, %172 : vector<8x512xf32>
    %cst_114 = arith.constant dense<0.000000e+00> : vector<8xf32>
    %174 = vector.multi_reduction <add>, %173, %cst_114 [1] : vector<8x512xf32> to vector<8xf32>
    %175 = vector.shape_cast %174 : vector<8xf32> to vector<8x1xf32>
    %cst_115 = arith.constant 0.001953125 : f32
    %176 = vector.broadcast %cst_115 : f32 to vector<8x1xf32>
    %177 = arith.mulf %175, %176 : vector<8x1xf32>
    %cst_116 = arith.constant 9.99999974E-6 : f32
    %178 = vector.broadcast %cst_116 : f32 to vector<8x1xf32>
    %179 = arith.addf %177, %178 : vector<8x1xf32>
    %180 = math.rsqrt %179 : vector<8x1xf32>
    %181 = arith.mulf %165, %180 : vector<8x1xf32>
    %182 = vector.broadcast %181 : vector<8x1xf32> to vector<8x512xf32>
    %183 = arith.mulf %172, %182 : vector<8x512xf32>
    %184 = vector.broadcast %166 : vector<8x1xf32> to vector<8x512xf32>
    %185 = arith.addf %183, %184 : vector<8x512xf32>
    %cst_117 = arith.constant 0.000000e+00 : f32
    %186 = vector.broadcast %cst_117 : f32 to vector<8x512xf32>
    %187 = arith.maximumf %185, %186 : vector<8x512xf32>
    %c0_118 = arith.constant 0 : index
    %c0_119 = arith.constant 0 : index
    %188 = vector.load %arg8[%c0_118, %c0_119] : memref<8x512xf32, #tpu.memory_space<vmem>>, vector<8x512xf32>
    tpu.vector_store %arg8[%c0_118, %c0_119], %187 {strides = array<i32>} : memref<8x512xf32, #tpu.memory_space<vmem>>, vector<8x512xf32>,
    return
  }
}

</mosaic_0001>

<llo_original>
// kernel: double_conv.1
$region0: #{double_conv.1}
  #allocation0 [shape = 'u32[]', space=smem, size = 0x4, offset = 0x4, fixed_abs, tag = 'smem constant byte address 0x4 - core index']
  #allocation1 [shape = 'u32[144,128]{1,0:T(1,128)}', space=vmem, size = 0x12000, scoped, tag = 'internal scratch']
  #allocation2 [shape = 'f32[8,768]{1,0:T(8,128)}', space=vmem, size = 0x6000, scoped, tag = 'scratch operand']
  %s0 = inlined_call_operand.vmem [shape: f32[4,768], index: 0, kind: input, shape index: {}]
  %s1 = inlined_call_operand.vmem [shape: f32[9,8,4], index: 1, kind: input, shape index: {}]
  %s2 = inlined_call_operand.vmem [shape: f32[9,8,8], index: 2, kind: input, shape index: {}]
  %s3 = inlined_call_operand.vmem [shape: f32[8,1], index: 3, kind: input, shape index: {}]
  %s4 = inlined_call_operand.vmem [shape: f32[8,1], index: 4, kind: input, shape index: {}]
  %s5 = inlined_call_operand.vmem [shape: f32[8,1], index: 5, kind: input, shape index: {}]
  %s6 = inlined_call_operand.vmem [shape: f32[8,1], index: 6, kind: input, shape index: {}]
  %s7 = inlined_call_operand.vmem [shape: f32[9,512], index: 7, kind: input, shape index: {}]
  %s8 = inlined_call_operand.vmem [shape: f32[8,512], index: 8, kind: output, shape index: {}]
  %s9 = sld [smem:[#allocation0]]
  $region42: #{double_conv.1} parent=0
    _
  %s11 = ssub.s32 1, %s9
  %s12 = scalar_select 0, %s11, %s9
  // Predicated region
  $region2: #{double_conv.1} parent=0 // pred_check
    _
  $region3: #{double_conv.1} parent=0 // pred_check_branch
    %14 = sbr.rel (0) target = $region5
  $region4: #{double_conv.1} parent=0 // pred_region
    _
  $region5: #{double_conv.1} parent=0 // pred_fallthru
    _
  // Predicated region
  $region6: #{double_conv.1} parent=0 // pred_check
    _
  $region7: #{double_conv.1} parent=0 // pred_check_branch
    %16 = sbr.rel (0) target = $region9
  $region8: #{double_conv.1} parent=0 // pred_region
    _
  $region9: #{double_conv.1} parent=0 // pred_fallthru
    _
  // Predicated region
  $region10: #{double_conv.1} parent=0 // pred_check
    _
  $region11: #{double_conv.1} parent=0 // pred_check_branch
    %18 = sbr.rel (0) target = $region13
  $region12: #{double_conv.1} parent=0 // pred_region
    _
  $region13: #{double_conv.1} parent=0 // pred_fallthru
    _
  // Predicated region
  $region14: #{double_conv.1} parent=0 // pred_check
    _
  $region15: #{double_conv.1} parent=0 // pred_check_branch
    %20 = sbr.rel (0) target = $region17
  $region16: #{double_conv.1} parent=0 // pred_region
    _
  $region17: #{double_conv.1} parent=0 // pred_fallthru
    _
  // Predicated region
  $region18: #{double_conv.1} parent=0 // pred_check
    _
  $region19: #{double_conv.1} parent=0 // pred_check_branch
    %22 = sbr.rel (0) target = $region21
  $region20: #{double_conv.1} parent=0 // pred_region
    _
  $region21: #{double_conv.1} parent=0 // pred_fallthru
    _
  // Predicated region
  $region22: #{double_conv.1} parent=0 // pred_check
    _
  $region23: #{double_conv.1} parent=0 // pred_check_branch
    %24 = sbr.rel (0) target = $region25
  $region24: #{double_conv.1} parent=0 // pred_region
    _
  $region25: #{double_conv.1} parent=0 // pred_fallthru
    _
  // Predicated region
  $region26: #{double_conv.1} parent=0 // pred_check
    _
  $region27: #{double_conv.1} parent=0 // pred_check_branch
    %26 = sbr.rel (0) target = $region29
  $region28: #{double_conv.1} parent=0 // pred_region
    _
  $region29: #{double_conv.1} parent=0 // pred_fallthru
    _
  // Predicated region
  $region30: #{double_conv.1} parent=0 // pred_check
    _
  $region31: #{double_conv.1} parent=0 // pred_check_branch
    %28 = sbr.rel (0) target = $region33
  $region32: #{double_conv.1} parent=0 // pred_region
    _
  $region33: #{double_conv.1} parent=0 // pred_fallthru
    _
  %v29 = vld [vmem:[%s7] sm:$0xff]
  %v30 = vld [vmem:[%s7 + $0x8] sm:$0xff]
  %v31 = vld [vmem:[%s7 + $0x10] sm:$0xff]
  %v32 = vld [vmem:[%s7 + $0x18] sm:$0xff]
  %v33 = vld [vmem:[%s7 + $0x20] sm:$0x1]
  %v34 = vld [vmem:[%s7 + $0x28] sm:$0x1]
  %v35 = vld [vmem:[%s7 + $0x30] sm:$0x1]
  %v36 = vld [vmem:[%s7 + $0x38] sm:$0x1]
  %v37 = vld [vmem:[%s0] sm:$0xff]
  %v38 = vld [vmem:[%s0 + $0x8] sm:$0xff]
  %v39 = vld [vmem:[%s0 + $0x10] sm:$0xf]
  %v40 = vlaneseq
  %v41 = vshrl.u32 %v40, 7
  %v42 = vsub.s32 0, %v41
  %v43 = vrot.slane %v29, %v42
  %v44 = vlaneseq
  %v45 = vshrl.u32 %v44, 7
  %v46 = vsub.s32 0, %v45
  %v47 = vrot.slane %v30, %v46
  %v48 = vlaneseq
  %v49 = vshrl.u32 %v48, 7
  %v50 = vsub.s32 0, %v49
  %v51 = vrot.slane %v31, %v50
  %v52 = vlaneseq
  %v53 = vshrl.u32 %v52, 7
  %v54 = vsub.s32 0, %v53
  %v55 = vrot.slane %v32, %v54
  %v60 = vcombine.low %v43, %v47
  %v61 = vcombine.low %v51, %v55
  %62 = vrot.lane.b32.xlu0 %v60, 111
  %v63 = vpop.permute.xlu0 %62
  %64 = vrot.lane.b32.xlu0 %v61, 111
  %v65 = vpop.permute.xlu0 %64
  %v66 = vrot.slane %v63, 4
  %v67 = vrot.slane %v65, 4
  %vm68 = vcmask 908288
  %v69 = vsel %vm68, %v66, %v63
  %vm70 = vcmask 1043456
  %v71 = vsel %vm70, %v66, %v67
  %v72 = vsel %vm68, %v71, %v65
  %v76 = vmul.f32 %v37, %v69
  %v77 = vmul.f32 %v38, %v72
  %v78 = vmul.f32 %v39, %v67
  %v79 = vld [vmem:[%s1] sm:$0xff]
  %v80 = vlaneseq
  %v81 = vshrl.u32 %v80, 7
  %v82 = vsub.s32 1, %v81
  %v83 = vrot.slane %v29, %v82
  %v84 = vlaneseq
  %v85 = vshrl.u32 %v84, 7
  %v86 = vsub.s32 1, %v85
  %v87 = vrot.slane %v30, %v86
  %v88 = vlaneseq
  %v89 = vshrl.u32 %v88, 7
  %v90 = vsub.s32 1, %v89
  %v91 = vrot.slane %v31, %v90
  %v92 = vlaneseq
  %v93 = vshrl.u32 %v92, 7
  %v94 = vsub.s32 1, %v93
  %v95 = vrot.slane %v32, %v94
  %v100 = vcombine.low %v83, %v87
  %v101 = vcombine.low %v91, %v95
  %102 = vrot.lane.b32.xlu0 %v100, 112
  %v103 = vpop.permute.xlu0 %102
  %104 = vrot.lane.b32.xlu0 %v101, 112
  %v105 = vpop.permute.xlu0 %104
  %v106 = vrot.slane %v103, 4
  %v107 = vrot.slane %v105, 4
  %vm108 = vcmask 916480
  %v109 = vsel %vm108, %v106, %v103
  %v110 = vsel %vm70, %v106, %v107
  %v111 = vsel %vm108, %v110, %v105
  %v115 = vmul.f32 %v37, %v109
  %v116 = vmul.f32 %v38, %v111
  %v117 = vmul.f32 %v39, %v107
  %s118 = scalar_lea.vmem %s1, 8
  %v119 = vld [vmem:[%s118] sm:$0xff]
  %v123 = vcombine.high %v115, %v115
  %v124 = vcombine.high %v116, %v116
  %125 = vrot.lane.b32.xlu0 %v115, 16
  %v126 = vpop.permute.xlu0 %125
  %127 = vrot.lane.b32.xlu0 %v123, 16
  %v128 = vpop.permute.xlu0 %127
  %129 = vrot.lane.b32.xlu0 %v116, 16
  %v130 = vpop.permute.xlu0 %129
  %131 = vrot.lane.b32.xlu0 %v124, 16
  %v132 = vpop.permute.xlu0 %131
  %133 = vrot.lane.b32.xlu0 %v117, 16
  %v134 = vpop.permute.xlu0 %133
  %vm135 = vcmask 130048
  %v136 = vsel %vm135, %v126, %v128
  %v137 = vsel %vm135, %v128, %v130
  %v138 = vsel %vm135, %v130, %v132
  %v139 = vsel %vm135, %v132, %v134
  %vm140 = vcmask 31744
  %v142 = vsel %vm140, %v119, 0
  %v144 = vsel %vm70, %v136, 0
  %v146 = vsel %vm70, %v137, 0
  %v148 = vsel %vm70, %v138, 0
  %v150 = vsel %vm70, %v139, 0
  %152 = vmatprep.subr.mxu0 0.0
  %153 = vmatpush1.msra.mxu0 0.0
  %154 = vmatprep.subr.mxu0 0.0
  %155 = vmatpush1.msra.mxu0 0.0
  %156 = vmatprep.subr.mxu0 0.0
  %157 = vmatpush1.msra.mxu0 0.0
  %158 = vmatprep.subr.mxu0 0.0
  %159 = vmatpush1.msra.mxu0 0.0
  %160 = vmatprep.subr.mxu0 0.0
  %161 = vmatpush1.msra.mxu0 0.0
  %162 = vmatprep.subr.mxu0 0.0
  %163 = vmatpush1.msra.mxu0 0.0
  %164 = vmatprep.subr.mxu0 0.0
  %165 = vmatpush1.msra.mxu0 0.0
  %166 = vmatprep.subr.mxu0 0.0
  %167 = vmatpush1.msra.mxu0 0.0
  %168 = vmatprep.subr.mxu0 0.0
  %169 = vmatpush1.msra.mxu0 0.0
  %170 = vmatprep.subr.mxu0 0.0
  %171 = vmatpush1.msra.mxu0 0.0
  %172 = vmatprep.subr.mxu0 0.0
  %173 = vmatpush1.msra.mxu0 0.0
  %174 = vmatprep.subr.mxu0 0.0
  %175 = vmatpush1.msra.mxu0 0.0
  %176 = vmatprep.subr.mxu0 0.0
  %177 = vmatpush1.msra.mxu0 0.0
  %178 = vmatprep.subr.mxu0 0.0
  %179 = vmatpush1.msra.mxu0 0.0
  %180 = vmatprep.subr.mxu0 0.0
  %181 = vmatpush1.msra.mxu0 0.0
  %182 = vmatprep.subr.mxu0 %v146
  %183 = vmatpush1.msra.mxu0 %v144
  %184 = vmatprep.subr.mxu0 0.0
  %185 = vmatpush2.msra.mxu0 0.0
  %186 = vmatprep.subr.mxu0 0.0
  %187 = vmatpush2.msra.mxu0 0.0
  %188 = vmatprep.subr.mxu0 0.0
  %189 = vmatpush2.msra.mxu0 0.0
  %190 = vmatprep.subr.mxu0 0.0
  %191 = vmatpush2.msra.mxu0 0.0
  %192 = vmatprep.subr.mxu0 0.0
  %193 = vmatpush2.msra.mxu0 0.0
  %194 = vmatprep.subr.mxu0 0.0
  %195 = vmatpush2.msra.mxu0 0.0
  %196 = vmatprep.subr.mxu0 0.0
  %197 = vmatpush2.msra.mxu0 0.0
  %198 = vmatprep.subr.mxu0 0.0
  %199 = vmatpush2.msra.mxu0 0.0
  %200 = vmatprep.subr.mxu0 0.0
  %201 = vmatpush2.msra.mxu0 0.0
  %202 = vmatprep.subr.mxu0 0.0
  %203 = vmatpush2.msra.mxu0 0.0
  %204 = vmatprep.subr.mxu0 0.0
  %205 = vmatpush2.msra.mxu0 0.0
  %206 = vmatprep.subr.mxu0 0.0
  %207 = vmatpush2.msra.mxu0 0.0
  %208 = vmatprep.subr.mxu0 0.0
  %209 = vmatpush2.msra.mxu0 0.0
  %210 = vmatprep.subr.mxu0 0.0
  %211 = vmatpush2.msra.mxu0 0.0
  %212 = vmatprep.subr.mxu0 0.0
  %213 = vmatpush2.msra.mxu0 0.0
  %214 = vmatprep.subr.mxu0 0.0
  %215 = vmatpush2.msra.mxu0 0.0
  %216 = vmatprep.mubr.f32.mxu0 0.0
  %217 = vmatmul.mubr.f32.gmra.mxu0 %v142
  %v218 = vpop.f32.mrf.mxu0
  %v219 = vadd.f32 0.0, %v218
  %v220 = vpop.f32.mrf.mxu0
  %v221 = vadd.f32 0.0, %v220
  %222 = vdwg.mxu0
  %223 = vmatprep.subr.mxu0 0.0
  %224 = vmatpush1.msra.mxu0 0.0
  %225 = vmatprep.subr.mxu0 0.0
  %226 = vmatpush1.msra.mxu0 0.0
  %227 = vmatprep.subr.mxu0 0.0
  %228 = vmatpush1.msra.mxu0 0.0
  %229 = vmatprep.subr.mxu0 0.0
  %230 = vmatpush1.msra.mxu0 0.0
  %231 = vmatprep.subr.mxu0 0.0
  %232 = vmatpush1.msra.mxu0 0.0
  %233 = vmatprep.subr.mxu0 0.0
  %234 = vmatpush1.msra.mxu0 0.0
  %235 = vmatprep.subr.mxu0 0.0
  %236 = vmatpush1.msra.mxu0 0.0
  %237 = vmatprep.subr.mxu0 0.0
  %238 = vmatpush1.msra.mxu0 0.0
  %239 = vmatprep.subr.mxu0 0.0
  %240 = vmatpush1.msra.mxu0 0.0
  %241 = vmatprep.subr.mxu0 0.0
  %242 = vmatpush1.msra.mxu0 0.0
  %243 = vmatprep.subr.mxu0 0.0
  %244 = vmatpush1.msra.mxu0 0.0
  %245 = vmatprep.subr.mxu0 0.0
  %246 = vmatpush1.msra.mxu0 0.0
  %247 = vmatprep.subr.mxu0 0.0
  %248 = vmatpush1.msra.mxu0 0.0
  %249 = vmatprep.subr.mxu0 0.0
  %250 = vmatpush1.msra.mxu0 0.0
  %251 = vmatprep.subr.mxu0 0.0
  %252 = vmatpush1.msra.mxu0 0.0
  %253 = vmatprep.subr.mxu0 %v150
  %254 = vmatpush1.msra.mxu0 %v148
  %255 = vmatprep.subr.mxu0 0.0
  %256 = vmatpush2.msra.mxu0 0.0
  %257 = vmatprep.subr.mxu0 0.0
  %258 = vmatpush2.msra.mxu0 0.0
  %259 = vmatprep.subr.mxu0 0.0
  %260 = vmatpush2.msra.mxu0 0.0
  %261 = vmatprep.subr.mxu0 0.0
  %262 = vmatpush2.msra.mxu0 0.0
  %263 = vmatprep.subr.mxu0 0.0
  %264 = vmatpush2.msra.mxu0 0.0
  %265 = vmatprep.subr.mxu0 0.0
  %266 = vmatpush2.msra.mxu0 0.0
  %267 = vmatprep.subr.mxu0 0.0
  %268 = vmatpush2.msra.mxu0 0.0
  %269 = vmatprep.subr.mxu0 0.0
  %270 = vmatpush2.msra.mxu0 0.0
  %271 = vmatprep.subr.mxu0 0.0
  %272 = vmatpush2.msra.mxu0 0.0
  %273 = vmatprep.subr.mxu0 0.0
  %274 = vmatpush2.msra.mxu0 0.0
  %275 = vmatprep.subr.mxu0 0.0
  %276 = vmatpush2.msra.mxu0 0.0
  %277 = vmatprep.subr.mxu0 0.0
  %278 = vmatpush2.msra.mxu0 0.0
  %279 = vmatprep.subr.mxu0 0.0
  %280 = vmatpush2.msra.mxu0 0.0
  %281 = vmatprep.subr.mxu0 0.0
  %282 = vmatpush2.msra.mxu0 0.0
  %283 = vmatprep.subr.mxu0 0.0
  %284 = vmatpush2.msra.mxu0 0.0
  %285 = vmatprep.subr.mxu0 0.0
  %286 = vmatpush2.msra.mxu0 0.0
  %287 = vmatprep.mubr.f32.mxu0 0.0
  %288 = vmatmul.mubr.f32.gmra.mxu0 %v142
  %v289 = vpop.f32.mrf.mxu0
  %v290 = vadd.f32 0.0, %v289
  %v291 = vpop.f32.mrf.mxu0
  %v292 = vadd.f32 0.0, %v291
  %293 = vdwg.mxu0
  %v297 = vcombine.high %v76, %v76
  %v298 = vcombine.high %v77, %v77
  %299 = vrot.lane.b32.xlu0 %v76, 17
  %v300 = vpop.permute.xlu0 %299
  %301 = vrot.lane.b32.xlu0 %v297, 17
  %v302 = vpop.permute.xlu0 %301
  %303 = vrot.lane.b32.xlu0 %v77, 17
  %v304 = vpop.permute.xlu0 %303
  %305 = vrot.lane.b32.xlu0 %v298, 17
  %v306 = vpop.permute.xlu0 %305
  %307 = vrot.lane.b32.xlu0 %v78, 17
  %v308 = vpop.permute.xlu0 %307
  %vm309 = vcmask 138240
  %v310 = vsel %vm309, %v300, %v302
  %v311 = vsel %vm309, %v302, %v304
  %v312 = vsel %vm309, %v304, %v306
  %v313 = vsel %vm309, %v306, %v308
  %v315 = vsel %vm140, %v79, 0
  %v317 = vsel %vm70, %v310, 0
  %v319 = vsel %vm70, %v311, 0
  %v321 = vsel %vm70, %v312, 0
  %v323 = vsel %vm70, %v313, 0
  %325 = vmatprep.subr.mxu0 0.0
  %326 = vmatpush1.msra.mxu0 0.0
  %327 = vmatprep.subr.mxu0 0.0
  %328 = vmatpush1.msra.mxu0 0.0
  %329 = vmatprep.subr.mxu0 0.0
  %330 = vmatpush1.msra.mxu0 0.0
  %331 = vmatprep.subr.mxu0 0.0
  %332 = vmatpush1.msra.mxu0 0.0
  %333 = vmatprep.subr.mxu0 0.0
  %334 = vmatpush1.msra.mxu0 0.0
  %335 = vmatprep.subr.mxu0 0.0
  %336 = vmatpush1.msra.mxu0 0.0
  %337 = vmatprep.subr.mxu0 0.0
  %338 = vmatpush1.msra.mxu0 0.0
  %339 = vmatprep.subr.mxu0 0.0
  %340 = vmatpush1.msra.mxu0 0.0
  %341 = vmatprep.subr.mxu0 0.0
  %342 = vmatpush1.msra.mxu0 0.0
  %343 = vmatprep.subr.mxu0 0.0
  %344 = vmatpush1.msra.mxu0 0.0
  %345 = vmatprep.subr.mxu0 0.0
  %346 = vmatpush1.msra.mxu0 0.0
  %347 = vmatprep.subr.mxu0 0.0
  %348 = vmatpush1.msra.mxu0 0.0
  %349 = vmatprep.subr.mxu0 0.0
  %350 = vmatpush1.msra.mxu0 0.0
  %351 = vmatprep.subr.mxu0 0.0
  %352 = vmatpush1.msra.mxu0 0.0
  %353 = vmatprep.subr.mxu0 0.0
  %354 = vmatpush1.msra.mxu0 0.0
  %355 = vmatprep.subr.mxu0 %v319
  %356 = vmatpush1.msra.mxu0 %v317
  %357 = vmatprep.subr.mxu0 0.0
  %358 = vmatpush2.msra.mxu0 0.0
  %359 = vmatprep.subr.mxu0 0.0
  %360 = vmatpush2.msra.mxu0 0.0
  %361 = vmatprep.subr.mxu0 0.0
  %362 = vmatpush2.msra.mxu0 0.0
  %363 = vmatprep.subr.mxu0 0.0
  %364 = vmatpush2.msra.mxu0 0.0
  %365 = vmatprep.subr.mxu0 0.0
  %366 = vmatpush2.msra.mxu0 0.0
  %367 = vmatprep.subr.mxu0 0.0
  %368 = vmatpush2.msra.mxu0 0.0
  %369 = vmatprep.subr.mxu0 0.0
  %370 = vmatpush2.msra.mxu0 0.0
  %371 = vmatprep.subr.mxu0 0.0
  %372 = vmatpush2.msra.mxu0 0.0
  %373 = vmatprep.subr.mxu0 0.0
  %374 = vmatpush2.msra.mxu0 0.0
  %375 = vmatprep.subr.mxu0 0.0
  %376 = vmatpush2.msra.mxu0 0.0
  %377 = vmatprep.subr.mxu0 0.0
  %378 = vmatpush2.msra.mxu0 0.0
  %379 = vmatprep.subr.mxu0 0.0
  %380 = vmatpush2.msra.mxu0 0.0
  %381 = vmatprep.subr.mxu0 0.0
  %382 = vmatpush2.msra.mxu0 0.0
  %383 = vmatprep.subr.mxu0 0.0
  %384 = vmatpush2.msra.mxu0 0.0
  %385 = vmatprep.subr.mxu0 0.0
  %386 = vmatpush2.msra.mxu0 0.0
  %387 = vmatprep.subr.mxu0 0.0
  %388 = vmatpush2.msra.mxu0 0.0
  %389 = vmatprep.mubr.f32.mxu0 0.0
  %390 = vmatmul.mubr.f32.gmra.mxu0 %v315
  %v391 = vpop.f32.mrf.mxu0
  %v392 = vadd.f32 %v219, %v391
  %v393 = vpop.f32.mrf.mxu0
  %v394 = vadd.f32 %v221, %v393
  %395 = vdwg.mxu0
  %396 = vmatprep.subr.mxu0 0.0
  %397 = vmatpush1.msra.mxu0 0.0
  %398 = vmatprep.subr.mxu0 0.0
  %399 = vmatpush1.msra.mxu0 0.0
  %400 = vmatprep.subr.mxu0 0.0
  %401 = vmatpush1.msra.mxu0 0.0
  %402 = vmatprep.subr.mxu0 0.0
  %403 = vmatpush1.msra.mxu0 0.0
  %404 = vmatprep.subr.mxu0 0.0
  %405 = vmatpush1.msra.mxu0 0.0
  %406 = vmatprep.subr.mxu0 0.0
  %407 = vmatpush1.msra.mxu0 0.0
  %408 = vmatprep.subr.mxu0 0.0
  %409 = vmatpush1.msra.mxu0 0.0
  %410 = vmatprep.subr.mxu0 0.0
  %411 = vmatpush1.msra.mxu0 0.0
  %412 = vmatprep.subr.mxu0 0.0
  %413 = vmatpush1.msra.mxu0 0.0
  %414 = vmatprep.subr.mxu0 0.0
  %415 = vmatpush1.msra.mxu0 0.0
  %416 = vmatprep.subr.mxu0 0.0
  %417 = vmatpush1.msra.mxu0 0.0
  %418 = vmatprep.subr.mxu0 0.0
  %419 = vmatpush1.msra.mxu0 0.0
  %420 = vmatprep.subr.mxu0 0.0
  %421 = vmatpush1.msra.mxu0 0.0
  %422 = vmatprep.subr.mxu0 0.0
  %423 = vmatpush1.msra.mxu0 0.0
  %424 = vmatprep.subr.mxu0 0.0
  %425 = vmatpush1.msra.mxu0 0.0
  %426 = vmatprep.subr.mxu0 %v323
  %427 = vmatpush1.msra.mxu0 %v321
  %428 = vmatprep.subr.mxu0 0.0
  %429 = vmatpush2.msra.mxu0 0.0
  %430 = vmatprep.subr.mxu0 0.0
  %431 = vmatpush2.msra.mxu0 0.0
  %432 = vmatprep.subr.mxu0 0.0
  %433 = vmatpush2.msra.mxu0 0.0
  %434 = vmatprep.subr.mxu0 0.0
  %435 = vmatpush2.msra.mxu0 0.0
  %436 = vmatprep.subr.mxu0 0.0
  %437 = vmatpush2.msra.mxu0 0.0
  %438 = vmatprep.subr.mxu0 0.0
  %439 = vmatpush2.msra.mxu0 0.0
  %440 = vmatprep.subr.mxu0 0.0
  %441 = vmatpush2.msra.mxu0 0.0
  %442 = vmatprep.subr.mxu0 0.0
  %443 = vmatpush2.msra.mxu0 0.0
  %444 = vmatprep.subr.mxu0 0.0
  %445 = vmatpush2.msra.mxu0 0.0
  %446 = vmatprep.subr.mxu0 0.0
  %447 = vmatpush2.msra.mxu0 0.0
  %448 = vmatprep.subr.mxu0 0.0
  %449 = vmatpush2.msra.mxu0 0.0
  %450 = vmatprep.subr.mxu0 0.0
  %451 = vmatpush2.msra.mxu0 0.0
  %452 = vmatprep.subr.mxu0 0.0
  %453 = vmatpush2.msra.mxu0 0.0
  %454 = vmatprep.subr.mxu0 0.0
  %455 = vmatpush2.msra.mxu0 0.0
  %456 = vmatprep.subr.mxu0 0.0
  %457 = vmatpush2.msra.mxu0 0.0
  %458 = vmatprep.subr.mxu0 0.0
  %459 = vmatpush2.msra.mxu0 0.0
  %460 = vmatprep.mubr.f32.mxu0 0.0
  %461 = vmatmul.mubr.f32.gmra.mxu0 %v315
  %v462 = vpop.f32.mrf.mxu0
  %v463 = vadd.f32 %v290, %v462
  %v464 = vpop.f32.mrf.mxu0
  %v465 = vadd.f32 %v292, %v464
  %466 = vdwg.mxu0
  %v467 = vld [vmem:[%s0] sm:$0xff]
  %v468 = vld [vmem:[%s0 + $0x8] sm:$0xff]
  %v469 = vld [vmem:[%s0 + $0x10] sm:$0xf]
  %v470 = vlaneseq
  %v471 = vshrl.u32 %v470, 7
  %v472 = vsub.s32 2, %v471
  %v473 = vrot.slane %v29, %v472
  %v474 = vlaneseq
  %v475 = vshrl.u32 %v474, 7
  %v476 = vsub.s32 2, %v475
  %v477 = vrot.slane %v30, %v476
  %v478 = vlaneseq
  %v479 = vshrl.u32 %v478, 7
  %v480 = vsub.s32 2, %v479
  %v481 = vrot.slane %v31, %v480
  %v482 = vlaneseq
  %v483 = vshrl.u32 %v482, 7
  %v484 = vsub.s32 2, %v483
  %v485 = vrot.slane %v32, %v484
  %v490 = vcombine.low %v473, %v477
  %v491 = vcombine.low %v481, %v485
  %492 = vrot.lane.b32.xlu0 %v490, 113
  %v493 = vpop.permute.xlu0 %492
  %494 = vrot.lane.b32.xlu0 %v491, 113
  %v495 = vpop.permute.xlu0 %494
  %v496 = vrot.slane %v493, 4
  %v497 = vrot.slane %v495, 4
  %vm498 = vcmask 924672
  %v499 = vsel %vm498, %v496, %v493
  %v500 = vsel %vm70, %v496, %v497
  %v501 = vsel %vm498, %v500, %v495
  %v505 = vmul.f32 %v467, %v499
  %v506 = vmul.f32 %v468, %v501
  %v507 = vmul.f32 %v469, %v497
  %s508 = scalar_lea.vmem %s1, 16
  %v509 = vld [vmem:[%s508] sm:$0xff]
  %v513 = vcombine.high %v505, %v505
  %v514 = vcombine.high %v506, %v506
  %515 = vrot.lane.b32.xlu0 %v505, 15
  %v516 = vpop.permute.xlu0 %515
  %517 = vrot.lane.b32.xlu0 %v513, 15
  %v518 = vpop.permute.xlu0 %517
  %519 = vrot.lane.b32.xlu0 %v506, 15
  %v520 = vpop.permute.xlu0 %519
  %521 = vrot.lane.b32.xlu0 %v514, 15
  %v522 = vpop.permute.xlu0 %521
  %523 = vrot.lane.b32.xlu0 %v507, 15
  %v524 = vpop.permute.xlu0 %523
  %vm525 = vcmask 121856
  %v526 = vsel %vm525, %v516, %v518
  %v527 = vsel %vm525, %v518, %v520
  %v528 = vsel %vm525, %v520, %v522
  %v529 = vsel %vm525, %v522, %v524
  %v531 = vsel %vm140, %v509, 0
  %v533 = vsel %vm70, %v526, 0
  %v535 = vsel %vm70, %v527, 0
  %v537 = vsel %vm70, %v528, 0
  %v539 = vsel %vm70, %v529, 0
  %541 = vmatprep.subr.mxu0 0.0
  %542 = vmatpush1.msra.mxu0 0.0
  %543 = vmatprep.subr.mxu0 0.0
  %544 = vmatpush1.msra.mxu0 0.0
  %545 = vmatprep.subr.mxu0 0.0
  %546 = vmatpush1.msra.mxu0 0.0
  %547 = vmatprep.subr.mxu0 0.0
  %548 = vmatpush1.msra.mxu0 0.0
  %549 = vmatprep.subr.mxu0 0.0
  %550 = vmatpush1.msra.mxu0 0.0
  %551 = vmatprep.subr.mxu0 0.0
  %552 = vmatpush1.msra.mxu0 0.0
  %553 = vmatprep.subr.mxu0 0.0
  %554 = vmatpush1.msra.mxu0 0.0
  %555 = vmatprep.subr.mxu0 0.0
  %556 = vmatpush1.msra.mxu0 0.0
  %557 = vmatprep.subr.mxu0 0.0
  %558 = vmatpush1.msra.mxu0 0.0
  %559 = vmatprep.subr.mxu0 0.0
  %560 = vmatpush1.msra.mxu0 0.0
  %561 = vmatprep.subr.mxu0 0.0
  %562 = vmatpush1.msra.mxu0 0.0
  %563 = vmatprep.subr.mxu0 0.0
  %564 = vmatpush1.msra.mxu0 0.0
  %565 = vmatprep.subr.mxu0 0.0
  %566 = vmatpush1.msra.mxu0 0.0
  %567 = vmatprep.subr.mxu0 0.0
  %568 = vmatpush1.msra.mxu0 0.0
  %569 = vmatprep.subr.mxu0 0.0
  %570 = vmatpush1.msra.mxu0 0.0
  %571 = vmatprep.subr.mxu0 %v535
  %572 = vmatpush1.msra.mxu0 %v533
  %573 = vmatprep.subr.mxu0 0.0
  %574 = vmatpush2.msra.mxu0 0.0
  %575 = vmatprep.subr.mxu0 0.0
  %576 = vmatpush2.msra.mxu0 0.0
  %577 = vmatprep.subr.mxu0 0.0
  %578 = vmatpush2.msra.mxu0 0.0
  %579 = vmatprep.subr.mxu0 0.0
  %580 = vmatpush2.msra.mxu0 0.0
  %581 = vmatprep.subr.mxu0 0.0
  %582 = vmatpush2.msra.mxu0 0.0
  %583 = vmatprep.subr.mxu0 0.0
  %584 = vmatpush2.msra.mxu0 0.0
  %585 = vmatprep.subr.mxu0 0.0
  %586 = vmatpush2.msra.mxu0 0.0
  %587 = vmatprep.subr.mxu0 0.0
  %588 = vmatpush2.msra.mxu0 0.0
  %589 = vmatprep.subr.mxu0 0.0
  %590 = vmatpush2.msra.mxu0 0.0
  %591 = vmatprep.subr.mxu0 0.0
  %592 = vmatpush2.msra.mxu0 0.0
  %593 = vmatprep.subr.mxu0 0.0
  %594 = vmatpush2.msra.mxu0 0.0
  %595 = vmatprep.subr.mxu0 0.0
  %596 = vmatpush2.msra.mxu0 0.0
  %597 = vmatprep.subr.mxu0 0.0
  %598 = vmatpush2.msra.mxu0 0.0
  %599 = vmatprep.subr.mxu0 0.0
  %600 = vmatpush2.msra.mxu0 0.0
  %601 = vmatprep.subr.mxu0 0.0
  %602 = vmatpush2.msra.mxu0 0.0
  %603 = vmatprep.subr.mxu0 0.0
  %604 = vmatpush2.msra.mxu0 0.0
  %605 = vmatprep.mubr.f32.mxu0 0.0
  %606 = vmatmul.mubr.f32.gmra.mxu0 %v531
  %v607 = vpop.f32.mrf.mxu0
  %v608 = vadd.f32 0.0, %v607
  %v609 = vpop.f32.mrf.mxu0
  %v610 = vadd.f32 0.0, %v609
  %611 = vdwg.mxu0
  %612 = vmatprep.subr.mxu0 0.0
  %613 = vmatpush1.msra.mxu0 0.0
  %614 = vmatprep.subr.mxu0 0.0
  %615 = vmatpush1.msra.mxu0 0.0
  %616 = vmatprep.subr.mxu0 0.0
  %617 = vmatpush1.msra.mxu0 0.0
  %618 = vmatprep.subr.mxu0 0.0
  %619 = vmatpush1.msra.mxu0 0.0
  %620 = vmatprep.subr.mxu0 0.0
  %621 = vmatpush1.msra.mxu0 0.0
  %622 = vmatprep.subr.mxu0 0.0
  %623 = vmatpush1.msra.mxu0 0.0
  %624 = vmatprep.subr.mxu0 0.0
  %625 = vmatpush1.msra.mxu0 0.0
  %626 = vmatprep.subr.mxu0 0.0
  %627 = vmatpush1.msra.mxu0 0.0
  %628 = vmatprep.subr.mxu0 0.0
  %629 = vmatpush1.msra.mxu0 0.0
  %630 = vmatprep.subr.mxu0 0.0
  %631 = vmatpush1.msra.mxu0 0.0
  %632 = vmatprep.subr.mxu0 0.0
  %633 = vmatpush1.msra.mxu0 0.0
  %634 = vmatprep.subr.mxu0 0.0
  %635 = vmatpush1.msra.mxu0 0.0
  %636 = vmatprep.subr.mxu0 0.0
  %637 = vmatpush1.msra.mxu0 0.0
  %638 = vmatprep.subr.mxu0 0.0
  %639 = vmatpush1.msra.mxu0 0.0
  %640 = vmatprep.subr.mxu0 0.0
  %641 = vmatpush1.msra.mxu0 0.0
  %642 = vmatprep.subr.mxu0 %v539
  %643 = vmatpush1.msra.mxu0 %v537
  %644 = vmatprep.subr.mxu0 0.0
  %645 = vmatpush2.msra.mxu0 0.0
  %646 = vmatprep.subr.mxu0 0.0
  %647 = vmatpush2.msra.mxu0 0.0
  %648 = vmatprep.subr.mxu0 0.0
  %649 = vmatpush2.msra.mxu0 0.0
  %650 = vmatprep.subr.mxu0 0.0
  %651 = vmatpush2.msra.mxu0 0.0
  %652 = vmatprep.subr.mxu0 0.0
  %653 = vmatpush2.msra.mxu0 0.0
  %654 = vmatprep.subr.mxu0 0.0
  %655 = vmatpush2.msra.mxu0 0.0
  %656 = vmatprep.subr.mxu0 0.0
  %657 = vmatpush2.msra.mxu0 0.0
  %658 = vmatprep.subr.mxu0 0.0
  %659 = vmatpush2.msra.mxu0 0.0
  %660 = vmatprep.subr.mxu0 0.0
  %661 = vmatpush2.msra.mxu0 0.0
  %662 = vmatprep.subr.mxu0 0.0
  %663 = vmatpush2.msra.mxu0 0.0
  %664 = vmatprep.subr.mxu0 0.0
  %665 = vmatpush2.msra.mxu0 0.0
  %666 = vmatprep.subr.mxu0 0.0
  %667 = vmatpush2.msra.mxu0 0.0
  %668 = vmatprep.subr.mxu0 0.0
  %669 = vmatpush2.msra.mxu0 0.0
  %670 = vmatprep.subr.mxu0 0.0
  %671 = vmatpush2.msra.mxu0 0.0
  %672 = vmatprep.subr.mxu0 0.0
  %673 = vmatpush2.msra.mxu0 0.0
  %674 = vmatprep.subr.mxu0 0.0
  %675 = vmatpush2.msra.mxu0 0.0
  %676 = vmatprep.mubr.f32.mxu0 0.0
  %677 = vmatmul.mubr.f32.gmra.mxu0 %v531
  %v678 = vpop.f32.mrf.mxu0
  %v679 = vadd.f32 0.0, %v678
  %v680 = vpop.f32.mrf.mxu0
  %v681 = vadd.f32 0.0, %v680
  %682 = vdwg.mxu0
  %v683 = vadd.f32 %v392, %v608
  %v684 = vadd.f32 %v394, %v610
  %v685 = vadd.f32 %v463, %v679
  %v686 = vadd.f32 %v465, %v681
  %v687 = vld [vmem:[%s0] sm:$0xff]
  %v688 = vld [vmem:[%s0 + $0x8] sm:$0xff]
  %v689 = vld [vmem:[%s0 + $0x10] sm:$0xf]
  %v690 = vlaneseq
  %v691 = vshrl.u32 %v690, 7
  %v692 = vsub.s32 3, %v691
  %v693 = vrot.slane %v29, %v692
  %v694 = vlaneseq
  %v695 = vshrl.u32 %v694, 7
  %v696 = vsub.s32 3, %v695
  %v697 = vrot.slane %v30, %v696
  %v698 = vlaneseq
  %v699 = vshrl.u32 %v698, 7
  %v700 = vsub.s32 3, %v699
  %v701 = vrot.slane %v31, %v700
  %v702 = vlaneseq
  %v703 = vshrl.u32 %v702, 7
  %v704 = vsub.s32 3, %v703
  %v705 = vrot.slane %v32, %v704
  %v710 = vcombine.low %v693, %v697
  %v711 = vcombine.low %v701, %v705
  %712 = vrot.lane.b32.xlu0 %v710, 127
  %v713 = vpop.permute.xlu0 %712
  %714 = vrot.lane.b32.xlu0 %v711, 127
  %v715 = vpop.permute.xlu0 %714
  %v716 = vrot.slane %v713, 4
  %v717 = vrot.slane %v715, 4
  %vm718 = vcmask 1039360
  %v719 = vsel %vm718, %v716, %v713
  %v720 = vsel %vm70, %v716, %v717
  %v721 = vsel %vm718, %v720, %v715
  %v725 = vmul.f32 %v687, %v719
  %v726 = vmul.f32 %v688, %v721
  %v727 = vmul.f32 %v689, %v717
  %s728 = scalar_lea.vmem %s1, 24
  %v729 = vld [vmem:[%s728] sm:$0xff]
  %v733 = vcombine.high %v725, %v725
  %v734 = vcombine.high %v726, %v726
  %735 = vrot.lane.b32.xlu0 %v725, 1
  %v736 = vpop.permute.xlu0 %735
  %737 = vrot.lane.b32.xlu0 %v733, 1
  %v738 = vpop.permute.xlu0 %737
  %739 = vrot.lane.b32.xlu0 %v726, 1
  %v740 = vpop.permute.xlu0 %739
  %741 = vrot.lane.b32.xlu0 %v734, 1
  %v742 = vpop.permute.xlu0 %741
  %743 = vrot.lane.b32.xlu0 %v727, 1
  %v744 = vpop.permute.xlu0 %743
  %vm745 = vcmask 7168
  %v746 = vsel %vm745, %v736, %v738
  %v747 = vsel %vm745, %v738, %v740
  %v748 = vsel %vm745, %v740, %v742
  %v749 = vsel %vm745, %v742, %v744
  %v751 = vsel %vm140, %v729, 0
  %v753 = vsel %vm70, %v746, 0
  %v755 = vsel %vm70, %v747, 0
  %v757 = vsel %vm70, %v748, 0
  %v759 = vsel %vm70, %v749, 0
  %761 = vmatprep.subr.mxu0 0.0
  %762 = vmatpush1.msra.mxu0 0.0
  %763 = vmatprep.subr.mxu0 0.0
  %764 = vmatpush1.msra.mxu0 0.0
  %765 = vmatprep.subr.mxu0 0.0
  %766 = vmatpush1.msra.mxu0 0.0
  %767 = vmatprep.subr.mxu0 0.0
  %768 = vmatpush1.msra.mxu0 0.0
  %769 = vmatprep.subr.mxu0 0.0
  %770 = vmatpush1.msra.mxu0 0.0
  %771 = vmatprep.subr.mxu0 0.0
  %772 = vmatpush1.msra.mxu0 0.0
  %773 = vmatprep.subr.mxu0 0.0
  %774 = vmatpush1.msra.mxu0 0.0
  %775 = vmatprep.subr.mxu0 0.0
  %776 = vmatpush1.msra.mxu0 0.0
  %777 = vmatprep.subr.mxu0 0.0
  %778 = vmatpush1.msra.mxu0 0.0
  %779 = vmatprep.subr.mxu0 0.0
  %780 = vmatpush1.msra.mxu0 0.0
  %781 = vmatprep.subr.mxu0 0.0
  %782 = vmatpush1.msra.mxu0 0.0
  %783 = vmatprep.subr.mxu0 0.0
  %784 = vmatpush1.msra.mxu0 0.0
  %785 = vmatprep.subr.mxu0 0.0
  %786 = vmatpush1.msra.mxu0 0.0
  %787 = vmatprep.subr.mxu0 0.0
  %788 = vmatpush1.msra.mxu0 0.0
  %789 = vmatprep.subr.mxu0 0.0
  %790 = vmatpush1.msra.mxu0 0.0
  %791 = vmatprep.subr.mxu0 %v755
  %792 = vmatpush1.msra.mxu0 %v753
  %793 = vmatprep.subr.mxu0 0.0
  %794 = vmatpush2.msra.mxu0 0.0
  %795 = vmatprep.subr.mxu0 0.0
  %796 = vmatpush2.msra.mxu0 0.0
  %797 = vmatprep.subr.mxu0 0.0
  %798 = vmatpush2.msra.mxu0 0.0
  %799 = vmatprep.subr.mxu0 0.0
  %800 = vmatpush2.msra.mxu0 0.0
  %801 = vmatprep.subr.mxu0 0.0
  %802 = vmatpush2.msra.mxu0 0.0
  %803 = vmatprep.subr.mxu0 0.0
  %804 = vmatpush2.msra.mxu0 0.0
  %805 = vmatprep.subr.mxu0 0.0
  %806 = vmatpush2.msra.mxu0 0.0
  %807 = vmatprep.subr.mxu0 0.0
  %808 = vmatpush2.msra.mxu0 0.0
  %809 = vmatprep.subr.mxu0 0.0
  %810 = vmatpush2.msra.mxu0 0.0
  %811 = vmatprep.subr.mxu0 0.0
  %812 = vmatpush2.msra.mxu0 0.0
  %813 = vmatprep.subr.mxu0 0.0
  %814 = vmatpush2.msra.mxu0 0.0
  %815 = vmatprep.subr.mxu0 0.0
  %816 = vmatpush2.msra.mxu0 0.0
  %817 = vmatprep.subr.mxu0 0.0
  %818 = vmatpush2.msra.mxu0 0.0
  %819 = vmatprep.subr.mxu0 0.0
  %820 = vmatpush2.msra.mxu0 0.0
  %821 = vmatprep.subr.mxu0 0.0
  %822 = vmatpush2.msra.mxu0 0.0
  %823 = vmatprep.subr.mxu0 0.0
  %824 = vmatpush2.msra.mxu0 0.0
  %825 = vmatprep.mubr.f32.mxu0 0.0
  %826 = vmatmul.mubr.f32.gmra.mxu0 %v751
  %v827 = vpop.f32.mrf.mxu0
  %v828 = vadd.f32 0.0, %v827
  %v829 = vpop.f32.mrf.mxu0
  %v830 = vadd.f32 0.0, %v829
  %831 = vdwg.mxu0
  %832 = vmatprep.subr.mxu0 0.0
  %833 = vmatpush1.msra.mxu0 0.0
  %834 = vmatprep.subr.mxu0 0.0
  %835 = vmatpush1.msra.mxu0 0.0
  %836 = vmatprep.subr.mxu0 0.0
  %837 = vmatpush1.msra.mxu0 0.0
  %838 = vmatprep.subr.mxu0 0.0
  %839 = vmatpush1.msra.mxu0 0.0
  %840 = vmatprep.subr.mxu0 0.0
  %841 = vmatpush1.msra.mxu0 0.0
  %842 = vmatprep.subr.mxu0 0.0
  %843 = vmatpush1.msra.mxu0 0.0
  %844 = vmatprep.subr.mxu0 0.0
  %845 = vmatpush1.msra.mxu0 0.0
  %846 = vmatprep.subr.mxu0 0.0
  %847 = vmatpush1.msra.mxu0 0.0
  %848 = vmatprep.subr.mxu0 0.0
  %849 = vmatpush1.msra.mxu0 0.0
  %850 = vmatprep.subr.mxu0 0.0
  %851 = vmatpush1.msra.mxu0 0.0
  %852 = vmatprep.subr.mxu0 0.0
  %853 = vmatpush1.msra.mxu0 0.0
  %854 = vmatprep.subr.mxu0 0.0
  %855 = vmatpush1.msra.mxu0 0.0
  %856 = vmatprep.subr.mxu0 0.0
  %857 = vmatpush1.msra.mxu0 0.0
  %858 = vmatprep.subr.mxu0 0.0
  %859 = vmatpush1.msra.mxu0 0.0
  %860 = vmatprep.subr.mxu0 0.0
  %861 = vmatpush1.msra.mxu0 0.0
  %862 = vmatprep.subr.mxu0 %v759
  %863 = vmatpush1.msra.mxu0 %v757
  %864 = vmatprep.subr.mxu0 0.0
  %865 = vmatpush2.msra.mxu0 0.0
  %866 = vmatprep.subr.mxu0 0.0
  %867 = vmatpush2.msra.mxu0 0.0
  %868 = vmatprep.subr.mxu0 0.0
  %869 = vmatpush2.msra.mxu0 0.0
  %870 = vmatprep.subr.mxu0 0.0
  %871 = vmatpush2.msra.mxu0 0.0
  %872 = vmatprep.subr.mxu0 0.0
  %873 = vmatpush2.msra.mxu0 0.0
  %874 = vmatprep.subr.mxu0 0.0
  %875 = vmatpush2.msra.mxu0 0.0
  %876 = vmatprep.subr.mxu0 0.0
  %877 = vmatpush2.msra.mxu0 0.0
  %878 = vmatprep.subr.mxu0 0.0
  %879 = vmatpush2.msra.mxu0 0.0
  %880 = vmatprep.subr.mxu0 0.0
  %881 = vmatpush2.msra.mxu0 0.0
  %882 = vmatprep.subr.mxu0 0.0
  %883 = vmatpush2.msra.mxu0 0.0
  %884 = vmatprep.subr.mxu0 0.0
  %885 = vmatpush2.msra.mxu0 0.0
  %886 = vmatprep.subr.mxu0 0.0
  %887 = vmatpush2.msra.mxu0 0.0
  %888 = vmatprep.subr.mxu0 0.0
  %889 = vmatpush2.msra.mxu0 0.0
  %890 = vmatprep.subr.mxu0 0.0
  %891 = vmatpush2.msra.mxu0 0.0
  %892 = vmatprep.subr.mxu0 0.0
  %893 = vmatpush2.msra.mxu0 0.0
  %894 = vmatprep.subr.mxu0 0.0
  %895 = vmatpush2.msra.mxu0 0.0
  %896 = vmatprep.mubr.f32.mxu0 0.0
  %897 = vmatmul.mubr.f32.gmra.mxu0 %v751
  %v898 = vpop.f32.mrf.mxu0
  %v899 = vadd.f32 0.0, %v898
  %v900 = vpop.f32.mrf.mxu0
  %v901 = vadd.f32 0.0, %v900
  %902 = vdwg.mxu0
  %v903 = vadd.f32 %v683, %v828
  %v904 = vadd.f32 %v684, %v830
  %v905 = vadd.f32 %v685, %v899
  %v906 = vadd.f32 %v686, %v901
  %v907 = vld [vmem:[%s0 + $0x4] sm:$0xff]
  %v908 = vld [vmem:[%s0 + $0xc] sm:$0xff]
  %s909 = scalar_lea.vmem %s1, 32
  %v910 = vld [vmem:[%s909] sm:$0xff]
  %v913 = vcombine.high %v907, %v907
  %v914 = vcombine.high %v908, %v908
  %v916 = vsel %vm140, %v910, 0
  %v918 = vsel %vm70, %v907, 0
  %v920 = vsel %vm70, %v913, 0
  %v922 = vsel %vm70, %v908, 0
  %v924 = vsel %vm70, %v914, 0
  %926 = vmatprep.subr.mxu0 0.0
  %927 = vmatpush1.msra.mxu0 0.0
  %928 = vmatprep.subr.mxu0 0.0
  %929 = vmatpush1.msra.mxu0 0.0
  %930 = vmatprep.subr.mxu0 0.0
  %931 = vmatpush1.msra.mxu0 0.0
  %932 = vmatprep.subr.mxu0 0.0
  %933 = vmatpush1.msra.mxu0 0.0
  %934 = vmatprep.subr.mxu0 0.0
  %935 = vmatpush1.msra.mxu0 0.0
  %936 = vmatprep.subr.mxu0 0.0
  %937 = vmatpush1.msra.mxu0 0.0
  %938 = vmatprep.subr.mxu0 0.0
  %939 = vmatpush1.msra.mxu0 0.0
  %940 = vmatprep.subr.mxu0 0.0
  %941 = vmatpush1.msra.mxu0 0.0
  %942 = vmatprep.subr.mxu0 0.0
  %943 = vmatpush1.msra.mxu0 0.0
  %944 = vmatprep.subr.mxu0 0.0
  %945 = vmatpush1.msra.mxu0 0.0
  %946 = vmatprep.subr.mxu0 0.0
  %947 = vmatpush1.msra.mxu0 0.0
  %948 = vmatprep.subr.mxu0 0.0
  %949 = vmatpush1.msra.mxu0 0.0
  %950 = vmatprep.subr.mxu0 0.0
  %951 = vmatpush1.msra.mxu0 0.0
  %952 = vmatprep.subr.mxu0 0.0
  %953 = vmatpush1.msra.mxu0 0.0
  %954 = vmatprep.subr.mxu0 0.0
  %955 = vmatpush1.msra.mxu0 0.0
  %956 = vmatprep.subr.mxu0 %v920
  %957 = vmatpush1.msra.mxu0 %v918
  %958 = vmatprep.subr.mxu0 0.0
  %959 = vmatpush2.msra.mxu0 0.0
  %960 = vmatprep.subr.mxu0 0.0
  %961 = vmatpush2.msra.mxu0 0.0
  %962 = vmatprep.subr.mxu0 0.0
  %963 = vmatpush2.msra.mxu0 0.0
  %964 = vmatprep.subr.mxu0 0.0
  %965 = vmatpush2.msra.mxu0 0.0
  %966 = vmatprep.subr.mxu0 0.0
  %967 = vmatpush2.msra.mxu0 0.0
  %968 = vmatprep.subr.mxu0 0.0
  %969 = vmatpush2.msra.mxu0 0.0
  %970 = vmatprep.subr.mxu0 0.0
  %971 = vmatpush2.msra.mxu0 0.0
  %972 = vmatprep.subr.mxu0 0.0
  %973 = vmatpush2.msra.mxu0 0.0
  %974 = vmatprep.subr.mxu0 0.0
  %975 = vmatpush2.msra.mxu0 0.0
  %976 = vmatprep.subr.mxu0 0.0
  %977 = vmatpush2.msra.mxu0 0.0
  %978 = vmatprep.subr.mxu0 0.0
  %979 = vmatpush2.msra.mxu0 0.0
  %980 = vmatprep.subr.mxu0 0.0
  %981 = vmatpush2.msra.mxu0 0.0
  %982 = vmatprep.subr.mxu0 0.0
  %983 = vmatpush2.msra.mxu0 0.0
  %984 = vmatprep.subr.mxu0 0.0
  %985 = vmatpush2.msra.mxu0 0.0
  %986 = vmatprep.subr.mxu0 0.0
  %987 = vmatpush2.msra.mxu0 0.0
  %988 = vmatprep.subr.mxu0 0.0
  %989 = vmatpush2.msra.mxu0 0.0
  %990 = vmatprep.mubr.f32.mxu0 0.0
  %991 = vmatmul.mubr.f32.gmra.mxu0 %v916
  %v992 = vpop.f32.mrf.mxu0
  %v993 = vadd.f32 0.0, %v992
  %v994 = vpop.f32.mrf.mxu0
  %v995 = vadd.f32 0.0, %v994
  %996 = vdwg.mxu0
  %997 = vmatprep.subr.mxu0 0.0
  %998 = vmatpush1.msra.mxu0 0.0
  %999 = vmatprep.subr.mxu0 0.0
  %1000 = vmatpush1.msra.mxu0 0.0
  %1001 = vmatprep.subr.mxu0 0.0
  %1002 = vmatpush1.msra.mxu0 0.0
  %1003 = vmatprep.subr.mxu0 0.0
  %1004 = vmatpush1.msra.mxu0 0.0
  %1005 = vmatprep.subr.mxu0 0.0
  %1006 = vmatpush1.msra.mxu0 0.0
  %1007 = vmatprep.subr.mxu0 0.0
  %1008 = vmatpush1.msra.mxu0 0.0
  %1009 = vmatprep.subr.mxu0 0.0
  %1010 = vmatpush1.msra.mxu0 0.0
  %1011 = vmatprep.subr.mxu0 0.0
  %1012 = vmatpush1.msra.mxu0 0.0
  %1013 = vmatprep.subr.mxu0 0.0
  %1014 = vmatpush1.msra.mxu0 0.0
  %1015 = vmatprep.subr.mxu0 0.0
  %1016 = vmatpush1.msra.mxu0 0.0
  %1017 = vmatprep.subr.mxu0 0.0
  %1018 = vmatpush1.msra.mxu0 0.0
  %1019 = vmatprep.subr.mxu0 0.0
  %1020 = vmatpush1.msra.mxu0 0.0
  %1021 = vmatprep.subr.mxu0 0.0
  %1022 = vmatpush1.msra.mxu0 0.0
  %1023 = vmatprep.subr.mxu0 0.0
  %1024 = vmatpush1.msra.mxu0 0.0
  %1025 = vmatprep.subr.mxu0 0.0
  %1026 = vmatpush1.msra.mxu0 0.0
  %1027 = vmatprep.subr.mxu0 %v924
  %1028 = vmatpush1.msra.mxu0 %v922
  %1029 = vmatprep.subr.mxu0 0.0
  %1030 = vmatpush2.msra.mxu0 0.0
  %1031 = vmatprep.subr.mxu0 0.0
  %1032 = vmatpush2.msra.mxu0 0.0
  %1033 = vmatprep.subr.mxu0 0.0
  %1034 = vmatpush2.msra.mxu0 0.0
  %1035 = vmatprep.subr.mxu0 0.0
  %1036 = vmatpush2.msra.mxu0 0.0
  %1037 = vmatprep.subr.mxu0 0.0
  %1038 = vmatpush2.msra.mxu0 0.0
  %1039 = vmatprep.subr.mxu0 0.0
  %1040 = vmatpush2.msra.mxu0 0.0
  %1041 = vmatprep.subr.mxu0 0.0
  %1042 = vmatpush2.msra.mxu0 0.0
  %1043 = vmatprep.subr.mxu0 0.0
  %1044 = vmatpush2.msra.mxu0 0.0
  %1045 = vmatprep.subr.mxu0 0.0
  %1046 = vmatpush2.msra.mxu0 0.0
  %1047 = vmatprep.subr.mxu0 0.0
  %1048 = vmatpush2.msra.mxu0 0.0
  %1049 = vmatprep.subr.mxu0 0.0
  %1050 = vmatpush2.msra.mxu0 0.0
  %1051 = vmatprep.subr.mxu0 0.0
  %1052 = vmatpush2.msra.mxu0 0.0
  %1053 = vmatprep.subr.mxu0 0.0
  %1054 = vmatpush2.msra.mxu0 0.0
  %1055 = vmatprep.subr.mxu0 0.0
  %1056 = vmatpush2.msra.mxu0 0.0
  %1057 = vmatprep.subr.mxu0 0.0
  %1058 = vmatpush2.msra.mxu0 0.0
  %1059 = vmatprep.subr.mxu0 0.0
  %1060 = vmatpush2.msra.mxu0 0.0
  %1061 = vmatprep.mubr.f32.mxu0 0.0
  %1062 = vmatmul.mubr.f32.gmra.mxu0 %v916
  %v1063 = vpop.f32.mrf.mxu0
  %v1064 = vadd.f32 0.0, %v1063
  %v1065 = vpop.f32.mrf.mxu0
  %v1066 = vadd.f32 0.0, %v1065
  %1067 = vdwg.mxu0
  %v1068 = vadd.f32 %v903, %v993
  %v1069 = vadd.f32 %v904, %v995
  %v1070 = vadd.f32 %v905, %v1064
  %v1071 = vadd.f32 %v906, %v1066
  %v1072 = vld [vmem:[%s0 + $0x4] sm:$0xff]
  %v1073 = vld [vmem:[%s0 + $0xc] sm:$0xff]
  %v1074 = vld [vmem:[%s0 + $0x14] sm:$0xf]
  %v1075 = vlaneseq
  %v1076 = vshrl.u32 %v1075, 7
  %v1077 = vsub.s32 5, %v1076
  %v1078 = vrot.slane %v29, %v1077
  %v1079 = vlaneseq
  %v1080 = vshrl.u32 %v1079, 7
  %v1081 = vsub.s32 5, %v1080
  %v1082 = vrot.slane %v30, %v1081
  %v1083 = vlaneseq
  %v1084 = vshrl.u32 %v1083, 7
  %v1085 = vsub.s32 5, %v1084
  %v1086 = vrot.slane %v31, %v1085
  %v1087 = vlaneseq
  %v1088 = vshrl.u32 %v1087, 7
  %v1089 = vsub.s32 5, %v1088
  %v1090 = vrot.slane %v32, %v1089
  %v1095 = vcombine.low %v1078, %v1082
  %v1096 = vcombine.low %v1086, %v1090
  %1097 = vrot.lane.b32.xlu0 %v1095, 1
  %v1098 = vpop.permute.xlu0 %1097
  %1099 = vrot.lane.b32.xlu0 %v1096, 1
  %v1100 = vpop.permute.xlu0 %1099
  %v1101 = vrot.slane %v1098, 4
  %v1102 = vrot.slane %v1100, 4
  %v1103 = vsel %vm745, %v1101, %v1098
  %v1104 = vsel %vm70, %v1101, %v1102
  %v1105 = vsel %vm745, %v1104, %v1100
  %v1109 = vmul.f32 %v1072, %v1103
  %v1110 = vmul.f32 %v1073, %v1105
  %v1111 = vmul.f32 %v1074, %v1102
  %s1112 = scalar_lea.vmem %s1, 40
  %v1113 = vld [vmem:[%s1112] sm:$0xff]
  %v1117 = vcombine.high %v1109, %v1109
  %v1118 = vcombine.high %v1110, %v1110
  %1119 = vrot.lane.b32.xlu0 %v1109, 127
  %v1120 = vpop.permute.xlu0 %1119
  %1121 = vrot.lane.b32.xlu0 %v1117, 127
  %v1122 = vpop.permute.xlu0 %1121
  %1123 = vrot.lane.b32.xlu0 %v1110, 127
  %v1124 = vpop.permute.xlu0 %1123
  %1125 = vrot.lane.b32.xlu0 %v1118, 127
  %v1126 = vpop.permute.xlu0 %1125
  %1127 = vrot.lane.b32.xlu0 %v1111, 127
  %v1128 = vpop.permute.xlu0 %1127
  %v1129 = vsel %vm718, %v1120, %v1122
  %v1130 = vsel %vm718, %v1122, %v1124
  %v1131 = vsel %vm718, %v1124, %v1126
  %v1132 = vsel %vm718, %v1126, %v1128
  %v1134 = vsel %vm140, %v1113, 0
  %v1136 = vsel %vm70, %v1129, 0
  %v1138 = vsel %vm70, %v1130, 0
  %v1140 = vsel %vm70, %v1131, 0
  %v1142 = vsel %vm70, %v1132, 0
  %1144 = vmatprep.subr.mxu0 0.0
  %1145 = vmatpush1.msra.mxu0 0.0
  %1146 = vmatprep.subr.mxu0 0.0
  %1147 = vmatpush1.msra.mxu0 0.0
  %1148 = vmatprep.subr.mxu0 0.0
  %1149 = vmatpush1.msra.mxu0 0.0
  %1150 = vmatprep.subr.mxu0 0.0
  %1151 = vmatpush1.msra.mxu0 0.0
  %1152 = vmatprep.subr.mxu0 0.0
  %1153 = vmatpush1.msra.mxu0 0.0
  %1154 = vmatprep.subr.mxu0 0.0
  %1155 = vmatpush1.msra.mxu0 0.0
  %1156 = vmatprep.subr.mxu0 0.0
  %1157 = vmatpush1.msra.mxu0 0.0
  %1158 = vmatprep.subr.mxu0 0.0
  %1159 = vmatpush1.msra.mxu0 0.0
  %1160 = vmatprep.subr.mxu0 0.0
  %1161 = vmatpush1.msra.mxu0 0.0
  %1162 = vmatprep.subr.mxu0 0.0
  %1163 = vmatpush1.msra.mxu0 0.0
  %1164 = vmatprep.subr.mxu0 0.0
  %1165 = vmatpush1.msra.mxu0 0.0
  %1166 = vmatprep.subr.mxu0 0.0
  %1167 = vmatpush1.msra.mxu0 0.0
  %1168 = vmatprep.subr.mxu0 0.0
  %1169 = vmatpush1.msra.mxu0 0.0
  %1170 = vmatprep.subr.mxu0 0.0
  %1171 = vmatpush1.msra.mxu0 0.0
  %1172 = vmatprep.subr.mxu0 0.0
  %1173 = vmatpush1.msra.mxu0 0.0
  %1174 = vmatprep.subr.mxu0 %v1138
  %1175 = vmatpush1.msra.mxu0 %v1136
  %1176 = vmatprep.subr.mxu0 0.0
  %1177 = vmatpush2.msra.mxu0 0.0
  %1178 = vmatprep.subr.mxu0 0.0
  %1179 = vmatpush2.msra.mxu0 0.0
  %1180 = vmatprep.subr.mxu0 0.0
  %1181 = vmatpush2.msra.mxu0 0.0
  %1182 = vmatprep.subr.mxu0 0.0
  %1183 = vmatpush2.msra.mxu0 0.0
  %1184 = vmatprep.subr.mxu0 0.0
  %1185 = vmatpush2.msra.mxu0 0.0
  %1186 = vmatprep.subr.mxu0 0.0
  %1187 = vmatpush2.msra.mxu0 0.0
  %1188 = vmatprep.subr.mxu0 0.0
  %1189 = vmatpush2.msra.mxu0 0.0
  %1190 = vmatprep.subr.mxu0 0.0
  %1191 = vmatpush2.msra.mxu0 0.0
  %1192 = vmatprep.subr.mxu0 0.0
  %1193 = vmatpush2.msra.mxu0 0.0
  %1194 = vmatprep.subr.mxu0 0.0
  %1195 = vmatpush2.msra.mxu0 0.0
  %1196 = vmatprep.subr.mxu0 0.0
  %1197 = vmatpush2.msra.mxu0 0.0
  %1198 = vmatprep.subr.mxu0 0.0
  %1199 = vmatpush2.msra.mxu0 0.0
  %1200 = vmatprep.subr.mxu0 0.0
  %1201 = vmatpush2.msra.mxu0 0.0
  %1202 = vmatprep.subr.mxu0 0.0
  %1203 = vmatpush2.msra.mxu0 0.0
  %1204 = vmatprep.subr.mxu0 0.0
  %1205 = vmatpush2.msra.mxu0 0.0
  %1206 = vmatprep.subr.mxu0 0.0
  %1207 = vmatpush2.msra.mxu0 0.0
  %1208 = vmatprep.mubr.f32.mxu0 0.0
  %1209 = vmatmul.mubr.f32.gmra.mxu0 %v1134
  %v1210 = vpop.f32.mrf.mxu0
  %v1211 = vadd.f32 0.0, %v1210
  %v1212 = vpop.f32.mrf.mxu0
  %v1213 = vadd.f32 0.0, %v1212
  %1214 = vdwg.mxu0
  %1215 = vmatprep.subr.mxu0 0.0
  %1216 = vmatpush1.msra.mxu0 0.0
  %1217 = vmatprep.subr.mxu0 0.0
  %1218 = vmatpush1.msra.mxu0 0.0
  %1219 = vmatprep.subr.mxu0 0.0
  %1220 = vmatpush1.msra.mxu0 0.0
  %1221 = vmatprep.subr.mxu0 0.0
  %1222 = vmatpush1.msra.mxu0 0.0
  %1223 = vmatprep.subr.mxu0 0.0
  %1224 = vmatpush1.msra.mxu0 0.0
  %1225 = vmatprep.subr.mxu0 0.0
  %1226 = vmatpush1.msra.mxu0 0.0
  %1227 = vmatprep.subr.mxu0 0.0
  %1228 = vmatpush1.msra.mxu0 0.0
  %1229 = vmatprep.subr.mxu0 0.0
  %1230 = vmatpush1.msra.mxu0 0.0
  %1231 = vmatprep.subr.mxu0 0.0
  %1232 = vmatpush1.msra.mxu0 0.0
  %1233 = vmatprep.subr.mxu0 0.0
  %1234 = vmatpush1.msra.mxu0 0.0
  %1235 = vmatprep.subr.mxu0 0.0
  %1236 = vmatpush1.msra.mxu0 0.0
  %1237 = vmatprep.subr.mxu0 0.0
  %1238 = vmatpush1.msra.mxu0 0.0
  %1239 = vmatprep.subr.mxu0 0.0
  %1240 = vmatpush1.msra.mxu0 0.0
  %1241 = vmatprep.subr.mxu0 0.0
  %1242 = vmatpush1.msra.mxu0 0.0
  %1243 = vmatprep.subr.mxu0 0.0
  %1244 = vmatpush1.msra.mxu0 0.0
  %1245 = vmatprep.subr.mxu0 %v1142
  %1246 = vmatpush1.msra.mxu0 %v1140
  %1247 = vmatprep.subr.mxu0 0.0
  %1248 = vmatpush2.msra.mxu0 0.0
  %1249 = vmatprep.subr.mxu0 0.0
  %1250 = vmatpush2.msra.mxu0 0.0
  %1251 = vmatprep.subr.mxu0 0.0
  %1252 = vmatpush2.msra.mxu0 0.0
  %1253 = vmatprep.subr.mxu0 0.0
  %1254 = vmatpush2.msra.mxu0 0.0
  %1255 = vmatprep.subr.mxu0 0.0
  %1256 = vmatpush2.msra.mxu0 0.0
  %1257 = vmatprep.subr.mxu0 0.0
  %1258 = vmatpush2.msra.mxu0 0.0
  %1259 = vmatprep.subr.mxu0 0.0
  %1260 = vmatpush2.msra.mxu0 0.0
  %1261 = vmatprep.subr.mxu0 0.0
  %1262 = vmatpush2.msra.mxu0 0.0
  %1263 = vmatprep.subr.mxu0 0.0
  %1264 = vmatpush2.msra.mxu0 0.0
  %1265 = vmatprep.subr.mxu0 0.0
  %1266 = vmatpush2.msra.mxu0 0.0
  %1267 = vmatprep.subr.mxu0 0.0
  %1268 = vmatpush2.msra.mxu0 0.0
  %1269 = vmatprep.subr.mxu0 0.0
  %1270 = vmatpush2.msra.mxu0 0.0
  %1271 = vmatprep.subr.mxu0 0.0
  %1272 = vmatpush2.msra.mxu0 0.0
  %1273 = vmatprep.subr.mxu0 0.0
  %1274 = vmatpush2.msra.mxu0 0.0
  %1275 = vmatprep.subr.mxu0 0.0
  %1276 = vmatpush2.msra.mxu0 0.0
  %1277 = vmatprep.subr.mxu0 0.0
  %1278 = vmatpush2.msra.mxu0 0.0
  %1279 = vmatprep.mubr.f32.mxu0 0.0
  %1280 = vmatmul.mubr.f32.gmra.mxu0 %v1134
  %v1281 = vpop.f32.mrf.mxu0
  %v1282 = vadd.f32 0.0, %v1281
  %v1283 = vpop.f32.mrf.mxu0
  %v1284 = vadd.f32 0.0, %v1283
  %1285 = vdwg.mxu0
  %v1286 = vadd.f32 %v1068, %v1211
  %v1287 = vadd.f32 %v1069, %v1213
  %v1288 = vadd.f32 %v1070, %v1282
  %v1289 = vadd.f32 %v1071, %v1284
  %v1290 = vld [vmem:[%s0 + $0x4] sm:$0xff]
  %v1291 = vld [vmem:[%s0 + $0xc] sm:$0xff]
  %v1292 = vld [vmem:[%s0 + $0x14] sm:$0xf]
  %v1293 = vlaneseq
  %v1294 = vshrl.u32 %v1293, 7
  %v1295 = vsub.s32 6, %v1294
  %v1296 = vrot.slane %v29, %v1295
  %v1297 = vlaneseq
  %v1298 = vshrl.u32 %v1297, 7
  %v1299 = vsub.s32 6, %v1298
  %v1300 = vrot.slane %v30, %v1299
  %v1301 = vlaneseq
  %v1302 = vshrl.u32 %v1301, 7
  %v1303 = vsub.s32 6, %v1302
  %v1304 = vrot.slane %v31, %v1303
  %v1305 = vlaneseq
  %v1306 = vshrl.u32 %v1305, 7
  %v1307 = vsub.s32 6, %v1306
  %v1308 = vrot.slane %v32, %v1307
  %v1313 = vcombine.low %v1296, %v1300
  %v1314 = vcombine.low %v1304, %v1308
  %1315 = vrot.lane.b32.xlu0 %v1313, 15
  %v1316 = vpop.permute.xlu0 %1315
  %1317 = vrot.lane.b32.xlu0 %v1314, 15
  %v1318 = vpop.permute.xlu0 %1317
  %v1319 = vrot.slane %v1316, 4
  %v1320 = vrot.slane %v1318, 4
  %v1321 = vsel %vm525, %v1319, %v1316
  %v1322 = vsel %vm70, %v1319, %v1320
  %v1323 = vsel %vm525, %v1322, %v1318
  %v1327 = vmul.f32 %v1290, %v1321
  %v1328 = vmul.f32 %v1291, %v1323
  %v1329 = vmul.f32 %v1292, %v1320
  %s1330 = scalar_lea.vmem %s1, 48
  %v1331 = vld [vmem:[%s1330] sm:$0xff]
  %v1335 = vcombine.high %v1327, %v1327
  %v1336 = vcombine.high %v1328, %v1328
  %1337 = vrot.lane.b32.xlu0 %v1327, 113
  %v1338 = vpop.permute.xlu0 %1337
  %1339 = vrot.lane.b32.xlu0 %v1335, 113
  %v1340 = vpop.permute.xlu0 %1339
  %1341 = vrot.lane.b32.xlu0 %v1328, 113
  %v1342 = vpop.permute.xlu0 %1341
  %1343 = vrot.lane.b32.xlu0 %v1336, 113
  %v1344 = vpop.permute.xlu0 %1343
  %1345 = vrot.lane.b32.xlu0 %v1329, 113
  %v1346 = vpop.permute.xlu0 %1345
  %v1347 = vsel %vm498, %v1338, %v1340
  %v1348 = vsel %vm498, %v1340, %v1342
  %v1349 = vsel %vm498, %v1342, %v1344
  %v1350 = vsel %vm498, %v1344, %v1346
  %v1352 = vsel %vm140, %v1331, 0
  %v1354 = vsel %vm70, %v1347, 0
  %v1356 = vsel %vm70, %v1348, 0
  %v1358 = vsel %vm70, %v1349, 0
  %v1360 = vsel %vm70, %v1350, 0
  %1362 = vmatprep.subr.mxu0 0.0
  %1363 = vmatpush1.msra.mxu0 0.0
  %1364 = vmatprep.subr.mxu0 0.0
  %1365 = vmatpush1.msra.mxu0 0.0
  %1366 = vmatprep.subr.mxu0 0.0
  %1367 = vmatpush1.msra.mxu0 0.0
  %1368 = vmatprep.subr.mxu0 0.0
  %1369 = vmatpush1.msra.mxu0 0.0
  %1370 = vmatprep.subr.mxu0 0.0
  %1371 = vmatpush1.msra.mxu0 0.0
  %1372 = vmatprep.subr.mxu0 0.0
  %1373 = vmatpush1.msra.mxu0 0.0
  %1374 = vmatprep.subr.mxu0 0.0
  %1375 = vmatpush1.msra.mxu0 0.0
  %1376 = vmatprep.subr.mxu0 0.0
  %1377 = vmatpush1.msra.mxu0 0.0
  %1378 = vmatprep.subr.mxu0 0.0
  %1379 = vmatpush1.msra.mxu0 0.0
  %1380 = vmatprep.subr.mxu0 0.0
  %1381 = vmatpush1.msra.mxu0 0.0
  %1382 = vmatprep.subr.mxu0 0.0
  %1383 = vmatpush1.msra.mxu0 0.0
  %1384 = vmatprep.subr.mxu0 0.0
  %1385 = vmatpush1.msra.mxu0 0.0
  %1386 = vmatprep.subr.mxu0 0.0
  %1387 = vmatpush1.msra.mxu0 0.0
  %1388 = vmatprep.subr.mxu0 0.0
  %1389 = vmatpush1.msra.mxu0 0.0
  %1390 = vmatprep.subr.mxu0 0.0
  %1391 = vmatpush1.msra.mxu0 0.0
  %1392 = vmatprep.subr.mxu0 %v1356
  %1393 = vmatpush1.msra.mxu0 %v1354
  %1394 = vmatprep.subr.mxu0 0.0
  %1395 = vmatpush2.msra.mxu0 0.0
  %1396 = vmatprep.subr.mxu0 0.0
  %1397 = vmatpush2.msra.mxu0 0.0
  %1398 = vmatprep.subr.mxu0 0.0
  %1399 = vmatpush2.msra.mxu0 0.0
  %1400 = vmatprep.subr.mxu0 0.0
  %1401 = vmatpush2.msra.mxu0 0.0
  %1402 = vmatprep.subr.mxu0 0.0
  %1403 = vmatpush2.msra.mxu0 0.0
  %1404 = vmatprep.subr.mxu0 0.0
  %1405 = vmatpush2.msra.mxu0 0.0
  %1406 = vmatprep.subr.mxu0 0.0
  %1407 = vmatpush2.msra.mxu0 0.0
  %1408 = vmatprep.subr.mxu0 0.0
  %1409 = vmatpush2.msra.mxu0 0.0
  %1410 = vmatprep.subr.mxu0 0.0
  %1411 = vmatpush2.msra.mxu0 0.0
  %1412 = vmatprep.subr.mxu0 0.0
  %1413 = vmatpush2.msra.mxu0 0.0
  %1414 = vmatprep.subr.mxu0 0.0
  %1415 = vmatpush2.msra.mxu0 0.0
  %1416 = vmatprep.subr.mxu0 0.0
  %1417 = vmatpush2.msra.mxu0 0.0
  %1418 = vmatprep.subr.mxu0 0.0
  %1419 = vmatpush2.msra.mxu0 0.0
  %1420 = vmatprep.subr.mxu0 0.0
  %1421 = vmatpush2.msra.mxu0 0.0
  %1422 = vmatprep.subr.mxu0 0.0
  %1423 = vmatpush2.msra.mxu0 0.0
  %1424 = vmatprep.subr.mxu0 0.0
  %1425 = vmatpush2.msra.mxu0 0.0
  %1426 = vmatprep.mubr.f32.mxu0 0.0
  %1427 = vmatmul.mubr.f32.gmra.mxu0 %v1352
  %v1428 = vpop.f32.mrf.mxu0
  %v1429 = vadd.f32 0.0, %v1428
  %v1430 = vpop.f32.mrf.mxu0
  %v1431 = vadd.f32 0.0, %v1430
  %1432 = vdwg.mxu0
  %1433 = vmatprep.subr.mxu0 0.0
  %1434 = vmatpush1.msra.mxu0 0.0
  %1435 = vmatprep.subr.mxu0 0.0
  %1436 = vmatpush1.msra.mxu0 0.0
  %1437 = vmatprep.subr.mxu0 0.0
  %1438 = vmatpush1.msra.mxu0 0.0
  %1439 = vmatprep.subr.mxu0 0.0
  %1440 = vmatpush1.msra.mxu0 0.0
  %1441 = vmatprep.subr.mxu0 0.0
  %1442 = vmatpush1.msra.mxu0 0.0
  %1443 = vmatprep.subr.mxu0 0.0
  %1444 = vmatpush1.msra.mxu0 0.0
  %1445 = vmatprep.subr.mxu0 0.0
  %1446 = vmatpush1.msra.mxu0 0.0
  %1447 = vmatprep.subr.mxu0 0.0
  %1448 = vmatpush1.msra.mxu0 0.0
  %1449 = vmatprep.subr.mxu0 0.0
  %1450 = vmatpush1.msra.mxu0 0.0
  %1451 = vmatprep.subr.mxu0 0.0
  %1452 = vmatpush1.msra.mxu0 0.0
  %1453 = vmatprep.subr.mxu0 0.0
  %1454 = vmatpush1.msra.mxu0 0.0
  %1455 = vmatprep.subr.mxu0 0.0
  %1456 = vmatpush1.msra.mxu0 0.0
  %1457 = vmatprep.subr.mxu0 0.0
  %1458 = vmatpush1.msra.mxu0 0.0
  %1459 = vmatprep.subr.mxu0 0.0
  %1460 = vmatpush1.msra.mxu0 0.0
  %1461 = vmatprep.subr.mxu0 0.0
  %1462 = vmatpush1.msra.mxu0 0.0
  %1463 = vmatprep.subr.mxu0 %v1360
  %1464 = vmatpush1.msra.mxu0 %v1358
  %1465 = vmatprep.subr.mxu0 0.0
  %1466 = vmatpush2.msra.mxu0 0.0
  %1467 = vmatprep.subr.mxu0 0.0
  %1468 = vmatpush2.msra.mxu0 0.0
  %1469 = vmatprep.subr.mxu0 0.0
  %1470 = vmatpush2.msra.mxu0 0.0
  %1471 = vmatprep.subr.mxu0 0.0
  %1472 = vmatpush2.msra.mxu0 0.0
  %1473 = vmatprep.subr.mxu0 0.0
  %1474 = vmatpush2.msra.mxu0 0.0
  %1475 = vmatprep.subr.mxu0 0.0
  %1476 = vmatpush2.msra.mxu0 0.0
  %1477 = vmatprep.subr.mxu0 0.0
  %1478 = vmatpush2.msra.mxu0 0.0
  %1479 = vmatprep.subr.mxu0 0.0
  %1480 = vmatpush2.msra.mxu0 0.0
  %1481 = vmatprep.subr.mxu0 0.0
  %1482 = vmatpush2.msra.mxu0 0.0
  %1483 = vmatprep.subr.mxu0 0.0
  %1484 = vmatpush2.msra.mxu0 0.0
  %1485 = vmatprep.subr.mxu0 0.0
  %1486 = vmatpush2.msra.mxu0 0.0
  %1487 = vmatprep.subr.mxu0 0.0
  %1488 = vmatpush2.msra.mxu0 0.0
  %1489 = vmatprep.subr.mxu0 0.0
  %1490 = vmatpush2.msra.mxu0 0.0
  %1491 = vmatprep.subr.mxu0 0.0
  %1492 = vmatpush2.msra.mxu0 0.0
  %1493 = vmatprep.subr.mxu0 0.0
  %1494 = vmatpush2.msra.mxu0 0.0
  %1495 = vmatprep.subr.mxu0 0.0
  %1496 = vmatpush2.msra.mxu0 0.0
  %1497 = vmatprep.mubr.f32.mxu0 0.0
  %1498 = vmatmul.mubr.f32.gmra.mxu0 %v1352
  %v1499 = vpop.f32.mrf.mxu0
  %v1500 = vadd.f32 0.0, %v1499
  %v1501 = vpop.f32.mrf.mxu0
  %v1502 = vadd.f32 0.0, %v1501
  %1503 = vdwg.mxu0
  %v1504 = vadd.f32 %v1286, %v1429
  %v1505 = vadd.f32 %v1287, %v1431
  %v1506 = vadd.f32 %v1288, %v1500
  %v1507 = vadd.f32 %v1289, %v1502
  %v1508 = vld [vmem:[%s0 + $0x4] sm:$0xff]
  %v1509 = vld [vmem:[%s0 + $0xc] sm:$0xff]
  %v1510 = vld [vmem:[%s0 + $0x14] sm:$0xf]
  %v1511 = vlaneseq
  %v1512 = vshrl.u32 %v1511, 7
  %v1513 = vsub.s32 7, %v1512
  %v1514 = vrot.slane %v29, %v1513
  %v1515 = vlaneseq
  %v1516 = vshrl.u32 %v1515, 7
  %v1517 = vsub.s32 7, %v1516
  %v1518 = vrot.slane %v30, %v1517
  %v1519 = vlaneseq
  %v1520 = vshrl.u32 %v1519, 7
  %v1521 = vsub.s32 7, %v1520
  %v1522 = vrot.slane %v31, %v1521
  %v1523 = vlaneseq
  %v1524 = vshrl.u32 %v1523, 7
  %v1525 = vsub.s32 7, %v1524
  %v1526 = vrot.slane %v32, %v1525
  %v1531 = vcombine.low %v1514, %v1518
  %v1532 = vcombine.low %v1522, %v1526
  %1533 = vrot.lane.b32.xlu0 %v1531, 16
  %v1534 = vpop.permute.xlu0 %1533
  %1535 = vrot.lane.b32.xlu0 %v1532, 16
  %v1536 = vpop.permute.xlu0 %1535
  %v1537 = vrot.slane %v1534, 4
  %v1538 = vrot.slane %v1536, 4
  %v1539 = vsel %vm135, %v1537, %v1534
  %v1540 = vsel %vm70, %v1537, %v1538
  %v1541 = vsel %vm135, %v1540, %v1536
  %v1545 = vmul.f32 %v1508, %v1539
  %v1546 = vmul.f32 %v1509, %v1541
  %v1547 = vmul.f32 %v1510, %v1538
  %s1548 = scalar_lea.vmem %s1, 56
  %v1549 = vld [vmem:[%s1548] sm:$0xff]
  %v1553 = vcombine.high %v1545, %v1545
  %v1554 = vcombine.high %v1546, %v1546
  %1555 = vrot.lane.b32.xlu0 %v1545, 112
  %v1556 = vpop.permute.xlu0 %1555
  %1557 = vrot.lane.b32.xlu0 %v1553, 112
  %v1558 = vpop.permute.xlu0 %1557
  %1559 = vrot.lane.b32.xlu0 %v1546, 112
  %v1560 = vpop.permute.xlu0 %1559
  %1561 = vrot.lane.b32.xlu0 %v1554, 112
  %v1562 = vpop.permute.xlu0 %1561
  %1563 = vrot.lane.b32.xlu0 %v1547, 112
  %v1564 = vpop.permute.xlu0 %1563
  %v1565 = vsel %vm108, %v1556, %v1558
  %v1566 = vsel %vm108, %v1558, %v1560
  %v1567 = vsel %vm108, %v1560, %v1562
  %v1568 = vsel %vm108, %v1562, %v1564
  %v1570 = vsel %vm140, %v1549, 0
  %v1572 = vsel %vm70, %v1565, 0
  %v1574 = vsel %vm70, %v1566, 0
  %v1576 = vsel %vm70, %v1567, 0
  %v1578 = vsel %vm70, %v1568, 0
  %1580 = vmatprep.subr.mxu0 0.0
  %1581 = vmatpush1.msra.mxu0 0.0
  %1582 = vmatprep.subr.mxu0 0.0
  %1583 = vmatpush1.msra.mxu0 0.0
  %1584 = vmatprep.subr.mxu0 0.0
  %1585 = vmatpush1.msra.mxu0 0.0
  %1586 = vmatprep.subr.mxu0 0.0
  %1587 = vmatpush1.msra.mxu0 0.0
  %1588 = vmatprep.subr.mxu0 0.0
  %1589 = vmatpush1.msra.mxu0 0.0
  %1590 = vmatprep.subr.mxu0 0.0
  %1591 = vmatpush1.msra.mxu0 0.0
  %1592 = vmatprep.subr.mxu0 0.0
  %1593 = vmatpush1.msra.mxu0 0.0
  %1594 = vmatprep.subr.mxu0 0.0
  %1595 = vmatpush1.msra.mxu0 0.0
  %1596 = vmatprep.subr.mxu0 0.0
  %1597 = vmatpush1.msra.mxu0 0.0
  %1598 = vmatprep.subr.mxu0 0.0
  %1599 = vmatpush1.msra.mxu0 0.0
  %1600 = vmatprep.subr.mxu0 0.0
  %1601 = vmatpush1.msra.mxu0 0.0
  %1602 = vmatprep.subr.mxu0 0.0
  %1603 = vmatpush1.msra.mxu0 0.0
  %1604 = vmatprep.subr.mxu0 0.0
  %1605 = vmatpush1.msra.mxu0 0.0
  %1606 = vmatprep.subr.mxu0 0.0
  %1607 = vmatpush1.msra.mxu0 0.0
  %1608 = vmatprep.subr.mxu0 0.0
  %1609 = vmatpush1.msra.mxu0 0.0
  %1610 = vmatprep.subr.mxu0 %v1574
  %1611 = vmatpush1.msra.mxu0 %v1572
  %1612 = vmatprep.subr.mxu0 0.0
  %1613 = vmatpush2.msra.mxu0 0.0
  %1614 = vmatprep.subr.mxu0 0.0
  %1615 = vmatpush2.msra.mxu0 0.0
  %1616 = vmatprep.subr.mxu0 0.0
  %1617 = vmatpush2.msra.mxu0 0.0
  %1618 = vmatprep.subr.mxu0 0.0
  %1619 = vmatpush2.msra.mxu0 0.0
  %1620 = vmatprep.subr.mxu0 0.0
  %1621 = vmatpush2.msra.mxu0 0.0
  %1622 = vmatprep.subr.mxu0 0.0
  %1623 = vmatpush2.msra.mxu0 0.0
  %1624 = vmatprep.subr.mxu0 0.0
  %1625 = vmatpush2.msra.mxu0 0.0
  %1626 = vmatprep.subr.mxu0 0.0
  %1627 = vmatpush2.msra.mxu0 0.0
  %1628 = vmatprep.subr.mxu0 0.0
  %1629 = vmatpush2.msra.mxu0 0.0
  %1630 = vmatprep.subr.mxu0 0.0
  %1631 = vmatpush2.msra.mxu0 0.0
  %1632 = vmatprep.subr.mxu0 0.0
  %1633 = vmatpush2.msra.mxu0 0.0
  %1634 = vmatprep.subr.mxu0 0.0
  %1635 = vmatpush2.msra.mxu0 0.0
  %1636 = vmatprep.subr.mxu0 0.0
  %1637 = vmatpush2.msra.mxu0 0.0
  %1638 = vmatprep.subr.mxu0 0.0
  %1639 = vmatpush2.msra.mxu0 0.0
  %1640 = vmatprep.subr.mxu0 0.0
  %1641 = vmatpush2.msra.mxu0 0.0
  %1642 = vmatprep.subr.mxu0 0.0
  %1643 = vmatpush2.msra.mxu0 0.0
  %1644 = vmatprep.mubr.f32.mxu0 0.0
  %1645 = vmatmul.mubr.f32.gmra.mxu0 %v1570
  %v1646 = vpop.f32.mrf.mxu0
  %v1647 = vadd.f32 0.0, %v1646
  %v1648 = vpop.f32.mrf.mxu0
  %v1649 = vadd.f32 0.0, %v1648
  %1650 = vdwg.mxu0
  %1651 = vmatprep.subr.mxu0 0.0
  %1652 = vmatpush1.msra.mxu0 0.0
  %1653 = vmatprep.subr.mxu0 0.0
  %1654 = vmatpush1.msra.mxu0 0.0
  %1655 = vmatprep.subr.mxu0 0.0
  %1656 = vmatpush1.msra.mxu0 0.0
  %1657 = vmatprep.subr.mxu0 0.0
  %1658 = vmatpush1.msra.mxu0 0.0
  %1659 = vmatprep.subr.mxu0 0.0
  %1660 = vmatpush1.msra.mxu0 0.0
  %1661 = vmatprep.subr.mxu0 0.0
  %1662 = vmatpush1.msra.mxu0 0.0
  %1663 = vmatprep.subr.mxu0 0.0
  %1664 = vmatpush1.msra.mxu0 0.0
  %1665 = vmatprep.subr.mxu0 0.0
  %1666 = vmatpush1.msra.mxu0 0.0
  %1667 = vmatprep.subr.mxu0 0.0
  %1668 = vmatpush1.msra.mxu0 0.0
  %1669 = vmatprep.subr.mxu0 0.0
  %1670 = vmatpush1.msra.mxu0 0.0
  %1671 = vmatprep.subr.mxu0 0.0
  %1672 = vmatpush1.msra.mxu0 0.0
  %1673 = vmatprep.subr.mxu0 0.0
  %1674 = vmatpush1.msra.mxu0 0.0
  %1675 = vmatprep.subr.mxu0 0.0
  %1676 = vmatpush1.msra.mxu0 0.0
  %1677 = vmatprep.subr.mxu0 0.0
  %1678 = vmatpush1.msra.mxu0 0.0
  %1679 = vmatprep.subr.mxu0 0.0
  %1680 = vmatpush1.msra.mxu0 0.0
  %1681 = vmatprep.subr.mxu0 %v1578
  %1682 = vmatpush1.msra.mxu0 %v1576
  %1683 = vmatprep.subr.mxu0 0.0
  %1684 = vmatpush2.msra.mxu0 0.0
  %1685 = vmatprep.subr.mxu0 0.0
  %1686 = vmatpush2.msra.mxu0 0.0
  %1687 = vmatprep.subr.mxu0 0.0
  %1688 = vmatpush2.msra.mxu0 0.0
  %1689 = vmatprep.subr.mxu0 0.0
  %1690 = vmatpush2.msra.mxu0 0.0
  %1691 = vmatprep.subr.mxu0 0.0
  %1692 = vmatpush2.msra.mxu0 0.0
  %1693 = vmatprep.subr.mxu0 0.0
  %1694 = vmatpush2.msra.mxu0 0.0
  %1695 = vmatprep.subr.mxu0 0.0
  %1696 = vmatpush2.msra.mxu0 0.0
  %1697 = vmatprep.subr.mxu0 0.0
  %1698 = vmatpush2.msra.mxu0 0.0
  %1699 = vmatprep.subr.mxu0 0.0
  %1700 = vmatpush2.msra.mxu0 0.0
  %1701 = vmatprep.subr.mxu0 0.0
  %1702 = vmatpush2.msra.mxu0 0.0
  %1703 = vmatprep.subr.mxu0 0.0
  %1704 = vmatpush2.msra.mxu0 0.0
  %1705 = vmatprep.subr.mxu0 0.0
  %1706 = vmatpush2.msra.mxu0 0.0
  %1707 = vmatprep.subr.mxu0 0.0
  %1708 = vmatpush2.msra.mxu0 0.0
  %1709 = vmatprep.subr.mxu0 0.0
  %1710 = vmatpush2.msra.mxu0 0.0
  %1711 = vmatprep.subr.mxu0 0.0
  %1712 = vmatpush2.msra.mxu0 0.0
  %1713 = vmatprep.subr.mxu0 0.0
  %1714 = vmatpush2.msra.mxu0 0.0
  %1715 = vmatprep.mubr.f32.mxu0 0.0
  %1716 = vmatmul.mubr.f32.gmra.mxu0 %v1570
  %v1717 = vpop.f32.mrf.mxu0
  %v1718 = vadd.f32 0.0, %v1717
  %v1719 = vpop.f32.mrf.mxu0
  %v1720 = vadd.f32 0.0, %v1719
  %1721 = vdwg.mxu0
  %v1722 = vadd.f32 %v1504, %v1647
  %v1723 = vadd.f32 %v1505, %v1649
  %v1724 = vadd.f32 %v1506, %v1718
  %v1725 = vadd.f32 %v1507, %v1720
  %v1726 = vld [vmem:[%s0 + $0x4] sm:$0xff]
  %v1727 = vld [vmem:[%s0 + $0xc] sm:$0xff]
  %v1728 = vld [vmem:[%s0 + $0x14] sm:$0xf]
  %v1729 = vlaneseq
  %v1730 = vshrl.u32 %v1729, 7
  %v1731 = vsub.s32 0, %v1730
  %v1732 = vrot.slane %v33, %v1731
  %v1733 = vlaneseq
  %v1734 = vshrl.u32 %v1733, 7
  %v1735 = vsub.s32 0, %v1734
  %v1736 = vrot.slane %v34, %v1735
  %v1737 = vlaneseq
  %v1738 = vshrl.u32 %v1737, 7
  %v1739 = vsub.s32 0, %v1738
  %v1740 = vrot.slane %v35, %v1739
  %v1741 = vlaneseq
  %v1742 = vshrl.u32 %v1741, 7
  %v1743 = vsub.s32 0, %v1742
  %v1744 = vrot.slane %v36, %v1743
  %v1749 = vcombine.low %v1732, %v1736
  %v1750 = vcombine.low %v1740, %v1744
  %1751 = vrot.lane.b32.xlu0 %v1749, 17
  %v1752 = vpop.permute.xlu0 %1751
  %1753 = vrot.lane.b32.xlu0 %v1750, 17
  %v1754 = vpop.permute.xlu0 %1753
  %v1755 = vrot.slane %v1752, 4
  %v1756 = vrot.slane %v1754, 4
  %v1757 = vsel %vm309, %v1755, %v1752
  %v1758 = vsel %vm70, %v1755, %v1756
  %v1759 = vsel %vm309, %v1758, %v1754
  %v1763 = vmul.f32 %v1726, %v1757
  %v1764 = vmul.f32 %v1727, %v1759
  %v1765 = vmul.f32 %v1728, %v1756
  %s1766 = scalar_lea.vmem %s1, 64
  %v1767 = vld [vmem:[%s1766] sm:$0xff]
  %v1771 = vcombine.high %v1763, %v1763
  %v1772 = vcombine.high %v1764, %v1764
  %1773 = vrot.lane.b32.xlu0 %v1763, 111
  %v1774 = vpop.permute.xlu0 %1773
  %1775 = vrot.lane.b32.xlu0 %v1771, 111
  %v1776 = vpop.permute.xlu0 %1775
  %1777 = vrot.lane.b32.xlu0 %v1764, 111
  %v1778 = vpop.permute.xlu0 %1777
  %1779 = vrot.lane.b32.xlu0 %v1772, 111
  %v1780 = vpop.permute.xlu0 %1779
  %1781 = vrot.lane.b32.xlu0 %v1765, 111
  %v1782 = vpop.permute.xlu0 %1781
  %v1783 = vsel %vm68, %v1774, %v1776
  %v1784 = vsel %vm68, %v1776, %v1778
  %v1785 = vsel %vm68, %v1778, %v1780
  %v1786 = vsel %vm68, %v1780, %v1782
  %v1788 = vsel %vm140, %v1767, 0
  %v1790 = vsel %vm70, %v1783, 0
  %v1792 = vsel %vm70, %v1784, 0
  %v1794 = vsel %vm70, %v1785, 0
  %v1796 = vsel %vm70, %v1786, 0
  %1798 = vmatprep.subr.mxu0 0.0
  %1799 = vmatpush1.msra.mxu0 0.0
  %1800 = vmatprep.subr.mxu0 0.0
  %1801 = vmatpush1.msra.mxu0 0.0
  %1802 = vmatprep.subr.mxu0 0.0
  %1803 = vmatpush1.msra.mxu0 0.0
  %1804 = vmatprep.subr.mxu0 0.0
  %1805 = vmatpush1.msra.mxu0 0.0
  %1806 = vmatprep.subr.mxu0 0.0
  %1807 = vmatpush1.msra.mxu0 0.0
  %1808 = vmatprep.subr.mxu0 0.0
  %1809 = vmatpush1.msra.mxu0 0.0
  %1810 = vmatprep.subr.mxu0 0.0
  %1811 = vmatpush1.msra.mxu0 0.0
  %1812 = vmatprep.subr.mxu0 0.0
  %1813 = vmatpush1.msra.mxu0 0.0
  %1814 = vmatprep.subr.mxu0 0.0
  %1815 = vmatpush1.msra.mxu0 0.0
  %1816 = vmatprep.subr.mxu0 0.0
  %1817 = vmatpush1.msra.mxu0 0.0
  %1818 = vmatprep.subr.mxu0 0.0
  %1819 = vmatpush1.msra.mxu0 0.0
  %1820 = vmatprep.subr.mxu0 0.0
  %1821 = vmatpush1.msra.mxu0 0.0
  %1822 = vmatprep.subr.mxu0 0.0
  %1823 = vmatpush1.msra.mxu0 0.0
  %1824 = vmatprep.subr.mxu0 0.0
  %1825 = vmatpush1.msra.mxu0 0.0
  %1826 = vmatprep.subr.mxu0 0.0
  %1827 = vmatpush1.msra.mxu0 0.0
  %1828 = vmatprep.subr.mxu0 %v1792
  %1829 = vmatpush1.msra.mxu0 %v1790
  %1830 = vmatprep.subr.mxu0 0.0
  %1831 = vmatpush2.msra.mxu0 0.0
  %1832 = vmatprep.subr.mxu0 0.0
  %1833 = vmatpush2.msra.mxu0 0.0
  %1834 = vmatprep.subr.mxu0 0.0
  %1835 = vmatpush2.msra.mxu0 0.0
  %1836 = vmatprep.subr.mxu0 0.0
  %1837 = vmatpush2.msra.mxu0 0.0
  %1838 = vmatprep.subr.mxu0 0.0
  %1839 = vmatpush2.msra.mxu0 0.0
  %1840 = vmatprep.subr.mxu0 0.0
  %1841 = vmatpush2.msra.mxu0 0.0
  %1842 = vmatprep.subr.mxu0 0.0
  %1843 = vmatpush2.msra.mxu0 0.0
  %1844 = vmatprep.subr.mxu0 0.0
  %1845 = vmatpush2.msra.mxu0 0.0
  %1846 = vmatprep.subr.mxu0 0.0
  %1847 = vmatpush2.msra.mxu0 0.0
  %1848 = vmatprep.subr.mxu0 0.0
  %1849 = vmatpush2.msra.mxu0 0.0
  %1850 = vmatprep.subr.mxu0 0.0
  %1851 = vmatpush2.msra.mxu0 0.0
  %1852 = vmatprep.subr.mxu0 0.0
  %1853 = vmatpush2.msra.mxu0 0.0
  %1854 = vmatprep.subr.mxu0 0.0
  %1855 = vmatpush2.msra.mxu0 0.0
  %1856 = vmatprep.subr.mxu0 0.0
  %1857 = vmatpush2.msra.mxu0 0.0
  %1858 = vmatprep.subr.mxu0 0.0
  %1859 = vmatpush2.msra.mxu0 0.0
  %1860 = vmatprep.subr.mxu0 0.0
  %1861 = vmatpush2.msra.mxu0 0.0
  %1862 = vmatprep.mubr.f32.mxu0 0.0
  %1863 = vmatmul.mubr.f32.gmra.mxu0 %v1788
  %v1864 = vpop.f32.mrf.mxu0
  %v1865 = vadd.f32 0.0, %v1864
  %v1866 = vpop.f32.mrf.mxu0
  %v1867 = vadd.f32 0.0, %v1866
  %1868 = vdwg.mxu0
  %1869 = vmatprep.subr.mxu0 0.0
  %1870 = vmatpush1.msra.mxu0 0.0
  %1871 = vmatprep.subr.mxu0 0.0
  %1872 = vmatpush1.msra.mxu0 0.0
  %1873 = vmatprep.subr.mxu0 0.0
  %1874 = vmatpush1.msra.mxu0 0.0
  %1875 = vmatprep.subr.mxu0 0.0
  %1876 = vmatpush1.msra.mxu0 0.0
  %1877 = vmatprep.subr.mxu0 0.0
  %1878 = vmatpush1.msra.mxu0 0.0
  %1879 = vmatprep.subr.mxu0 0.0
  %1880 = vmatpush1.msra.mxu0 0.0
  %1881 = vmatprep.subr.mxu0 0.0
  %1882 = vmatpush1.msra.mxu0 0.0
  %1883 = vmatprep.subr.mxu0 0.0
  %1884 = vmatpush1.msra.mxu0 0.0
  %1885 = vmatprep.subr.mxu0 0.0
  %1886 = vmatpush1.msra.mxu0 0.0
  %1887 = vmatprep.subr.mxu0 0.0
  %1888 = vmatpush1.msra.mxu0 0.0
  %1889 = vmatprep.subr.mxu0 0.0
  %1890 = vmatpush1.msra.mxu0 0.0
  %1891 = vmatprep.subr.mxu0 0.0
  %1892 = vmatpush1.msra.mxu0 0.0
  %1893 = vmatprep.subr.mxu0 0.0
  %1894 = vmatpush1.msra.mxu0 0.0
  %1895 = vmatprep.subr.mxu0 0.0
  %1896 = vmatpush1.msra.mxu0 0.0
  %1897 = vmatprep.subr.mxu0 0.0
  %1898 = vmatpush1.msra.mxu0 0.0
  %1899 = vmatprep.subr.mxu0 %v1796
  %1900 = vmatpush1.msra.mxu0 %v1794
  %1901 = vmatprep.subr.mxu0 0.0
  %1902 = vmatpush2.msra.mxu0 0.0
  %1903 = vmatprep.subr.mxu0 0.0
  %1904 = vmatpush2.msra.mxu0 0.0
  %1905 = vmatprep.subr.mxu0 0.0
  %1906 = vmatpush2.msra.mxu0 0.0
  %1907 = vmatprep.subr.mxu0 0.0
  %1908 = vmatpush2.msra.mxu0 0.0
  %1909 = vmatprep.subr.mxu0 0.0
  %1910 = vmatpush2.msra.mxu0 0.0
  %1911 = vmatprep.subr.mxu0 0.0
  %1912 = vmatpush2.msra.mxu0 0.0
  %1913 = vmatprep.subr.mxu0 0.0
  %1914 = vmatpush2.msra.mxu0 0.0
  %1915 = vmatprep.subr.mxu0 0.0
  %1916 = vmatpush2.msra.mxu0 0.0
  %1917 = vmatprep.subr.mxu0 0.0
  %1918 = vmatpush2.msra.mxu0 0.0
  %1919 = vmatprep.subr.mxu0 0.0
  %1920 = vmatpush2.msra.mxu0 0.0
  %1921 = vmatprep.subr.mxu0 0.0
  %1922 = vmatpush2.msra.mxu0 0.0
  %1923 = vmatprep.subr.mxu0 0.0
  %1924 = vmatpush2.msra.mxu0 0.0
  %1925 = vmatprep.subr.mxu0 0.0
  %1926 = vmatpush2.msra.mxu0 0.0
  %1927 = vmatprep.subr.mxu0 0.0
  %1928 = vmatpush2.msra.mxu0 0.0
  %1929 = vmatprep.subr.mxu0 0.0
  %1930 = vmatpush2.msra.mxu0 0.0
  %1931 = vmatprep.subr.mxu0 0.0
  %1932 = vmatpush2.msra.mxu0 0.0
  %1933 = vmatprep.mubr.f32.mxu0 0.0
  %1934 = vmatmul.mubr.f32.gmra.mxu0 %v1788
  %v1935 = vpop.f32.mrf.mxu0
  %v1936 = vadd.f32 0.0, %v1935
  %v1937 = vpop.f32.mrf.mxu0
  %v1938 = vadd.f32 0.0, %v1937
  %1939 = vdwg.mxu0
  %v1940 = vadd.f32 %v1722, %v1865
  %v1941 = vadd.f32 %v1723, %v1867
  %v1942 = vadd.f32 %v1724, %v1936
  %v1943 = vadd.f32 %v1725, %v1938
  %v1944 = vld [vmem:[%s3] sm:$0xff]
  %v1945 = vld [vmem:[%s4] sm:$0xff]
  %v1946 = vadd.f32 %v1940, %v1941
  %v1947 = vadd.f32 %v1946, %v1942
  %v1948 = vadd.f32 %v1947, %v1943
  %1949 = vadd.xlane.f32.xlu0 %v1948
  %v1950 = vpop.xlane.xlu0 %1949
  %v1951 = vmul.f32 %v1950, 0.001953125
  %v1952 = vsub.f32 %v1940, %v1951
  %v1953 = vsub.f32 %v1941, %v1951
  %v1954 = vsub.f32 %v1942, %v1951
  %v1955 = vsub.f32 %v1943, %v1951
  %v1956 = vmul.f32 %v1952, %v1952
  %v1957 = vmul.f32 %v1953, %v1953
  %v1958 = vmul.f32 %v1954, %v1954
  %v1959 = vmul.f32 %v1955, %v1955
  %v1960 = vadd.f32 %v1956, %v1957
  %v1961 = vadd.f32 %v1960, %v1958
  %v1962 = vadd.f32 %v1961, %v1959
  %1963 = vadd.xlane.f32.xlu0 %v1962
  %v1964 = vpop.xlane.xlu0 %1963
  %v1965 = vmul.f32 %v1964, 0.001953125
  %v1966 = vadd.f32 %v1965, 1e-05
  %v1967 = vrsqrt.pop %v1966
  %v1968 = vmul.f32 %v1944, %v1967
  %1970 = vset.pattern.permute.xlu0 0
  %1971 = vperm.xlu0 %1970, %v1968
  %v1972 = vpop.permute.xlu0 %1971
  %v1974 = vmul.f32 %v1952, %v1972
  %v1975 = vmul.f32 %v1953, %v1972
  %v1976 = vmul.f32 %v1954, %v1972
  %v1977 = vmul.f32 %v1955, %v1972
  %1979 = vset.pattern.permute.xlu0 0
  %1980 = vperm.xlu0 %1979, %v1945
  %v1981 = vpop.permute.xlu0 %1980
  %v1983 = vadd.f32 %v1974, %v1981
  %v1984 = vadd.f32 %v1975, %v1981
  %v1985 = vadd.f32 %v1976, %v1981
  %v1986 = vadd.f32 %v1977, %v1981
  %v1987 = vmax.f32 %v1983, 0.0
  %v1988 = vmax.f32 %v1984, 0.0
  %v1989 = vmax.f32 %v1985, 0.0
  %v1990 = vmax.f32 %v1986, 0.0
  %1991 = vst [vmem:[#allocation2] sm:$0xff] 0.0
  %1992 = vst [vmem:[#allocation2 + $0x28] sm:$0xff] 0.0
  %1993 = vst [vmem:[#allocation2 + $0x8] sm:$0xff] %v1987
  %1994 = vst [vmem:[#allocation2 + $0x10] sm:$0xff] %v1988
  %1995 = vst [vmem:[#allocation2 + $0x18] sm:$0xff] %v1989
  %1996 = vst [vmem:[#allocation2 + $0x20] sm:$0xff] %v1990
  %v1997 = vld [vmem:[#allocation2] sm:$0xff]
  %v1998 = vld [vmem:[#allocation2 + $0x8] sm:$0xff]
  %v1999 = vld [vmem:[#allocation2 + $0x10] sm:$0xff]
  %v2000 = vld [vmem:[#allocation2 + $0x18] sm:$0xff]
  %v2001 = vld [vmem:[#allocation2 + $0x20] sm:$0xff]
  %2002 = vrot.lane.b32.xlu0 %v43, 111
  %v2003 = vpop.permute.xlu0 %2002
  %2004 = vrot.lane.b32.xlu0 %v47, 111
  %v2005 = vpop.permute.xlu0 %2004
  %2006 = vrot.lane.b32.xlu0 %v51, 111
  %v2007 = vpop.permute.xlu0 %2006
  %2008 = vrot.lane.b32.xlu0 %v55, 111
  %v2009 = vpop.permute.xlu0 %2008
  %v2010 = vsel %vm68, %v2003, %v2005
  %v2011 = vsel %vm68, %v2005, %v2007
  %v2012 = vsel %vm68, %v2007, %v2009
  %v2018 = vmul.f32 %v1997, %v2003
  %v2019 = vmul.f32 %v1998, %v2010
  %v2020 = vmul.f32 %v1999, %v2011
  %v2021 = vmul.f32 %v2000, %v2012
  %v2022 = vmul.f32 %v2001, %v2009
  %v2023 = vld [vmem:[%s2] sm:$0xff]
  %2024 = vrot.lane.b32.xlu0 %v83, 112
  %v2025 = vpop.permute.xlu0 %2024
  %2026 = vrot.lane.b32.xlu0 %v87, 112
  %v2027 = vpop.permute.xlu0 %2026
  %2028 = vrot.lane.b32.xlu0 %v91, 112
  %v2029 = vpop.permute.xlu0 %2028
  %2030 = vrot.lane.b32.xlu0 %v95, 112
  %v2031 = vpop.permute.xlu0 %2030
  %v2032 = vsel %vm108, %v2025, %v2027
  %v2033 = vsel %vm108, %v2027, %v2029
  %v2034 = vsel %vm108, %v2029, %v2031
  %v2040 = vmul.f32 %v1997, %v2025
  %v2041 = vmul.f32 %v1998, %v2032
  %v2042 = vmul.f32 %v1999, %v2033
  %v2043 = vmul.f32 %v2000, %v2034
  %v2044 = vmul.f32 %v2001, %v2031
  %s2045 = scalar_lea.vmem %s2, 8
  %v2046 = vld [vmem:[%s2045] sm:$0xff]
  %2052 = vrot.lane.b32.xlu0 %v2040, 16
  %v2053 = vpop.permute.xlu0 %2052
  %2054 = vrot.lane.b32.xlu0 %v2041, 16
  %v2055 = vpop.permute.xlu0 %2054
  %2056 = vrot.lane.b32.xlu0 %v2042, 16
  %v2057 = vpop.permute.xlu0 %2056
  %2058 = vrot.lane.b32.xlu0 %v2043, 16
  %v2059 = vpop.permute.xlu0 %2058
  %2060 = vrot.lane.b32.xlu0 %v2044, 16
  %v2061 = vpop.permute.xlu0 %2060
  %v2062 = vsel %vm135, %v2053, %v2055
  %v2063 = vsel %vm135, %v2055, %v2057
  %v2064 = vsel %vm135, %v2057, %v2059
  %v2065 = vsel %vm135, %v2059, %v2061
  %vm2070 = vcmask 64512
  %v2072 = vsel %vm2070, %v2046, 0
  %2074 = vmatprep.subr.mxu0 0.0
  %2075 = vmatpush1.msra.mxu0 0.0
  %2076 = vmatprep.subr.mxu0 0.0
  %2077 = vmatpush1.msra.mxu0 0.0
  %2078 = vmatprep.subr.mxu0 0.0
  %2079 = vmatpush1.msra.mxu0 0.0
  %2080 = vmatprep.subr.mxu0 0.0
  %2081 = vmatpush1.msra.mxu0 0.0
  %2082 = vmatprep.subr.mxu0 0.0
  %2083 = vmatpush1.msra.mxu0 0.0
  %2084 = vmatprep.subr.mxu0 0.0
  %2085 = vmatpush1.msra.mxu0 0.0
  %2086 = vmatprep.subr.mxu0 0.0
  %2087 = vmatpush1.msra.mxu0 0.0
  %2088 = vmatprep.subr.mxu0 0.0
  %2089 = vmatpush1.msra.mxu0 0.0
  %2090 = vmatprep.subr.mxu0 0.0
  %2091 = vmatpush1.msra.mxu0 0.0
  %2092 = vmatprep.subr.mxu0 0.0
  %2093 = vmatpush1.msra.mxu0 0.0
  %2094 = vmatprep.subr.mxu0 0.0
  %2095 = vmatpush1.msra.mxu0 0.0
  %2096 = vmatprep.subr.mxu0 0.0
  %2097 = vmatpush1.msra.mxu0 0.0
  %2098 = vmatprep.subr.mxu0 0.0
  %2099 = vmatpush1.msra.mxu0 0.0
  %2100 = vmatprep.subr.mxu0 0.0
  %2101 = vmatpush1.msra.mxu0 0.0
  %2102 = vmatprep.subr.mxu0 0.0
  %2103 = vmatpush1.msra.mxu0 0.0
  %2104 = vmatprep.subr.mxu0 %v2063
  %2105 = vmatpush1.msra.mxu0 %v2062
  %2106 = vmatprep.subr.mxu0 0.0
  %2107 = vmatpush2.msra.mxu0 0.0
  %2108 = vmatprep.subr.mxu0 0.0
  %2109 = vmatpush2.msra.mxu0 0.0
  %2110 = vmatprep.subr.mxu0 0.0
  %2111 = vmatpush2.msra.mxu0 0.0
  %2112 = vmatprep.subr.mxu0 0.0
  %2113 = vmatpush2.msra.mxu0 0.0
  %2114 = vmatprep.subr.mxu0 0.0
  %2115 = vmatpush2.msra.mxu0 0.0
  %2116 = vmatprep.subr.mxu0 0.0
  %2117 = vmatpush2.msra.mxu0 0.0
  %2118 = vmatprep.subr.mxu0 0.0
  %2119 = vmatpush2.msra.mxu0 0.0
  %2120 = vmatprep.subr.mxu0 0.0
  %2121 = vmatpush2.msra.mxu0 0.0
  %2122 = vmatprep.subr.mxu0 0.0
  %2123 = vmatpush2.msra.mxu0 0.0
  %2124 = vmatprep.subr.mxu0 0.0
  %2125 = vmatpush2.msra.mxu0 0.0
  %2126 = vmatprep.subr.mxu0 0.0
  %2127 = vmatpush2.msra.mxu0 0.0
  %2128 = vmatprep.subr.mxu0 0.0
  %2129 = vmatpush2.msra.mxu0 0.0
  %2130 = vmatprep.subr.mxu0 0.0
  %2131 = vmatpush2.msra.mxu0 0.0
  %2132 = vmatprep.subr.mxu0 0.0
  %2133 = vmatpush2.msra.mxu0 0.0
  %2134 = vmatprep.subr.mxu0 0.0
  %2135 = vmatpush2.msra.mxu0 0.0
  %2136 = vmatprep.subr.mxu0 0.0
  %2137 = vmatpush2.msra.mxu0 0.0
  %2138 = vmatprep.mubr.f32.mxu0 0.0
  %2139 = vmatmul.mubr.f32.gmra.mxu0 %v2072
  %v2140 = vpop.f32.mrf.mxu0
  %v2141 = vadd.f32 0.0, %v2140
  %v2142 = vpop.f32.mrf.mxu0
  %v2143 = vadd.f32 0.0, %v2142
  %2144 = vdwg.mxu0
  %2145 = vmatprep.subr.mxu0 0.0
  %2146 = vmatpush1.msra.mxu0 0.0
  %2147 = vmatprep.subr.mxu0 0.0
  %2148 = vmatpush1.msra.mxu0 0.0
  %2149 = vmatprep.subr.mxu0 0.0
  %2150 = vmatpush1.msra.mxu0 0.0
  %2151 = vmatprep.subr.mxu0 0.0
  %2152 = vmatpush1.msra.mxu0 0.0
  %2153 = vmatprep.subr.mxu0 0.0
  %2154 = vmatpush1.msra.mxu0 0.0
  %2155 = vmatprep.subr.mxu0 0.0
  %2156 = vmatpush1.msra.mxu0 0.0
  %2157 = vmatprep.subr.mxu0 0.0
  %2158 = vmatpush1.msra.mxu0 0.0
  %2159 = vmatprep.subr.mxu0 0.0
  %2160 = vmatpush1.msra.mxu0 0.0
  %2161 = vmatprep.subr.mxu0 0.0
  %2162 = vmatpush1.msra.mxu0 0.0
  %2163 = vmatprep.subr.mxu0 0.0
  %2164 = vmatpush1.msra.mxu0 0.0
  %2165 = vmatprep.subr.mxu0 0.0
  %2166 = vmatpush1.msra.mxu0 0.0
  %2167 = vmatprep.subr.mxu0 0.0
  %2168 = vmatpush1.msra.mxu0 0.0
  %2169 = vmatprep.subr.mxu0 0.0
  %2170 = vmatpush1.msra.mxu0 0.0
  %2171 = vmatprep.subr.mxu0 0.0
  %2172 = vmatpush1.msra.mxu0 0.0
  %2173 = vmatprep.subr.mxu0 0.0
  %2174 = vmatpush1.msra.mxu0 0.0
  %2175 = vmatprep.subr.mxu0 %v2065
  %2176 = vmatpush1.msra.mxu0 %v2064
  %2177 = vmatprep.subr.mxu0 0.0
  %2178 = vmatpush2.msra.mxu0 0.0
  %2179 = vmatprep.subr.mxu0 0.0
  %2180 = vmatpush2.msra.mxu0 0.0
  %2181 = vmatprep.subr.mxu0 0.0
  %2182 = vmatpush2.msra.mxu0 0.0
  %2183 = vmatprep.subr.mxu0 0.0
  %2184 = vmatpush2.msra.mxu0 0.0
  %2185 = vmatprep.subr.mxu0 0.0
  %2186 = vmatpush2.msra.mxu0 0.0
  %2187 = vmatprep.subr.mxu0 0.0
  %2188 = vmatpush2.msra.mxu0 0.0
  %2189 = vmatprep.subr.mxu0 0.0
  %2190 = vmatpush2.msra.mxu0 0.0
  %2191 = vmatprep.subr.mxu0 0.0
  %2192 = vmatpush2.msra.mxu0 0.0
  %2193 = vmatprep.subr.mxu0 0.0
  %2194 = vmatpush2.msra.mxu0 0.0
  %2195 = vmatprep.subr.mxu0 0.0
  %2196 = vmatpush2.msra.mxu0 0.0
  %2197 = vmatprep.subr.mxu0 0.0
  %2198 = vmatpush2.msra.mxu0 0.0
  %2199 = vmatprep.subr.mxu0 0.0
  %2200 = vmatpush2.msra.mxu0 0.0
  %2201 = vmatprep.subr.mxu0 0.0
  %2202 = vmatpush2.msra.mxu0 0.0
  %2203 = vmatprep.subr.mxu0 0.0
  %2204 = vmatpush2.msra.mxu0 0.0
  %2205 = vmatprep.subr.mxu0 0.0
  %2206 = vmatpush2.msra.mxu0 0.0
  %2207 = vmatprep.subr.mxu0 0.0
  %2208 = vmatpush2.msra.mxu0 0.0
  %2209 = vmatprep.mubr.f32.mxu0 0.0
  %2210 = vmatmul.mubr.f32.gmra.mxu0 %v2072
  %v2211 = vpop.f32.mrf.mxu0
  %v2212 = vadd.f32 0.0, %v2211
  %v2213 = vpop.f32.mrf.mxu0
  %v2214 = vadd.f32 0.0, %v2213
  %2215 = vdwg.mxu0
  %2221 = vrot.lane.b32.xlu0 %v2018, 17
  %v2222 = vpop.permute.xlu0 %2221
  %2223 = vrot.lane.b32.xlu0 %v2019, 17
  %v2224 = vpop.permute.xlu0 %2223
  %2225 = vrot.lane.b32.xlu0 %v2020, 17
  %v2226 = vpop.permute.xlu0 %2225
  %2227 = vrot.lane.b32.xlu0 %v2021, 17
  %v2228 = vpop.permute.xlu0 %2227
  %2229 = vrot.lane.b32.xlu0 %v2022, 17
  %v2230 = vpop.permute.xlu0 %2229
  %v2231 = vsel %vm309, %v2222, %v2224
  %v2232 = vsel %vm309, %v2224, %v2226
  %v2233 = vsel %vm309, %v2226, %v2228
  %v2234 = vsel %vm309, %v2228, %v2230
  %v2240 = vsel %vm2070, %v2023, 0
  %2242 = vmatprep.subr.mxu0 0.0
  %2243 = vmatpush1.msra.mxu0 0.0
  %2244 = vmatprep.subr.mxu0 0.0
  %2245 = vmatpush1.msra.mxu0 0.0
  %2246 = vmatprep.subr.mxu0 0.0
  %2247 = vmatpush1.msra.mxu0 0.0
  %2248 = vmatprep.subr.mxu0 0.0
  %2249 = vmatpush1.msra.mxu0 0.0
  %2250 = vmatprep.subr.mxu0 0.0
  %2251 = vmatpush1.msra.mxu0 0.0
  %2252 = vmatprep.subr.mxu0 0.0
  %2253 = vmatpush1.msra.mxu0 0.0
  %2254 = vmatprep.subr.mxu0 0.0
  %2255 = vmatpush1.msra.mxu0 0.0
  %2256 = vmatprep.subr.mxu0 0.0
  %2257 = vmatpush1.msra.mxu0 0.0
  %2258 = vmatprep.subr.mxu0 0.0
  %2259 = vmatpush1.msra.mxu0 0.0
  %2260 = vmatprep.subr.mxu0 0.0
  %2261 = vmatpush1.msra.mxu0 0.0
  %2262 = vmatprep.subr.mxu0 0.0
  %2263 = vmatpush1.msra.mxu0 0.0
  %2264 = vmatprep.subr.mxu0 0.0
  %2265 = vmatpush1.msra.mxu0 0.0
  %2266 = vmatprep.subr.mxu0 0.0
  %2267 = vmatpush1.msra.mxu0 0.0
  %2268 = vmatprep.subr.mxu0 0.0
  %2269 = vmatpush1.msra.mxu0 0.0
  %2270 = vmatprep.subr.mxu0 0.0
  %2271 = vmatpush1.msra.mxu0 0.0
  %2272 = vmatprep.subr.mxu0 %v2232
  %2273 = vmatpush1.msra.mxu0 %v2231
  %2274 = vmatprep.subr.mxu0 0.0
  %2275 = vmatpush2.msra.mxu0 0.0
  %2276 = vmatprep.subr.mxu0 0.0
  %2277 = vmatpush2.msra.mxu0 0.0
  %2278 = vmatprep.subr.mxu0 0.0
  %2279 = vmatpush2.msra.mxu0 0.0
  %2280 = vmatprep.subr.mxu0 0.0
  %2281 = vmatpush2.msra.mxu0 0.0
  %2282 = vmatprep.subr.mxu0 0.0
  %2283 = vmatpush2.msra.mxu0 0.0
  %2284 = vmatprep.subr.mxu0 0.0
  %2285 = vmatpush2.msra.mxu0 0.0
  %2286 = vmatprep.subr.mxu0 0.0
  %2287 = vmatpush2.msra.mxu0 0.0
  %2288 = vmatprep.subr.mxu0 0.0
  %2289 = vmatpush2.msra.mxu0 0.0
  %2290 = vmatprep.subr.mxu0 0.0
  %2291 = vmatpush2.msra.mxu0 0.0
  %2292 = vmatprep.subr.mxu0 0.0
  %2293 = vmatpush2.msra.mxu0 0.0
  %2294 = vmatprep.subr.mxu0 0.0
  %2295 = vmatpush2.msra.mxu0 0.0
  %2296 = vmatprep.subr.mxu0 0.0
  %2297 = vmatpush2.msra.mxu0 0.0
  %2298 = vmatprep.subr.mxu0 0.0
  %2299 = vmatpush2.msra.mxu0 0.0
  %2300 = vmatprep.subr.mxu0 0.0
  %2301 = vmatpush2.msra.mxu0 0.0
  %2302 = vmatprep.subr.mxu0 0.0
  %2303 = vmatpush2.msra.mxu0 0.0
  %2304 = vmatprep.subr.mxu0 0.0
  %2305 = vmatpush2.msra.mxu0 0.0
  %2306 = vmatprep.mubr.f32.mxu0 0.0
  %2307 = vmatmul.mubr.f32.gmra.mxu0 %v2240
  %v2308 = vpop.f32.mrf.mxu0
  %v2309 = vadd.f32 %v2141, %v2308
  %v2310 = vpop.f32.mrf.mxu0
  %v2311 = vadd.f32 %v2143, %v2310
  %2312 = vdwg.mxu0
  %2313 = vmatprep.subr.mxu0 0.0
  %2314 = vmatpush1.msra.mxu0 0.0
  %2315 = vmatprep.subr.mxu0 0.0
  %2316 = vmatpush1.msra.mxu0 0.0
  %2317 = vmatprep.subr.mxu0 0.0
  %2318 = vmatpush1.msra.mxu0 0.0
  %2319 = vmatprep.subr.mxu0 0.0
  %2320 = vmatpush1.msra.mxu0 0.0
  %2321 = vmatprep.subr.mxu0 0.0
  %2322 = vmatpush1.msra.mxu0 0.0
  %2323 = vmatprep.subr.mxu0 0.0
  %2324 = vmatpush1.msra.mxu0 0.0
  %2325 = vmatprep.subr.mxu0 0.0
  %2326 = vmatpush1.msra.mxu0 0.0
  %2327 = vmatprep.subr.mxu0 0.0
  %2328 = vmatpush1.msra.mxu0 0.0
  %2329 = vmatprep.subr.mxu0 0.0
  %2330 = vmatpush1.msra.mxu0 0.0
  %2331 = vmatprep.subr.mxu0 0.0
  %2332 = vmatpush1.msra.mxu0 0.0
  %2333 = vmatprep.subr.mxu0 0.0
  %2334 = vmatpush1.msra.mxu0 0.0
  %2335 = vmatprep.subr.mxu0 0.0
  %2336 = vmatpush1.msra.mxu0 0.0
  %2337 = vmatprep.subr.mxu0 0.0
  %2338 = vmatpush1.msra.mxu0 0.0
  %2339 = vmatprep.subr.mxu0 0.0
  %2340 = vmatpush1.msra.mxu0 0.0
  %2341 = vmatprep.subr.mxu0 0.0
  %2342 = vmatpush1.msra.mxu0 0.0
  %2343 = vmatprep.subr.mxu0 %v2234
  %2344 = vmatpush1.msra.mxu0 %v2233
  %2345 = vmatprep.subr.mxu0 0.0
  %2346 = vmatpush2.msra.mxu0 0.0
  %2347 = vmatprep.subr.mxu0 0.0
  %2348 = vmatpush2.msra.mxu0 0.0
  %2349 = vmatprep.subr.mxu0 0.0
  %2350 = vmatpush2.msra.mxu0 0.0
  %2351 = vmatprep.subr.mxu0 0.0
  %2352 = vmatpush2.msra.mxu0 0.0
  %2353 = vmatprep.subr.mxu0 0.0
  %2354 = vmatpush2.msra.mxu0 0.0
  %2355 = vmatprep.subr.mxu0 0.0
  %2356 = vmatpush2.msra.mxu0 0.0
  %2357 = vmatprep.subr.mxu0 0.0
  %2358 = vmatpush2.msra.mxu0 0.0
  %2359 = vmatprep.subr.mxu0 0.0
  %2360 = vmatpush2.msra.mxu0 0.0
  %2361 = vmatprep.subr.mxu0 0.0
  %2362 = vmatpush2.msra.mxu0 0.0
  %2363 = vmatprep.subr.mxu0 0.0
  %2364 = vmatpush2.msra.mxu0 0.0
  %2365 = vmatprep.subr.mxu0 0.0
  %2366 = vmatpush2.msra.mxu0 0.0
  %2367 = vmatprep.subr.mxu0 0.0
  %2368 = vmatpush2.msra.mxu0 0.0
  %2369 = vmatprep.subr.mxu0 0.0
  %2370 = vmatpush2.msra.mxu0 0.0
  %2371 = vmatprep.subr.mxu0 0.0
  %2372 = vmatpush2.msra.mxu0 0.0
  %2373 = vmatprep.subr.mxu0 0.0
  %2374 = vmatpush2.msra.mxu0 0.0
  %2375 = vmatprep.subr.mxu0 0.0
  %2376 = vmatpush2.msra.mxu0 0.0
  %2377 = vmatprep.mubr.f32.mxu0 0.0
  %2378 = vmatmul.mubr.f32.gmra.mxu0 %v2240
  %v2379 = vpop.f32.mrf.mxu0
  %v2380 = vadd.f32 %v2212, %v2379
  %v2381 = vpop.f32.mrf.mxu0
  %v2382 = vadd.f32 %v2214, %v2381
  %2383 = vdwg.mxu0
  %2384 = vrot.lane.b32.xlu0 %v473, 113
  %v2385 = vpop.permute.xlu0 %2384
  %2386 = vrot.lane.b32.xlu0 %v477, 113
  %v2387 = vpop.permute.xlu0 %2386
  %2388 = vrot.lane.b32.xlu0 %v481, 113
  %v2389 = vpop.permute.xlu0 %2388
  %2390 = vrot.lane.b32.xlu0 %v485, 113
  %v2391 = vpop.permute.xlu0 %2390
  %v2392 = vsel %vm498, %v2385, %v2387
  %v2393 = vsel %vm498, %v2387, %v2389
  %v2394 = vsel %vm498, %v2389, %v2391
  %v2400 = vmul.f32 %v1997, %v2385
  %v2401 = vmul.f32 %v1998, %v2392
  %v2402 = vmul.f32 %v1999, %v2393
  %v2403 = vmul.f32 %v2000, %v2394
  %v2404 = vmul.f32 %v2001, %v2391
  %s2405 = scalar_lea.vmem %s2, 16
  %v2406 = vld [vmem:[%s2405] sm:$0xff]
  %2412 = vrot.lane.b32.xlu0 %v2400, 15
  %v2413 = vpop.permute.xlu0 %2412
  %2414 = vrot.lane.b32.xlu0 %v2401, 15
  %v2415 = vpop.permute.xlu0 %2414
  %2416 = vrot.lane.b32.xlu0 %v2402, 15
  %v2417 = vpop.permute.xlu0 %2416
  %2418 = vrot.lane.b32.xlu0 %v2403, 15
  %v2419 = vpop.permute.xlu0 %2418
  %2420 = vrot.lane.b32.xlu0 %v2404, 15
  %v2421 = vpop.permute.xlu0 %2420
  %v2422 = vsel %vm525, %v2413, %v2415
  %v2423 = vsel %vm525, %v2415, %v2417
  %v2424 = vsel %vm525, %v2417, %v2419
  %v2425 = vsel %vm525, %v2419, %v2421
  %v2431 = vsel %vm2070, %v2406, 0
  %2433 = vmatprep.subr.mxu0 0.0
  %2434 = vmatpush1.msra.mxu0 0.0
  %2435 = vmatprep.subr.mxu0 0.0
  %2436 = vmatpush1.msra.mxu0 0.0
  %2437 = vmatprep.subr.mxu0 0.0
  %2438 = vmatpush1.msra.mxu0 0.0
  %2439 = vmatprep.subr.mxu0 0.0
  %2440 = vmatpush1.msra.mxu0 0.0
  %2441 = vmatprep.subr.mxu0 0.0
  %2442 = vmatpush1.msra.mxu0 0.0
  %2443 = vmatprep.subr.mxu0 0.0
  %2444 = vmatpush1.msra.mxu0 0.0
  %2445 = vmatprep.subr.mxu0 0.0
  %2446 = vmatpush1.msra.mxu0 0.0
  %2447 = vmatprep.subr.mxu0 0.0
  %2448 = vmatpush1.msra.mxu0 0.0
  %2449 = vmatprep.subr.mxu0 0.0
  %2450 = vmatpush1.msra.mxu0 0.0
  %2451 = vmatprep.subr.mxu0 0.0
  %2452 = vmatpush1.msra.mxu0 0.0
  %2453 = vmatprep.subr.mxu0 0.0
  %2454 = vmatpush1.msra.mxu0 0.0
  %2455 = vmatprep.subr.mxu0 0.0
  %2456 = vmatpush1.msra.mxu0 0.0
  %2457 = vmatprep.subr.mxu0 0.0
  %2458 = vmatpush1.msra.mxu0 0.0
  %2459 = vmatprep.subr.mxu0 0.0
  %2460 = vmatpush1.msra.mxu0 0.0
  %2461 = vmatprep.subr.mxu0 0.0
  %2462 = vmatpush1.msra.mxu0 0.0
  %2463 = vmatprep.subr.mxu0 %v2423
  %2464 = vmatpush1.msra.mxu0 %v2422
  %2465 = vmatprep.subr.mxu0 0.0
  %2466 = vmatpush2.msra.mxu0 0.0
  %2467 = vmatprep.subr.mxu0 0.0
  %2468 = vmatpush2.msra.mxu0 0.0
  %2469 = vmatprep.subr.mxu0 0.0
  %2470 = vmatpush2.msra.mxu0 0.0
  %2471 = vmatprep.subr.mxu0 0.0
  %2472 = vmatpush2.msra.mxu0 0.0
  %2473 = vmatprep.subr.mxu0 0.0
  %2474 = vmatpush2.msra.mxu0 0.0
  %2475 = vmatprep.subr.mxu0 0.0
  %2476 = vmatpush2.msra.mxu0 0.0
  %2477 = vmatprep.subr.mxu0 0.0
  %2478 = vmatpush2.msra.mxu0 0.0
  %2479 = vmatprep.subr.mxu0 0.0
  %2480 = vmatpush2.msra.mxu0 0.0
  %2481 = vmatprep.subr.mxu0 0.0
  %2482 = vmatpush2.msra.mxu0 0.0
  %2483 = vmatprep.subr.mxu0 0.0
  %2484 = vmatpush2.msra.mxu0 0.0
  %2485 = vmatprep.subr.mxu0 0.0
  %2486 = vmatpush2.msra.mxu0 0.0
  %2487 = vmatprep.subr.mxu0 0.0
  %2488 = vmatpush2.msra.mxu0 0.0
  %2489 = vmatprep.subr.mxu0 0.0
  %2490 = vmatpush2.msra.mxu0 0.0
  %2491 = vmatprep.subr.mxu0 0.0
  %2492 = vmatpush2.msra.mxu0 0.0
  %2493 = vmatprep.subr.mxu0 0.0
  %2494 = vmatpush2.msra.mxu0 0.0
  %2495 = vmatprep.subr.mxu0 0.0
  %2496 = vmatpush2.msra.mxu0 0.0
  %2497 = vmatprep.mubr.f32.mxu0 0.0
  %2498 = vmatmul.mubr.f32.gmra.mxu0 %v2431
  %v2499 = vpop.f32.mrf.mxu0
  %v2500 = vadd.f32 0.0, %v2499
  %v2501 = vpop.f32.mrf.mxu0
  %v2502 = vadd.f32 0.0, %v2501
  %2503 = vdwg.mxu0
  %2504 = vmatprep.subr.mxu0 0.0
  %2505 = vmatpush1.msra.mxu0 0.0
  %2506 = vmatprep.subr.mxu0 0.0
  %2507 = vmatpush1.msra.mxu0 0.0
  %2508 = vmatprep.subr.mxu0 0.0
  %2509 = vmatpush1.msra.mxu0 0.0
  %2510 = vmatprep.subr.mxu0 0.0
  %2511 = vmatpush1.msra.mxu0 0.0
  %2512 = vmatprep.subr.mxu0 0.0
  %2513 = vmatpush1.msra.mxu0 0.0
  %2514 = vmatprep.subr.mxu0 0.0
  %2515 = vmatpush1.msra.mxu0 0.0
  %2516 = vmatprep.subr.mxu0 0.0
  %2517 = vmatpush1.msra.mxu0 0.0
  %2518 = vmatprep.subr.mxu0 0.0
  %2519 = vmatpush1.msra.mxu0 0.0
  %2520 = vmatprep.subr.mxu0 0.0
  %2521 = vmatpush1.msra.mxu0 0.0
  %2522 = vmatprep.subr.mxu0 0.0
  %2523 = vmatpush1.msra.mxu0 0.0
  %2524 = vmatprep.subr.mxu0 0.0
  %2525 = vmatpush1.msra.mxu0 0.0
  %2526 = vmatprep.subr.mxu0 0.0
  %2527 = vmatpush1.msra.mxu0 0.0
  %2528 = vmatprep.subr.mxu0 0.0
  %2529 = vmatpush1.msra.mxu0 0.0
  %2530 = vmatprep.subr.mxu0 0.0
  %2531 = vmatpush1.msra.mxu0 0.0
  %2532 = vmatprep.subr.mxu0 0.0
  %2533 = vmatpush1.msra.mxu0 0.0
  %2534 = vmatprep.subr.mxu0 %v2425
  %2535 = vmatpush1.msra.mxu0 %v2424
  %2536 = vmatprep.subr.mxu0 0.0
  %2537 = vmatpush2.msra.mxu0 0.0
  %2538 = vmatprep.subr.mxu0 0.0
  %2539 = vmatpush2.msra.mxu0 0.0
  %2540 = vmatprep.subr.mxu0 0.0
  %2541 = vmatpush2.msra.mxu0 0.0
  %2542 = vmatprep.subr.mxu0 0.0
  %2543 = vmatpush2.msra.mxu0 0.0
  %2544 = vmatprep.subr.mxu0 0.0
  %2545 = vmatpush2.msra.mxu0 0.0
  %2546 = vmatprep.subr.mxu0 0.0
  %2547 = vmatpush2.msra.mxu0 0.0
  %2548 = vmatprep.subr.mxu0 0.0
  %2549 = vmatpush2.msra.mxu0 0.0
  %2550 = vmatprep.subr.mxu0 0.0
  %2551 = vmatpush2.msra.mxu0 0.0
  %2552 = vmatprep.subr.mxu0 0.0
  %2553 = vmatpush2.msra.mxu0 0.0
  %2554 = vmatprep.subr.mxu0 0.0
  %2555 = vmatpush2.msra.mxu0 0.0
  %2556 = vmatprep.subr.mxu0 0.0
  %2557 = vmatpush2.msra.mxu0 0.0
  %2558 = vmatprep.subr.mxu0 0.0
  %2559 = vmatpush2.msra.mxu0 0.0
  %2560 = vmatprep.subr.mxu0 0.0
  %2561 = vmatpush2.msra.mxu0 0.0
  %2562 = vmatprep.subr.mxu0 0.0
  %2563 = vmatpush2.msra.mxu0 0.0
  %2564 = vmatprep.subr.mxu0 0.0
  %2565 = vmatpush2.msra.mxu0 0.0
  %2566 = vmatprep.subr.mxu0 0.0
  %2567 = vmatpush2.msra.mxu0 0.0
  %2568 = vmatprep.mubr.f32.mxu0 0.0
  %2569 = vmatmul.mubr.f32.gmra.mxu0 %v2431
  %v2570 = vpop.f32.mrf.mxu0
  %v2571 = vadd.f32 0.0, %v2570
  %v2572 = vpop.f32.mrf.mxu0
  %v2573 = vadd.f32 0.0, %v2572
  %2574 = vdwg.mxu0
  %v2575 = vadd.f32 %v2309, %v2500
  %v2576 = vadd.f32 %v2311, %v2502
  %v2577 = vadd.f32 %v2380, %v2571
  %v2578 = vadd.f32 %v2382, %v2573
  %2579 = vrot.lane.b32.xlu0 %v693, 127
  %v2580 = vpop.permute.xlu0 %2579
  %2581 = vrot.lane.b32.xlu0 %v697, 127
  %v2582 = vpop.permute.xlu0 %2581
  %2583 = vrot.lane.b32.xlu0 %v701, 127
  %v2584 = vpop.permute.xlu0 %2583
  %2585 = vrot.lane.b32.xlu0 %v705, 127
  %v2586 = vpop.permute.xlu0 %2585
  %v2587 = vsel %vm718, %v2580, %v2582
  %v2588 = vsel %vm718, %v2582, %v2584
  %v2589 = vsel %vm718, %v2584, %v2586
  %v2595 = vmul.f32 %v1997, %v2580
  %v2596 = vmul.f32 %v1998, %v2587
  %v2597 = vmul.f32 %v1999, %v2588
  %v2598 = vmul.f32 %v2000, %v2589
  %v2599 = vmul.f32 %v2001, %v2586
  %s2600 = scalar_lea.vmem %s2, 24
  %v2601 = vld [vmem:[%s2600] sm:$0xff]
  %2607 = vrot.lane.b32.xlu0 %v2595, 1
  %v2608 = vpop.permute.xlu0 %2607
  %2609 = vrot.lane.b32.xlu0 %v2596, 1
  %v2610 = vpop.permute.xlu0 %2609
  %2611 = vrot.lane.b32.xlu0 %v2597, 1
  %v2612 = vpop.permute.xlu0 %2611
  %2613 = vrot.lane.b32.xlu0 %v2598, 1
  %v2614 = vpop.permute.xlu0 %2613
  %2615 = vrot.lane.b32.xlu0 %v2599, 1
  %v2616 = vpop.permute.xlu0 %2615
  %v2617 = vsel %vm745, %v2608, %v2610
  %v2618 = vsel %vm745, %v2610, %v2612
  %v2619 = vsel %vm745, %v2612, %v2614
  %v2620 = vsel %vm745, %v2614, %v2616
  %v2626 = vsel %vm2070, %v2601, 0
  %2628 = vmatprep.subr.mxu0 0.0
  %2629 = vmatpush1.msra.mxu0 0.0
  %2630 = vmatprep.subr.mxu0 0.0
  %2631 = vmatpush1.msra.mxu0 0.0
  %2632 = vmatprep.subr.mxu0 0.0
  %2633 = vmatpush1.msra.mxu0 0.0
  %2634 = vmatprep.subr.mxu0 0.0
  %2635 = vmatpush1.msra.mxu0 0.0
  %2636 = vmatprep.subr.mxu0 0.0
  %2637 = vmatpush1.msra.mxu0 0.0
  %2638 = vmatprep.subr.mxu0 0.0
  %2639 = vmatpush1.msra.mxu0 0.0
  %2640 = vmatprep.subr.mxu0 0.0
  %2641 = vmatpush1.msra.mxu0 0.0
  %2642 = vmatprep.subr.mxu0 0.0
  %2643 = vmatpush1.msra.mxu0 0.0
  %2644 = vmatprep.subr.mxu0 0.0
  %2645 = vmatpush1.msra.mxu0 0.0
  %2646 = vmatprep.subr.mxu0 0.0
  %2647 = vmatpush1.msra.mxu0 0.0
  %2648 = vmatprep.subr.mxu0 0.0
  %2649 = vmatpush1.msra.mxu0 0.0
  %2650 = vmatprep.subr.mxu0 0.0
  %2651 = vmatpush1.msra.mxu0 0.0
  %2652 = vmatprep.subr.mxu0 0.0
  %2653 = vmatpush1.msra.mxu0 0.0
  %2654 = vmatprep.subr.mxu0 0.0
  %2655 = vmatpush1.msra.mxu0 0.0
  %2656 = vmatprep.subr.mxu0 0.0
  %2657 = vmatpush1.msra.mxu0 0.0
  %2658 = vmatprep.subr.mxu0 %v2618
  %2659 = vmatpush1.msra.mxu0 %v2617
  %2660 = vmatprep.subr.mxu0 0.0
  %2661 = vmatpush2.msra.mxu0 0.0
  %2662 = vmatprep.subr.mxu0 0.0
  %2663 = vmatpush2.msra.mxu0 0.0
  %2664 = vmatprep.subr.mxu0 0.0
  %2665 = vmatpush2.msra.mxu0 0.0
  %2666 = vmatprep.subr.mxu0 0.0
  %2667 = vmatpush2.msra.mxu0 0.0
  %2668 = vmatprep.subr.mxu0 0.0
  %2669 = vmatpush2.msra.mxu0 0.0
  %2670 = vmatprep.subr.mxu0 0.0
  %2671 = vmatpush2.msra.mxu0 0.0
  %2672 = vmatprep.subr.mxu0 0.0
  %2673 = vmatpush2.msra.mxu0 0.0
  %2674 = vmatprep.subr.mxu0 0.0
  %2675 = vmatpush2.msra.mxu0 0.0
  %2676 = vmatprep.subr.mxu0 0.0
  %2677 = vmatpush2.msra.mxu0 0.0
  %2678 = vmatprep.subr.mxu0 0.0
  %2679 = vmatpush2.msra.mxu0 0.0
  %2680 = vmatprep.subr.mxu0 0.0
  %2681 = vmatpush2.msra.mxu0 0.0
  %2682 = vmatprep.subr.mxu0 0.0
  %2683 = vmatpush2.msra.mxu0 0.0
  %2684 = vmatprep.subr.mxu0 0.0
  %2685 = vmatpush2.msra.mxu0 0.0
  %2686 = vmatprep.subr.mxu0 0.0
  %2687 = vmatpush2.msra.mxu0 0.0
  %2688 = vmatprep.subr.mxu0 0.0
  %2689 = vmatpush2.msra.mxu0 0.0
  %2690 = vmatprep.subr.mxu0 0.0
  %2691 = vmatpush2.msra.mxu0 0.0
  %2692 = vmatprep.mubr.f32.mxu0 0.0
  %2693 = vmatmul.mubr.f32.gmra.mxu0 %v2626
  %v2694 = vpop.f32.mrf.mxu0
  %v2695 = vadd.f32 0.0, %v2694
  %v2696 = vpop.f32.mrf.mxu0
  %v2697 = vadd.f32 0.0, %v2696
  %2698 = vdwg.mxu0
  %2699 = vmatprep.subr.mxu0 0.0
  %2700 = vmatpush1.msra.mxu0 0.0
  %2701 = vmatprep.subr.mxu0 0.0
  %2702 = vmatpush1.msra.mxu0 0.0
  %2703 = vmatprep.subr.mxu0 0.0
  %2704 = vmatpush1.msra.mxu0 0.0
  %2705 = vmatprep.subr.mxu0 0.0
  %2706 = vmatpush1.msra.mxu0 0.0
  %2707 = vmatprep.subr.mxu0 0.0
  %2708 = vmatpush1.msra.mxu0 0.0
  %2709 = vmatprep.subr.mxu0 0.0
  %2710 = vmatpush1.msra.mxu0 0.0
  %2711 = vmatprep.subr.mxu0 0.0
  %2712 = vmatpush1.msra.mxu0 0.0
  %2713 = vmatprep.subr.mxu0 0.0
  %2714 = vmatpush1.msra.mxu0 0.0
  %2715 = vmatprep.subr.mxu0 0.0
  %2716 = vmatpush1.msra.mxu0 0.0
  %2717 = vmatprep.subr.mxu0 0.0
  %2718 = vmatpush1.msra.mxu0 0.0
  %2719 = vmatprep.subr.mxu0 0.0
  %2720 = vmatpush1.msra.mxu0 0.0
  %2721 = vmatprep.subr.mxu0 0.0
  %2722 = vmatpush1.msra.mxu0 0.0
  %2723 = vmatprep.subr.mxu0 0.0
  %2724 = vmatpush1.msra.mxu0 0.0
  %2725 = vmatprep.subr.mxu0 0.0
  %2726 = vmatpush1.msra.mxu0 0.0
  %2727 = vmatprep.subr.mxu0 0.0
  %2728 = vmatpush1.msra.mxu0 0.0
  %2729 = vmatprep.subr.mxu0 %v2620
  %2730 = vmatpush1.msra.mxu0 %v2619
  %2731 = vmatprep.subr.mxu0 0.0
  %2732 = vmatpush2.msra.mxu0 0.0
  %2733 = vmatprep.subr.mxu0 0.0
  %2734 = vmatpush2.msra.mxu0 0.0
  %2735 = vmatprep.subr.mxu0 0.0
  %2736 = vmatpush2.msra.mxu0 0.0
  %2737 = vmatprep.subr.mxu0 0.0
  %2738 = vmatpush2.msra.mxu0 0.0
  %2739 = vmatprep.subr.mxu0 0.0
  %2740 = vmatpush2.msra.mxu0 0.0
  %2741 = vmatprep.subr.mxu0 0.0
  %2742 = vmatpush2.msra.mxu0 0.0
  %2743 = vmatprep.subr.mxu0 0.0
  %2744 = vmatpush2.msra.mxu0 0.0
  %2745 = vmatprep.subr.mxu0 0.0
  %2746 = vmatpush2.msra.mxu0 0.0
  %2747 = vmatprep.subr.mxu0 0.0
  %2748 = vmatpush2.msra.mxu0 0.0
  %2749 = vmatprep.subr.mxu0 0.0
  %2750 = vmatpush2.msra.mxu0 0.0
  %2751 = vmatprep.subr.mxu0 0.0
  %2752 = vmatpush2.msra.mxu0 0.0
  %2753 = vmatprep.subr.mxu0 0.0
  %2754 = vmatpush2.msra.mxu0 0.0
  %2755 = vmatprep.subr.mxu0 0.0
  %2756 = vmatpush2.msra.mxu0 0.0
  %2757 = vmatprep.subr.mxu0 0.0
  %2758 = vmatpush2.msra.mxu0 0.0
  %2759 = vmatprep.subr.mxu0 0.0
  %2760 = vmatpush2.msra.mxu0 0.0
  %2761 = vmatprep.subr.mxu0 0.0
  %2762 = vmatpush2.msra.mxu0 0.0
  %2763 = vmatprep.mubr.f32.mxu0 0.0
  %2764 = vmatmul.mubr.f32.gmra.mxu0 %v2626
  %v2765 = vpop.f32.mrf.mxu0
  %v2766 = vadd.f32 0.0, %v2765
  %v2767 = vpop.f32.mrf.mxu0
  %v2768 = vadd.f32 0.0, %v2767
  %2769 = vdwg.mxu0
  %v2770 = vadd.f32 %v2575, %v2695
  %v2771 = vadd.f32 %v2576, %v2697
  %v2772 = vadd.f32 %v2577, %v2766
  %v2773 = vadd.f32 %v2578, %v2768
  %s2774 = scalar_lea.vmem %s2, 32
  %v2775 = vld [vmem:[%s2774] sm:$0xff]
  %v2777 = vsel %vm2070, %v2775, 0
  %2779 = vmatprep.subr.mxu0 0.0
  %2780 = vmatpush1.msra.mxu0 0.0
  %2781 = vmatprep.subr.mxu0 0.0
  %2782 = vmatpush1.msra.mxu0 0.0
  %2783 = vmatprep.subr.mxu0 0.0
  %2784 = vmatpush1.msra.mxu0 0.0
  %2785 = vmatprep.subr.mxu0 0.0
  %2786 = vmatpush1.msra.mxu0 0.0
  %2787 = vmatprep.subr.mxu0 0.0
  %2788 = vmatpush1.msra.mxu0 0.0
  %2789 = vmatprep.subr.mxu0 0.0
  %2790 = vmatpush1.msra.mxu0 0.0
  %2791 = vmatprep.subr.mxu0 0.0
  %2792 = vmatpush1.msra.mxu0 0.0
  %2793 = vmatprep.subr.mxu0 0.0
  %2794 = vmatpush1.msra.mxu0 0.0
  %2795 = vmatprep.subr.mxu0 0.0
  %2796 = vmatpush1.msra.mxu0 0.0
  %2797 = vmatprep.subr.mxu0 0.0
  %2798 = vmatpush1.msra.mxu0 0.0
  %2799 = vmatprep.subr.mxu0 0.0
  %2800 = vmatpush1.msra.mxu0 0.0
  %2801 = vmatprep.subr.mxu0 0.0
  %2802 = vmatpush1.msra.mxu0 0.0
  %2803 = vmatprep.subr.mxu0 0.0
  %2804 = vmatpush1.msra.mxu0 0.0
  %2805 = vmatprep.subr.mxu0 0.0
  %2806 = vmatpush1.msra.mxu0 0.0
  %2807 = vmatprep.subr.mxu0 0.0
  %2808 = vmatpush1.msra.mxu0 0.0
  %2809 = vmatprep.subr.mxu0 %v1999
  %2810 = vmatpush1.msra.mxu0 %v1998
  %2811 = vmatprep.subr.mxu0 0.0
  %2812 = vmatpush2.msra.mxu0 0.0
  %2813 = vmatprep.subr.mxu0 0.0
  %2814 = vmatpush2.msra.mxu0 0.0
  %2815 = vmatprep.subr.mxu0 0.0
  %2816 = vmatpush2.msra.mxu0 0.0
  %2817 = vmatprep.subr.mxu0 0.0
  %2818 = vmatpush2.msra.mxu0 0.0
  %2819 = vmatprep.subr.mxu0 0.0
  %2820 = vmatpush2.msra.mxu0 0.0
  %2821 = vmatprep.subr.mxu0 0.0
  %2822 = vmatpush2.msra.mxu0 0.0
  %2823 = vmatprep.subr.mxu0 0.0
  %2824 = vmatpush2.msra.mxu0 0.0
  %2825 = vmatprep.subr.mxu0 0.0
  %2826 = vmatpush2.msra.mxu0 0.0
  %2827 = vmatprep.subr.mxu0 0.0
  %2828 = vmatpush2.msra.mxu0 0.0
  %2829 = vmatprep.subr.mxu0 0.0
  %2830 = vmatpush2.msra.mxu0 0.0
  %2831 = vmatprep.subr.mxu0 0.0
  %2832 = vmatpush2.msra.mxu0 0.0
  %2833 = vmatprep.subr.mxu0 0.0
  %2834 = vmatpush2.msra.mxu0 0.0
  %2835 = vmatprep.subr.mxu0 0.0
  %2836 = vmatpush2.msra.mxu0 0.0
  %2837 = vmatprep.subr.mxu0 0.0
  %2838 = vmatpush2.msra.mxu0 0.0
  %2839 = vmatprep.subr.mxu0 0.0
  %2840 = vmatpush2.msra.mxu0 0.0
  %2841 = vmatprep.subr.mxu0 0.0
  %2842 = vmatpush2.msra.mxu0 0.0
  %2843 = vmatprep.mubr.f32.mxu0 0.0
  %2844 = vmatmul.mubr.f32.gmra.mxu0 %v2777
  %v2845 = vpop.f32.mrf.mxu0
  %v2846 = vadd.f32 0.0, %v2845
  %v2847 = vpop.f32.mrf.mxu0
  %v2848 = vadd.f32 0.0, %v2847
  %2849 = vdwg.mxu0
  %2850 = vmatprep.subr.mxu0 0.0
  %2851 = vmatpush1.msra.mxu0 0.0
  %2852 = vmatprep.subr.mxu0 0.0
  %2853 = vmatpush1.msra.mxu0 0.0
  %2854 = vmatprep.subr.mxu0 0.0
  %2855 = vmatpush1.msra.mxu0 0.0
  %2856 = vmatprep.subr.mxu0 0.0
  %2857 = vmatpush1.msra.mxu0 0.0
  %2858 = vmatprep.subr.mxu0 0.0
  %2859 = vmatpush1.msra.mxu0 0.0
  %2860 = vmatprep.subr.mxu0 0.0
  %2861 = vmatpush1.msra.mxu0 0.0
  %2862 = vmatprep.subr.mxu0 0.0
  %2863 = vmatpush1.msra.mxu0 0.0
  %2864 = vmatprep.subr.mxu0 0.0
  %2865 = vmatpush1.msra.mxu0 0.0
  %2866 = vmatprep.subr.mxu0 0.0
  %2867 = vmatpush1.msra.mxu0 0.0
  %2868 = vmatprep.subr.mxu0 0.0
  %2869 = vmatpush1.msra.mxu0 0.0
  %2870 = vmatprep.subr.mxu0 0.0
  %2871 = vmatpush1.msra.mxu0 0.0
  %2872 = vmatprep.subr.mxu0 0.0
  %2873 = vmatpush1.msra.mxu0 0.0
  %2874 = vmatprep.subr.mxu0 0.0
  %2875 = vmatpush1.msra.mxu0 0.0
  %2876 = vmatprep.subr.mxu0 0.0
  %2877 = vmatpush1.msra.mxu0 0.0
  %2878 = vmatprep.subr.mxu0 0.0
  %2879 = vmatpush1.msra.mxu0 0.0
  %2880 = vmatprep.subr.mxu0 %v2001
  %2881 = vmatpush1.msra.mxu0 %v2000
  %2882 = vmatprep.subr.mxu0 0.0
  %2883 = vmatpush2.msra.mxu0 0.0
  %2884 = vmatprep.subr.mxu0 0.0
  %2885 = vmatpush2.msra.mxu0 0.0
  %2886 = vmatprep.subr.mxu0 0.0
  %2887 = vmatpush2.msra.mxu0 0.0
  %2888 = vmatprep.subr.mxu0 0.0
  %2889 = vmatpush2.msra.mxu0 0.0
  %2890 = vmatprep.subr.mxu0 0.0
  %2891 = vmatpush2.msra.mxu0 0.0
  %2892 = vmatprep.subr.mxu0 0.0
  %2893 = vmatpush2.msra.mxu0 0.0
  %2894 = vmatprep.subr.mxu0 0.0
  %2895 = vmatpush2.msra.mxu0 0.0
  %2896 = vmatprep.subr.mxu0 0.0
  %2897 = vmatpush2.msra.mxu0 0.0
  %2898 = vmatprep.subr.mxu0 0.0
  %2899 = vmatpush2.msra.mxu0 0.0
  %2900 = vmatprep.subr.mxu0 0.0
  %2901 = vmatpush2.msra.mxu0 0.0
  %2902 = vmatprep.subr.mxu0 0.0
  %2903 = vmatpush2.msra.mxu0 0.0
  %2904 = vmatprep.subr.mxu0 0.0
  %2905 = vmatpush2.msra.mxu0 0.0
  %2906 = vmatprep.subr.mxu0 0.0
  %2907 = vmatpush2.msra.mxu0 0.0
  %2908 = vmatprep.subr.mxu0 0.0
  %2909 = vmatpush2.msra.mxu0 0.0
  %2910 = vmatprep.subr.mxu0 0.0
  %2911 = vmatpush2.msra.mxu0 0.0
  %2912 = vmatprep.subr.mxu0 0.0
  %2913 = vmatpush2.msra.mxu0 0.0
  %2914 = vmatprep.mubr.f32.mxu0 0.0
  %2915 = vmatmul.mubr.f32.gmra.mxu0 %v2777
  %v2916 = vpop.f32.mrf.mxu0
  %v2917 = vadd.f32 0.0, %v2916
  %v2918 = vpop.f32.mrf.mxu0
  %v2919 = vadd.f32 0.0, %v2918
  %2920 = vdwg.mxu0
  %v2921 = vadd.f32 %v2770, %v2846
  %v2922 = vadd.f32 %v2771, %v2848
  %v2923 = vadd.f32 %v2772, %v2917
  %v2924 = vadd.f32 %v2773, %v2919
  %v2925 = vld [vmem:[#allocation2 + $0x8] sm:$0xff]
  %v2926 = vld [vmem:[#allocation2 + $0x10] sm:$0xff]
  %v2927 = vld [vmem:[#allocation2 + $0x18] sm:$0xff]
  %v2928 = vld [vmem:[#allocation2 + $0x20] sm:$0xff]
  %v2929 = vld [vmem:[#allocation2 + $0x28] sm:$0xff]
  %2930 = vrot.lane.b32.xlu0 %v1078, 1
  %v2931 = vpop.permute.xlu0 %2930
  %2932 = vrot.lane.b32.xlu0 %v1082, 1
  %v2933 = vpop.permute.xlu0 %2932
  %2934 = vrot.lane.b32.xlu0 %v1086, 1
  %v2935 = vpop.permute.xlu0 %2934
  %2936 = vrot.lane.b32.xlu0 %v1090, 1
  %v2937 = vpop.permute.xlu0 %2936
  %v2938 = vsel %vm745, %v2931, %v2933
  %v2939 = vsel %vm745, %v2933, %v2935
  %v2940 = vsel %vm745, %v2935, %v2937
  %v2946 = vmul.f32 %v2925, %v2931
  %v2947 = vmul.f32 %v2926, %v2938
  %v2948 = vmul.f32 %v2927, %v2939
  %v2949 = vmul.f32 %v2928, %v2940
  %v2950 = vmul.f32 %v2929, %v2937
  %s2951 = scalar_lea.vmem %s2, 40
  %v2952 = vld [vmem:[%s2951] sm:$0xff]
  %2958 = vrot.lane.b32.xlu0 %v2946, 127
  %v2959 = vpop.permute.xlu0 %2958
  %2960 = vrot.lane.b32.xlu0 %v2947, 127
  %v2961 = vpop.permute.xlu0 %2960
  %2962 = vrot.lane.b32.xlu0 %v2948, 127
  %v2963 = vpop.permute.xlu0 %2962
  %2964 = vrot.lane.b32.xlu0 %v2949, 127
  %v2965 = vpop.permute.xlu0 %2964
  %2966 = vrot.lane.b32.xlu0 %v2950, 127
  %v2967 = vpop.permute.xlu0 %2966
  %v2968 = vsel %vm718, %v2959, %v2961
  %v2969 = vsel %vm718, %v2961, %v2963
  %v2970 = vsel %vm718, %v2963, %v2965
  %v2971 = vsel %vm718, %v2965, %v2967
  %v2977 = vsel %vm2070, %v2952, 0
  %2979 = vmatprep.subr.mxu0 0.0
  %2980 = vmatpush1.msra.mxu0 0.0
  %2981 = vmatprep.subr.mxu0 0.0
  %2982 = vmatpush1.msra.mxu0 0.0
  %2983 = vmatprep.subr.mxu0 0.0
  %2984 = vmatpush1.msra.mxu0 0.0
  %2985 = vmatprep.subr.mxu0 0.0
  %2986 = vmatpush1.msra.mxu0 0.0
  %2987 = vmatprep.subr.mxu0 0.0
  %2988 = vmatpush1.msra.mxu0 0.0
  %2989 = vmatprep.subr.mxu0 0.0
  %2990 = vmatpush1.msra.mxu0 0.0
  %2991 = vmatprep.subr.mxu0 0.0
  %2992 = vmatpush1.msra.mxu0 0.0
  %2993 = vmatprep.subr.mxu0 0.0
  %2994 = vmatpush1.msra.mxu0 0.0
  %2995 = vmatprep.subr.mxu0 0.0
  %2996 = vmatpush1.msra.mxu0 0.0
  %2997 = vmatprep.subr.mxu0 0.0
  %2998 = vmatpush1.msra.mxu0 0.0
  %2999 = vmatprep.subr.mxu0 0.0
  %3000 = vmatpush1.msra.mxu0 0.0
  %3001 = vmatprep.subr.mxu0 0.0
  %3002 = vmatpush1.msra.mxu0 0.0
  %3003 = vmatprep.subr.mxu0 0.0
  %3004 = vmatpush1.msra.mxu0 0.0
  %3005 = vmatprep.subr.mxu0 0.0
  %3006 = vmatpush1.msra.mxu0 0.0
  %3007 = vmatprep.subr.mxu0 0.0
  %3008 = vmatpush1.msra.mxu0 0.0
  %3009 = vmatprep.subr.mxu0 %v2969
  %3010 = vmatpush1.msra.mxu0 %v2968
  %3011 = vmatprep.subr.mxu0 0.0
  %3012 = vmatpush2.msra.mxu0 0.0
  %3013 = vmatprep.subr.mxu0 0.0
  %3014 = vmatpush2.msra.mxu0 0.0
  %3015 = vmatprep.subr.mxu0 0.0
  %3016 = vmatpush2.msra.mxu0 0.0
  %3017 = vmatprep.subr.mxu0 0.0
  %3018 = vmatpush2.msra.mxu0 0.0
  %3019 = vmatprep.subr.mxu0 0.0
  %3020 = vmatpush2.msra.mxu0 0.0
  %3021 = vmatprep.subr.mxu0 0.0
  %3022 = vmatpush2.msra.mxu0 0.0
  %3023 = vmatprep.subr.mxu0 0.0
  %3024 = vmatpush2.msra.mxu0 0.0
  %3025 = vmatprep.subr.mxu0 0.0
  %3026 = vmatpush2.msra.mxu0 0.0
  %3027 = vmatprep.subr.mxu0 0.0
  %3028 = vmatpush2.msra.mxu0 0.0
  %3029 = vmatprep.subr.mxu0 0.0
  %3030 = vmatpush2.msra.mxu0 0.0
  %3031 = vmatprep.subr.mxu0 0.0
  %3032 = vmatpush2.msra.mxu0 0.0
  %3033 = vmatprep.subr.mxu0 0.0
  %3034 = vmatpush2.msra.mxu0 0.0
  %3035 = vmatprep.subr.mxu0 0.0
  %3036 = vmatpush2.msra.mxu0 0.0
  %3037 = vmatprep.subr.mxu0 0.0
  %3038 = vmatpush2.msra.mxu0 0.0
  %3039 = vmatprep.subr.mxu0 0.0
  %3040 = vmatpush2.msra.mxu0 0.0
  %3041 = vmatprep.subr.mxu0 0.0
  %3042 = vmatpush2.msra.mxu0 0.0
  %3043 = vmatprep.mubr.f32.mxu0 0.0
  %3044 = vmatmul.mubr.f32.gmra.mxu0 %v2977
  %v3045 = vpop.f32.mrf.mxu0
  %v3046 = vadd.f32 0.0, %v3045
  %v3047 = vpop.f32.mrf.mxu0
  %v3048 = vadd.f32 0.0, %v3047
  %3049 = vdwg.mxu0
  %3050 = vmatprep.subr.mxu0 0.0
  %3051 = vmatpush1.msra.mxu0 0.0
  %3052 = vmatprep.subr.mxu0 0.0
  %3053 = vmatpush1.msra.mxu0 0.0
  %3054 = vmatprep.subr.mxu0 0.0
  %3055 = vmatpush1.msra.mxu0 0.0
  %3056 = vmatprep.subr.mxu0 0.0
  %3057 = vmatpush1.msra.mxu0 0.0
  %3058 = vmatprep.subr.mxu0 0.0
  %3059 = vmatpush1.msra.mxu0 0.0
  %3060 = vmatprep.subr.mxu0 0.0
  %3061 = vmatpush1.msra.mxu0 0.0
  %3062 = vmatprep.subr.mxu0 0.0
  %3063 = vmatpush1.msra.mxu0 0.0
  %3064 = vmatprep.subr.mxu0 0.0
  %3065 = vmatpush1.msra.mxu0 0.0
  %3066 = vmatprep.subr.mxu0 0.0
  %3067 = vmatpush1.msra.mxu0 0.0
  %3068 = vmatprep.subr.mxu0 0.0
  %3069 = vmatpush1.msra.mxu0 0.0
  %3070 = vmatprep.subr.mxu0 0.0
  %3071 = vmatpush1.msra.mxu0 0.0
  %3072 = vmatprep.subr.mxu0 0.0
  %3073 = vmatpush1.msra.mxu0 0.0
  %3074 = vmatprep.subr.mxu0 0.0
  %3075 = vmatpush1.msra.mxu0 0.0
  %3076 = vmatprep.subr.mxu0 0.0
  %3077 = vmatpush1.msra.mxu0 0.0
  %3078 = vmatprep.subr.mxu0 0.0
  %3079 = vmatpush1.msra.mxu0 0.0
  %3080 = vmatprep.subr.mxu0 %v2971
  %3081 = vmatpush1.msra.mxu0 %v2970
  %3082 = vmatprep.subr.mxu0 0.0
  %3083 = vmatpush2.msra.mxu0 0.0
  %3084 = vmatprep.subr.mxu0 0.0
  %3085 = vmatpush2.msra.mxu0 0.0
  %3086 = vmatprep.subr.mxu0 0.0
  %3087 = vmatpush2.msra.mxu0 0.0
  %3088 = vmatprep.subr.mxu0 0.0
  %3089 = vmatpush2.msra.mxu0 0.0
  %3090 = vmatprep.subr.mxu0 0.0
  %3091 = vmatpush2.msra.mxu0 0.0
  %3092 = vmatprep.subr.mxu0 0.0
  %3093 = vmatpush2.msra.mxu0 0.0
  %3094 = vmatprep.subr.mxu0 0.0
  %3095 = vmatpush2.msra.mxu0 0.0
  %3096 = vmatprep.subr.mxu0 0.0
  %3097 = vmatpush2.msra.mxu0 0.0
  %3098 = vmatprep.subr.mxu0 0.0
  %3099 = vmatpush2.msra.mxu0 0.0
  %3100 = vmatprep.subr.mxu0 0.0
  %3101 = vmatpush2.msra.mxu0 0.0
  %3102 = vmatprep.subr.mxu0 0.0
  %3103 = vmatpush2.msra.mxu0 0.0
  %3104 = vmatprep.subr.mxu0 0.0
  %3105 = vmatpush2.msra.mxu0 0.0
  %3106 = vmatprep.subr.mxu0 0.0
  %3107 = vmatpush2.msra.mxu0 0.0
  %3108 = vmatprep.subr.mxu0 0.0
  %3109 = vmatpush2.msra.mxu0 0.0
  %3110 = vmatprep.subr.mxu0 0.0
  %3111 = vmatpush2.msra.mxu0 0.0
  %3112 = vmatprep.subr.mxu0 0.0
  %3113 = vmatpush2.msra.mxu0 0.0
  %3114 = vmatprep.mubr.f32.mxu0 0.0
  %3115 = vmatmul.mubr.f32.gmra.mxu0 %v2977
  %v3116 = vpop.f32.mrf.mxu0
  %v3117 = vadd.f32 0.0, %v3116
  %v3118 = vpop.f32.mrf.mxu0
  %v3119 = vadd.f32 0.0, %v3118
  %3120 = vdwg.mxu0
  %v3121 = vadd.f32 %v2921, %v3046
  %v3122 = vadd.f32 %v2922, %v3048
  %v3123 = vadd.f32 %v2923, %v3117
  %v3124 = vadd.f32 %v2924, %v3119
  %3125 = vrot.lane.b32.xlu0 %v1296, 15
  %v3126 = vpop.permute.xlu0 %3125
  %3127 = vrot.lane.b32.xlu0 %v1300, 15
  %v3128 = vpop.permute.xlu0 %3127
  %3129 = vrot.lane.b32.xlu0 %v1304, 15
  %v3130 = vpop.permute.xlu0 %3129
  %3131 = vrot.lane.b32.xlu0 %v1308, 15
  %v3132 = vpop.permute.xlu0 %3131
  %v3133 = vsel %vm525, %v3126, %v3128
  %v3134 = vsel %vm525, %v3128, %v3130
  %v3135 = vsel %vm525, %v3130, %v3132
  %v3141 = vmul.f32 %v2925, %v3126
  %v3142 = vmul.f32 %v2926, %v3133
  %v3143 = vmul.f32 %v2927, %v3134
  %v3144 = vmul.f32 %v2928, %v3135
  %v3145 = vmul.f32 %v2929, %v3132
  %s3146 = scalar_lea.vmem %s2, 48
  %v3147 = vld [vmem:[%s3146] sm:$0xff]
  %3153 = vrot.lane.b32.xlu0 %v3141, 113
  %v3154 = vpop.permute.xlu0 %3153
  %3155 = vrot.lane.b32.xlu0 %v3142, 113
  %v3156 = vpop.permute.xlu0 %3155
  %3157 = vrot.lane.b32.xlu0 %v3143, 113
  %v3158 = vpop.permute.xlu0 %3157
  %3159 = vrot.lane.b32.xlu0 %v3144, 113
  %v3160 = vpop.permute.xlu0 %3159
  %3161 = vrot.lane.b32.xlu0 %v3145, 113
  %v3162 = vpop.permute.xlu0 %3161
  %v3163 = vsel %vm498, %v3154, %v3156
  %v3164 = vsel %vm498, %v3156, %v3158
  %v3165 = vsel %vm498, %v3158, %v3160
  %v3166 = vsel %vm498, %v3160, %v3162
  %v3172 = vsel %vm2070, %v3147, 0
  %3174 = vmatprep.subr.mxu0 0.0
  %3175 = vmatpush1.msra.mxu0 0.0
  %3176 = vmatprep.subr.mxu0 0.0
  %3177 = vmatpush1.msra.mxu0 0.0
  %3178 = vmatprep.subr.mxu0 0.0
  %3179 = vmatpush1.msra.mxu0 0.0
  %3180 = vmatprep.subr.mxu0 0.0
  %3181 = vmatpush1.msra.mxu0 0.0
  %3182 = vmatprep.subr.mxu0 0.0
  %3183 = vmatpush1.msra.mxu0 0.0
  %3184 = vmatprep.subr.mxu0 0.0
  %3185 = vmatpush1.msra.mxu0 0.0
  %3186 = vmatprep.subr.mxu0 0.0
  %3187 = vmatpush1.msra.mxu0 0.0
  %3188 = vmatprep.subr.mxu0 0.0
  %3189 = vmatpush1.msra.mxu0 0.0
  %3190 = vmatprep.subr.mxu0 0.0
  %3191 = vmatpush1.msra.mxu0 0.0
  %3192 = vmatprep.subr.mxu0 0.0
  %3193 = vmatpush1.msra.mxu0 0.0
  %3194 = vmatprep.subr.mxu0 0.0
  %3195 = vmatpush1.msra.mxu0 0.0
  %3196 = vmatprep.subr.mxu0 0.0
  %3197 = vmatpush1.msra.mxu0 0.0
  %3198 = vmatprep.subr.mxu0 0.0
  %3199 = vmatpush1.msra.mxu0 0.0
  %3200 = vmatprep.subr.mxu0 0.0
  %3201 = vmatpush1.msra.mxu0 0.0
  %3202 = vmatprep.subr.mxu0 0.0
  %3203 = vmatpush1.msra.mxu0 0.0
  %3204 = vmatprep.subr.mxu0 %v3164
  %3205 = vmatpush1.msra.mxu0 %v3163
  %3206 = vmatprep.subr.mxu0 0.0
  %3207 = vmatpush2.msra.mxu0 0.0
  %3208 = vmatprep.subr.mxu0 0.0
  %3209 = vmatpush2.msra.mxu0 0.0
  %3210 = vmatprep.subr.mxu0 0.0
  %3211 = vmatpush2.msra.mxu0 0.0
  %3212 = vmatprep.subr.mxu0 0.0
  %3213 = vmatpush2.msra.mxu0 0.0
  %3214 = vmatprep.subr.mxu0 0.0
  %3215 = vmatpush2.msra.mxu0 0.0
  %3216 = vmatprep.subr.mxu0 0.0
  %3217 = vmatpush2.msra.mxu0 0.0
  %3218 = vmatprep.subr.mxu0 0.0
  %3219 = vmatpush2.msra.mxu0 0.0
  %3220 = vmatprep.subr.mxu0 0.0
  %3221 = vmatpush2.msra.mxu0 0.0
  %3222 = vmatprep.subr.mxu0 0.0
  %3223 = vmatpush2.msra.mxu0 0.0
  %3224 = vmatprep.subr.mxu0 0.0
  %3225 = vmatpush2.msra.mxu0 0.0
  %3226 = vmatprep.subr.mxu0 0.0
  %3227 = vmatpush2.msra.mxu0 0.0
  %3228 = vmatprep.subr.mxu0 0.0
  %3229 = vmatpush2.msra.mxu0 0.0
  %3230 = vmatprep.subr.mxu0 0.0
  %3231 = vmatpush2.msra.mxu0 0.0
  %3232 = vmatprep.subr.mxu0 0.0
  %3233 = vmatpush2.msra.mxu0 0.0
  %3234 = vmatprep.subr.mxu0 0.0
  %3235 = vmatpush2.msra.mxu0 0.0
  %3236 = vmatprep.subr.mxu0 0.0
  %3237 = vmatpush2.msra.mxu0 0.0
  %3238 = vmatprep.mubr.f32.mxu0 0.0
  %3239 = vmatmul.mubr.f32.gmra.mxu0 %v3172
  %v3240 = vpop.f32.mrf.mxu0
  %v3241 = vadd.f32 0.0, %v3240
  %v3242 = vpop.f32.mrf.mxu0
  %v3243 = vadd.f32 0.0, %v3242
  %3244 = vdwg.mxu0
  %3245 = vmatprep.subr.mxu0 0.0
  %3246 = vmatpush1.msra.mxu0 0.0
  %3247 = vmatprep.subr.mxu0 0.0
  %3248 = vmatpush1.msra.mxu0 0.0
  %3249 = vmatprep.subr.mxu0 0.0
  %3250 = vmatpush1.msra.mxu0 0.0
  %3251 = vmatprep.subr.mxu0 0.0
  %3252 = vmatpush1.msra.mxu0 0.0
  %3253 = vmatprep.subr.mxu0 0.0
  %3254 = vmatpush1.msra.mxu0 0.0
  %3255 = vmatprep.subr.mxu0 0.0
  %3256 = vmatpush1.msra.mxu0 0.0
  %3257 = vmatprep.subr.mxu0 0.0
  %3258 = vmatpush1.msra.mxu0 0.0
  %3259 = vmatprep.subr.mxu0 0.0
  %3260 = vmatpush1.msra.mxu0 0.0
  %3261 = vmatprep.subr.mxu0 0.0
  %3262 = vmatpush1.msra.mxu0 0.0
  %3263 = vmatprep.subr.mxu0 0.0
  %3264 = vmatpush1.msra.mxu0 0.0
  %3265 = vmatprep.subr.mxu0 0.0
  %3266 = vmatpush1.msra.mxu0 0.0
  %3267 = vmatprep.subr.mxu0 0.0
  %3268 = vmatpush1.msra.mxu0 0.0
  %3269 = vmatprep.subr.mxu0 0.0
  %3270 = vmatpush1.msra.mxu0 0.0
  %3271 = vmatprep.subr.mxu0 0.0
  %3272 = vmatpush1.msra.mxu0 0.0
  %3273 = vmatprep.subr.mxu0 0.0
  %3274 = vmatpush1.msra.mxu0 0.0
  %3275 = vmatprep.subr.mxu0 %v3166
  %3276 = vmatpush1.msra.mxu0 %v3165
  %3277 = vmatprep.subr.mxu0 0.0
  %3278 = vmatpush2.msra.mxu0 0.0
  %3279 = vmatprep.subr.mxu0 0.0
  %3280 = vmatpush2.msra.mxu0 0.0
  %3281 = vmatprep.subr.mxu0 0.0
  %3282 = vmatpush2.msra.mxu0 0.0
  %3283 = vmatprep.subr.mxu0 0.0
  %3284 = vmatpush2.msra.mxu0 0.0
  %3285 = vmatprep.subr.mxu0 0.0
  %3286 = vmatpush2.msra.mxu0 0.0
  %3287 = vmatprep.subr.mxu0 0.0
  %3288 = vmatpush2.msra.mxu0 0.0
  %3289 = vmatprep.subr.mxu0 0.0
  %3290 = vmatpush2.msra.mxu0 0.0
  %3291 = vmatprep.subr.mxu0 0.0
  %3292 = vmatpush2.msra.mxu0 0.0
  %3293 = vmatprep.subr.mxu0 0.0
  %3294 = vmatpush2.msra.mxu0 0.0
  %3295 = vmatprep.subr.mxu0 0.0
  %3296 = vmatpush2.msra.mxu0 0.0
  %3297 = vmatprep.subr.mxu0 0.0
  %3298 = vmatpush2.msra.mxu0 0.0
  %3299 = vmatprep.subr.mxu0 0.0
  %3300 = vmatpush2.msra.mxu0 0.0
  %3301 = vmatprep.subr.mxu0 0.0
  %3302 = vmatpush2.msra.mxu0 0.0
  %3303 = vmatprep.subr.mxu0 0.0
  %3304 = vmatpush2.msra.mxu0 0.0
  %3305 = vmatprep.subr.mxu0 0.0
  %3306 = vmatpush2.msra.mxu0 0.0
  %3307 = vmatprep.subr.mxu0 0.0
  %3308 = vmatpush2.msra.mxu0 0.0
  %3309 = vmatprep.mubr.f32.mxu0 0.0
  %3310 = vmatmul.mubr.f32.gmra.mxu0 %v3172
  %v3311 = vpop.f32.mrf.mxu0
  %v3312 = vadd.f32 0.0, %v3311
  %v3313 = vpop.f32.mrf.mxu0
  %v3314 = vadd.f32 0.0, %v3313
  %3315 = vdwg.mxu0
  %v3316 = vadd.f32 %v3121, %v3241
  %v3317 = vadd.f32 %v3122, %v3243
  %v3318 = vadd.f32 %v3123, %v3312
  %v3319 = vadd.f32 %v3124, %v3314
  %3320 = vrot.lane.b32.xlu0 %v1514, 16
  %v3321 = vpop.permute.xlu0 %3320
  %3322 = vrot.lane.b32.xlu0 %v1518, 16
  %v3323 = vpop.permute.xlu0 %3322
  %3324 = vrot.lane.b32.xlu0 %v1522, 16
  %v3325 = vpop.permute.xlu0 %3324
  %3326 = vrot.lane.b32.xlu0 %v1526, 16
  %v3327 = vpop.permute.xlu0 %3326
  %v3328 = vsel %vm135, %v3321, %v3323
  %v3329 = vsel %vm135, %v3323, %v3325
  %v3330 = vsel %vm135, %v3325, %v3327
  %v3336 = vmul.f32 %v2925, %v3321
  %v3337 = vmul.f32 %v2926, %v3328
  %v3338 = vmul.f32 %v2927, %v3329
  %v3339 = vmul.f32 %v2928, %v3330
  %v3340 = vmul.f32 %v2929, %v3327
  %s3341 = scalar_lea.vmem %s2, 56
  %v3342 = vld [vmem:[%s3341] sm:$0xff]
  %3348 = vrot.lane.b32.xlu0 %v3336, 112
  %v3349 = vpop.permute.xlu0 %3348
  %3350 = vrot.lane.b32.xlu0 %v3337, 112
  %v3351 = vpop.permute.xlu0 %3350
  %3352 = vrot.lane.b32.xlu0 %v3338, 112
  %v3353 = vpop.permute.xlu0 %3352
  %3354 = vrot.lane.b32.xlu0 %v3339, 112
  %v3355 = vpop.permute.xlu0 %3354
  %3356 = vrot.lane.b32.xlu0 %v3340, 112
  %v3357 = vpop.permute.xlu0 %3356
  %v3358 = vsel %vm108, %v3349, %v3351
  %v3359 = vsel %vm108, %v3351, %v3353
  %v3360 = vsel %vm108, %v3353, %v3355
  %v3361 = vsel %vm108, %v3355, %v3357
  %v3367 = vsel %vm2070, %v3342, 0
  %3369 = vmatprep.subr.mxu0 0.0
  %3370 = vmatpush1.msra.mxu0 0.0
  %3371 = vmatprep.subr.mxu0 0.0
  %3372 = vmatpush1.msra.mxu0 0.0
  %3373 = vmatprep.subr.mxu0 0.0
  %3374 = vmatpush1.msra.mxu0 0.0
  %3375 = vmatprep.subr.mxu0 0.0
  %3376 = vmatpush1.msra.mxu0 0.0
  %3377 = vmatprep.subr.mxu0 0.0
  %3378 = vmatpush1.msra.mxu0 0.0
  %3379 = vmatprep.subr.mxu0 0.0
  %3380 = vmatpush1.msra.mxu0 0.0
  %3381 = vmatprep.subr.mxu0 0.0
  %3382 = vmatpush1.msra.mxu0 0.0
  %3383 = vmatprep.subr.mxu0 0.0
  %3384 = vmatpush1.msra.mxu0 0.0
  %3385 = vmatprep.subr.mxu0 0.0
  %3386 = vmatpush1.msra.mxu0 0.0
  %3387 = vmatprep.subr.mxu0 0.0
  %3388 = vmatpush1.msra.mxu0 0.0
  %3389 = vmatprep.subr.mxu0 0.0
  %3390 = vmatpush1.msra.mxu0 0.0
  %3391 = vmatprep.subr.mxu0 0.0
  %3392 = vmatpush1.msra.mxu0 0.0
  %3393 = vmatprep.subr.mxu0 0.0
  %3394 = vmatpush1.msra.mxu0 0.0
  %3395 = vmatprep.subr.mxu0 0.0
  %3396 = vmatpush1.msra.mxu0 0.0
  %3397 = vmatprep.subr.mxu0 0.0
  %3398 = vmatpush1.msra.mxu0 0.0
  %3399 = vmatprep.subr.mxu0 %v3359
  %3400 = vmatpush1.msra.mxu0 %v3358
  %3401 = vmatprep.subr.mxu0 0.0
  %3402 = vmatpush2.msra.mxu0 0.0
  %3403 = vmatprep.subr.mxu0 0.0
  %3404 = vmatpush2.msra.mxu0 0.0
  %3405 = vmatprep.subr.mxu0 0.0
  %3406 = vmatpush2.msra.mxu0 0.0
  %3407 = vmatprep.subr.mxu0 0.0
  %3408 = vmatpush2.msra.mxu0 0.0
  %3409 = vmatprep.subr.mxu0 0.0
  %3410 = vmatpush2.msra.mxu0 0.0
  %3411 = vmatprep.subr.mxu0 0.0
  %3412 = vmatpush2.msra.mxu0 0.0
  %3413 = vmatprep.subr.mxu0 0.0
  %3414 = vmatpush2.msra.mxu0 0.0
  %3415 = vmatprep.subr.mxu0 0.0
  %3416 = vmatpush2.msra.mxu0 0.0
  %3417 = vmatprep.subr.mxu0 0.0
  %3418 = vmatpush2.msra.mxu0 0.0
  %3419 = vmatprep.subr.mxu0 0.0
  %3420 = vmatpush2.msra.mxu0 0.0
  %3421 = vmatprep.subr.mxu0 0.0
  %3422 = vmatpush2.msra.mxu0 0.0
  %3423 = vmatprep.subr.mxu0 0.0
  %3424 = vmatpush2.msra.mxu0 0.0
  %3425 = vmatprep.subr.mxu0 0.0
  %3426 = vmatpush2.msra.mxu0 0.0
  %3427 = vmatprep.subr.mxu0 0.0
  %3428 = vmatpush2.msra.mxu0 0.0
  %3429 = vmatprep.subr.mxu0 0.0
  %3430 = vmatpush2.msra.mxu0 0.0
  %3431 = vmatprep.subr.mxu0 0.0
  %3432 = vmatpush2.msra.mxu0 0.0
  %3433 = vmatprep.mubr.f32.mxu0 0.0
  %3434 = vmatmul.mubr.f32.gmra.mxu0 %v3367
  %v3435 = vpop.f32.mrf.mxu0
  %v3436 = vadd.f32 0.0, %v3435
  %v3437 = vpop.f32.mrf.mxu0
  %v3438 = vadd.f32 0.0, %v3437
  %3439 = vdwg.mxu0
  %3440 = vmatprep.subr.mxu0 0.0
  %3441 = vmatpush1.msra.mxu0 0.0
  %3442 = vmatprep.subr.mxu0 0.0
  %3443 = vmatpush1.msra.mxu0 0.0
  %3444 = vmatprep.subr.mxu0 0.0
  %3445 = vmatpush1.msra.mxu0 0.0
  %3446 = vmatprep.subr.mxu0 0.0
  %3447 = vmatpush1.msra.mxu0 0.0
  %3448 = vmatprep.subr.mxu0 0.0
  %3449 = vmatpush1.msra.mxu0 0.0
  %3450 = vmatprep.subr.mxu0 0.0
  %3451 = vmatpush1.msra.mxu0 0.0
  %3452 = vmatprep.subr.mxu0 0.0
  %3453 = vmatpush1.msra.mxu0 0.0
  %3454 = vmatprep.subr.mxu0 0.0
  %3455 = vmatpush1.msra.mxu0 0.0
  %3456 = vmatprep.subr.mxu0 0.0
  %3457 = vmatpush1.msra.mxu0 0.0
  %3458 = vmatprep.subr.mxu0 0.0
  %3459 = vmatpush1.msra.mxu0 0.0
  %3460 = vmatprep.subr.mxu0 0.0
  %3461 = vmatpush1.msra.mxu0 0.0
  %3462 = vmatprep.subr.mxu0 0.0
  %3463 = vmatpush1.msra.mxu0 0.0
  %3464 = vmatprep.subr.mxu0 0.0
  %3465 = vmatpush1.msra.mxu0 0.0
  %3466 = vmatprep.subr.mxu0 0.0
  %3467 = vmatpush1.msra.mxu0 0.0
  %3468 = vmatprep.subr.mxu0 0.0
  %3469 = vmatpush1.msra.mxu0 0.0
  %3470 = vmatprep.subr.mxu0 %v3361
  %3471 = vmatpush1.msra.mxu0 %v3360
  %3472 = vmatprep.subr.mxu0 0.0
  %3473 = vmatpush2.msra.mxu0 0.0
  %3474 = vmatprep.subr.mxu0 0.0
  %3475 = vmatpush2.msra.mxu0 0.0
  %3476 = vmatprep.subr.mxu0 0.0
  %3477 = vmatpush2.msra.mxu0 0.0
  %3478 = vmatprep.subr.mxu0 0.0
  %3479 = vmatpush2.msra.mxu0 0.0
  %3480 = vmatprep.subr.mxu0 0.0
  %3481 = vmatpush2.msra.mxu0 0.0
  %3482 = vmatprep.subr.mxu0 0.0
  %3483 = vmatpush2.msra.mxu0 0.0
  %3484 = vmatprep.subr.mxu0 0.0
  %3485 = vmatpush2.msra.mxu0 0.0
  %3486 = vmatprep.subr.mxu0 0.0
  %3487 = vmatpush2.msra.mxu0 0.0
  %3488 = vmatprep.subr.mxu0 0.0
  %3489 = vmatpush2.msra.mxu0 0.0
  %3490 = vmatprep.subr.mxu0 0.0
  %3491 = vmatpush2.msra.mxu0 0.0
  %3492 = vmatprep.subr.mxu0 0.0
  %3493 = vmatpush2.msra.mxu0 0.0
  %3494 = vmatprep.subr.mxu0 0.0
  %3495 = vmatpush2.msra.mxu0 0.0
  %3496 = vmatprep.subr.mxu0 0.0
  %3497 = vmatpush2.msra.mxu0 0.0
  %3498 = vmatprep.subr.mxu0 0.0
  %3499 = vmatpush2.msra.mxu0 0.0
  %3500 = vmatprep.subr.mxu0 0.0
  %3501 = vmatpush2.msra.mxu0 0.0
  %3502 = vmatprep.subr.mxu0 0.0
  %3503 = vmatpush2.msra.mxu0 0.0
  %3504 = vmatprep.mubr.f32.mxu0 0.0
  %3505 = vmatmul.mubr.f32.gmra.mxu0 %v3367
  %v3506 = vpop.f32.mrf.mxu0
  %v3507 = vadd.f32 0.0, %v3506
  %v3508 = vpop.f32.mrf.mxu0
  %v3509 = vadd.f32 0.0, %v3508
  %3510 = vdwg.mxu0
  %v3511 = vadd.f32 %v3316, %v3436
  %v3512 = vadd.f32 %v3317, %v3438
  %v3513 = vadd.f32 %v3318, %v3507
  %v3514 = vadd.f32 %v3319, %v3509
  %3515 = vrot.lane.b32.xlu0 %v1732, 17
  %v3516 = vpop.permute.xlu0 %3515
  %3517 = vrot.lane.b32.xlu0 %v1736, 17
  %v3518 = vpop.permute.xlu0 %3517
  %3519 = vrot.lane.b32.xlu0 %v1740, 17
  %v3520 = vpop.permute.xlu0 %3519
  %3521 = vrot.lane.b32.xlu0 %v1744, 17
  %v3522 = vpop.permute.xlu0 %3521
  %v3523 = vsel %vm309, %v3516, %v3518
  %v3524 = vsel %vm309, %v3518, %v3520
  %v3525 = vsel %vm309, %v3520, %v3522
  %v3531 = vmul.f32 %v2925, %v3516
  %v3532 = vmul.f32 %v2926, %v3523
  %v3533 = vmul.f32 %v2927, %v3524
  %v3534 = vmul.f32 %v2928, %v3525
  %v3535 = vmul.f32 %v2929, %v3522
  %s3536 = scalar_lea.vmem %s2, 64
  %v3537 = vld [vmem:[%s3536] sm:$0xff]
  %3543 = vrot.lane.b32.xlu0 %v3531, 111
  %v3544 = vpop.permute.xlu0 %3543
  %3545 = vrot.lane.b32.xlu0 %v3532, 111
  %v3546 = vpop.permute.xlu0 %3545
  %3547 = vrot.lane.b32.xlu0 %v3533, 111
  %v3548 = vpop.permute.xlu0 %3547
  %3549 = vrot.lane.b32.xlu0 %v3534, 111
  %v3550 = vpop.permute.xlu0 %3549
  %3551 = vrot.lane.b32.xlu0 %v3535, 111
  %v3552 = vpop.permute.xlu0 %3551
  %v3553 = vsel %vm68, %v3544, %v3546
  %v3554 = vsel %vm68, %v3546, %v3548
  %v3555 = vsel %vm68, %v3548, %v3550
  %v3556 = vsel %vm68, %v3550, %v3552
  %v3562 = vsel %vm2070, %v3537, 0
  %3564 = vmatprep.subr.mxu0 0.0
  %3565 = vmatpush1.msra.mxu0 0.0
  %3566 = vmatprep.subr.mxu0 0.0
  %3567 = vmatpush1.msra.mxu0 0.0
  %3568 = vmatprep.subr.mxu0 0.0
  %3569 = vmatpush1.msra.mxu0 0.0
  %3570 = vmatprep.subr.mxu0 0.0
  %3571 = vmatpush1.msra.mxu0 0.0
  %3572 = vmatprep.subr.mxu0 0.0
  %3573 = vmatpush1.msra.mxu0 0.0
  %3574 = vmatprep.subr.mxu0 0.0
  %3575 = vmatpush1.msra.mxu0 0.0
  %3576 = vmatprep.subr.mxu0 0.0
  %3577 = vmatpush1.msra.mxu0 0.0
  %3578 = vmatprep.subr.mxu0 0.0
  %3579 = vmatpush1.msra.mxu0 0.0
  %3580 = vmatprep.subr.mxu0 0.0
  %3581 = vmatpush1.msra.mxu0 0.0
  %3582 = vmatprep.subr.mxu0 0.0
  %3583 = vmatpush1.msra.mxu0 0.0
  %3584 = vmatprep.subr.mxu0 0.0
  %3585 = vmatpush1.msra.mxu0 0.0
  %3586 = vmatprep.subr.mxu0 0.0
  %3587 = vmatpush1.msra.mxu0 0.0
  %3588 = vmatprep.subr.mxu0 0.0
  %3589 = vmatpush1.msra.mxu0 0.0
  %3590 = vmatprep.subr.mxu0 0.0
  %3591 = vmatpush1.msra.mxu0 0.0
  %3592 = vmatprep.subr.mxu0 0.0
  %3593 = vmatpush1.msra.mxu0 0.0
  %3594 = vmatprep.subr.mxu0 %v3554
  %3595 = vmatpush1.msra.mxu0 %v3553
  %3596 = vmatprep.subr.mxu0 0.0
  %3597 = vmatpush2.msra.mxu0 0.0
  %3598 = vmatprep.subr.mxu0 0.0
  %3599 = vmatpush2.msra.mxu0 0.0
  %3600 = vmatprep.subr.mxu0 0.0
  %3601 = vmatpush2.msra.mxu0 0.0
  %3602 = vmatprep.subr.mxu0 0.0
  %3603 = vmatpush2.msra.mxu0 0.0
  %3604 = vmatprep.subr.mxu0 0.0
  %3605 = vmatpush2.msra.mxu0 0.0
  %3606 = vmatprep.subr.mxu0 0.0
  %3607 = vmatpush2.msra.mxu0 0.0
  %3608 = vmatprep.subr.mxu0 0.0
  %3609 = vmatpush2.msra.mxu0 0.0
  %3610 = vmatprep.subr.mxu0 0.0
  %3611 = vmatpush2.msra.mxu0 0.0
  %3612 = vmatprep.subr.mxu0 0.0
  %3613 = vmatpush2.msra.mxu0 0.0
  %3614 = vmatprep.subr.mxu0 0.0
  %3615 = vmatpush2.msra.mxu0 0.0
  %3616 = vmatprep.subr.mxu0 0.0
  %3617 = vmatpush2.msra.mxu0 0.0
  %3618 = vmatprep.subr.mxu0 0.0
  %3619 = vmatpush2.msra.mxu0 0.0
  %3620 = vmatprep.subr.mxu0 0.0
  %3621 = vmatpush2.msra.mxu0 0.0
  %3622 = vmatprep.subr.mxu0 0.0
  %3623 = vmatpush2.msra.mxu0 0.0
  %3624 = vmatprep.subr.mxu0 0.0
  %3625 = vmatpush2.msra.mxu0 0.0
  %3626 = vmatprep.subr.mxu0 0.0
  %3627 = vmatpush2.msra.mxu0 0.0
  %3628 = vmatprep.mubr.f32.mxu0 0.0
  %3629 = vmatmul.mubr.f32.gmra.mxu0 %v3562
  %v3630 = vpop.f32.mrf.mxu0
  %v3631 = vadd.f32 0.0, %v3630
  %v3632 = vpop.f32.mrf.mxu0
  %v3633 = vadd.f32 0.0, %v3632
  %3634 = vdwg.mxu0
  %3635 = vmatprep.subr.mxu0 0.0
  %3636 = vmatpush1.msra.mxu0 0.0
  %3637 = vmatprep.subr.mxu0 0.0
  %3638 = vmatpush1.msra.mxu0 0.0
  %3639 = vmatprep.subr.mxu0 0.0
  %3640 = vmatpush1.msra.mxu0 0.0
  %3641 = vmatprep.subr.mxu0 0.0
  %3642 = vmatpush1.msra.mxu0 0.0
  %3643 = vmatprep.subr.mxu0 0.0
  %3644 = vmatpush1.msra.mxu0 0.0
  %3645 = vmatprep.subr.mxu0 0.0
  %3646 = vmatpush1.msra.mxu0 0.0
  %3647 = vmatprep.subr.mxu0 0.0
  %3648 = vmatpush1.msra.mxu0 0.0
  %3649 = vmatprep.subr.mxu0 0.0
  %3650 = vmatpush1.msra.mxu0 0.0
  %3651 = vmatprep.subr.mxu0 0.0
  %3652 = vmatpush1.msra.mxu0 0.0
  %3653 = vmatprep.subr.mxu0 0.0
  %3654 = vmatpush1.msra.mxu0 0.0
  %3655 = vmatprep.subr.mxu0 0.0
  %3656 = vmatpush1.msra.mxu0 0.0
  %3657 = vmatprep.subr.mxu0 0.0
  %3658 = vmatpush1.msra.mxu0 0.0
  %3659 = vmatprep.subr.mxu0 0.0
  %3660 = vmatpush1.msra.mxu0 0.0
  %3661 = vmatprep.subr.mxu0 0.0
  %3662 = vmatpush1.msra.mxu0 0.0
  %3663 = vmatprep.subr.mxu0 0.0
  %3664 = vmatpush1.msra.mxu0 0.0
  %3665 = vmatprep.subr.mxu0 %v3556
  %3666 = vmatpush1.msra.mxu0 %v3555
  %3667 = vmatprep.subr.mxu0 0.0
  %3668 = vmatpush2.msra.mxu0 0.0
  %3669 = vmatprep.subr.mxu0 0.0
  %3670 = vmatpush2.msra.mxu0 0.0
  %3671 = vmatprep.subr.mxu0 0.0
  %3672 = vmatpush2.msra.mxu0 0.0
  %3673 = vmatprep.subr.mxu0 0.0
  %3674 = vmatpush2.msra.mxu0 0.0
  %3675 = vmatprep.subr.mxu0 0.0
  %3676 = vmatpush2.msra.mxu0 0.0
  %3677 = vmatprep.subr.mxu0 0.0
  %3678 = vmatpush2.msra.mxu0 0.0
  %3679 = vmatprep.subr.mxu0 0.0
  %3680 = vmatpush2.msra.mxu0 0.0
  %3681 = vmatprep.subr.mxu0 0.0
  %3682 = vmatpush2.msra.mxu0 0.0
  %3683 = vmatprep.subr.mxu0 0.0
  %3684 = vmatpush2.msra.mxu0 0.0
  %3685 = vmatprep.subr.mxu0 0.0
  %3686 = vmatpush2.msra.mxu0 0.0
  %3687 = vmatprep.subr.mxu0 0.0
  %3688 = vmatpush2.msra.mxu0 0.0
  %3689 = vmatprep.subr.mxu0 0.0
  %3690 = vmatpush2.msra.mxu0 0.0
  %3691 = vmatprep.subr.mxu0 0.0
  %3692 = vmatpush2.msra.mxu0 0.0
  %3693 = vmatprep.subr.mxu0 0.0
  %3694 = vmatpush2.msra.mxu0 0.0
  %3695 = vmatprep.subr.mxu0 0.0
  %3696 = vmatpush2.msra.mxu0 0.0
  %3697 = vmatprep.subr.mxu0 0.0
  %3698 = vmatpush2.msra.mxu0 0.0
  %3699 = vmatprep.mubr.f32.mxu0 0.0
  %3700 = vmatmul.mubr.f32.gmra.mxu0 %v3562
  %v3701 = vpop.f32.mrf.mxu0
  %v3702 = vadd.f32 0.0, %v3701
  %v3703 = vpop.f32.mrf.mxu0
  %v3704 = vadd.f32 0.0, %v3703
  %3705 = vdwg.mxu0
  %v3706 = vadd.f32 %v3511, %v3631
  %v3707 = vadd.f32 %v3512, %v3633
  %v3708 = vadd.f32 %v3513, %v3702
  %v3709 = vadd.f32 %v3514, %v3704
  %v3710 = vld [vmem:[%s5] sm:$0xff]
  %v3711 = vld [vmem:[%s6] sm:$0xff]
  %v3712 = vadd.f32 %v3706, %v3707
  %v3713 = vadd.f32 %v3712, %v3708
  %v3714 = vadd.f32 %v3713, %v3709
  %3715 = vadd.xlane.f32.xlu0 %v3714
  %v3716 = vpop.xlane.xlu0 %3715
  %v3717 = vmul.f32 %v3716, 0.001953125
  %v3718 = vsub.f32 %v3706, %v3717
  %v3719 = vsub.f32 %v3707, %v3717
  %v3720 = vsub.f32 %v3708, %v3717
  %v3721 = vsub.f32 %v3709, %v3717
  %v3722 = vmul.f32 %v3718, %v3718
  %v3723 = vmul.f32 %v3719, %v3719
  %v3724 = vmul.f32 %v3720, %v3720
  %v3725 = vmul.f32 %v3721, %v3721
  %v3726 = vadd.f32 %v3722, %v3723
  %v3727 = vadd.f32 %v3726, %v3724
  %v3728 = vadd.f32 %v3727, %v3725
  %3729 = vadd.xlane.f32.xlu0 %v3728
  %v3730 = vpop.xlane.xlu0 %3729
  %v3731 = vmul.f32 %v3730, 0.001953125
  %v3732 = vadd.f32 %v3731, 1e-05
  %v3733 = vrsqrt.pop %v3732
  %v3734 = vmul.f32 %v3710, %v3733
  %3736 = vset.pattern.permute.xlu0 0
  %3737 = vperm.xlu0 %3736, %v3734
  %v3738 = vpop.permute.xlu0 %3737
  %v3740 = vmul.f32 %v3718, %v3738
  %v3741 = vmul.f32 %v3719, %v3738
  %v3742 = vmul.f32 %v3720, %v3738
  %v3743 = vmul.f32 %v3721, %v3738
  %3745 = vset.pattern.permute.xlu0 0
  %3746 = vperm.xlu0 %3745, %v3711
  %v3747 = vpop.permute.xlu0 %3746
  %v3749 = vadd.f32 %v3740, %v3747
  %v3750 = vadd.f32 %v3741, %v3747
  %v3751 = vadd.f32 %v3742, %v3747
  %v3752 = vadd.f32 %v3743, %v3747
  %v3753 = vmax.f32 %v3749, 0.0
  %v3754 = vmax.f32 %v3750, 0.0
  %v3755 = vmax.f32 %v3751, 0.0
  %v3756 = vmax.f32 %v3752, 0.0
  %3757 = vst [vmem:[%s8] sm:$0xff] %v3753
  %3758 = vst [vmem:[%s8 + $0x8] sm:$0xff] %v3754
  %3759 = vst [vmem:[%s8 + $0x10] sm:$0xff] %v3755
  %3760 = vst [vmem:[%s8 + $0x18] sm:$0xff] %v3756
  // Predicated region
  $region34: #{double_conv.1} parent=0 // pred_check
    _
  $region35: #{double_conv.1} parent=0 // pred_check_branch
    %3762 = sbr.rel (0) target = $region37
  $region36: #{double_conv.1} parent=0 // pred_region
    _
  $region37: #{double_conv.1} parent=0 // pred_fallthru
    _
  // Predicated region
  $region38: #{double_conv.1} parent=0 // pred_check
    _
  $region39: #{double_conv.1} parent=0 // pred_check_branch
    %3764 = sbr.rel (0) target = $region41
  $region40: #{double_conv.1} parent=0 // pred_region
    _
  $region41: #{double_conv.1} parent=0 // pred_fallthru
    _

</llo_original>
